<compile_context>
chip_gen: v7x
topology: tpu7x:2x2x1
jax: 0.10.0
libtpu: 0.0.40
codegen_flags: <defaults>
</compile_context>

<pallas_src>
import functools
import math

import jax
import jax.numpy as jnp
from jax.experimental import pallas as pl
from jax.experimental.pallas import tpu as pltpu

VMEM = pltpu.MemorySpace.VMEM
SMEM = pltpu.MemorySpace.SMEM

# dot_general dims for A @ B^T (contract last dim of both operands)
_TRANS_B = (((1,), (1,)), ((), ()))


# ----------------------------------------------------------------------------
# Pallas kernels
# ----------------------------------------------------------------------------


def _mm_bias_lrelu_kernel(x_ref, w_ref, b_ref, o_ref):
    acc = jnp.dot(x_ref[...], w_ref[...], preferred_element_type=jnp.float32)
    acc = acc + b_ref[...]
    o_ref[...] = jnp.where(acc >= 0, acc, 0.1 * acc)


def mm_bias_lrelu(x, w, b):
    """(M, K) @ (K, N) + b, then LeakyReLU(0.1).  Used for input_map."""
    M = x.shape[0]
    N = w.shape[1]
    return pl.pallas_call(
        _mm_bias_lrelu_kernel,
        out_shape=jax.ShapeDtypeStruct((M, N), jnp.float32),
        in_specs=[pl.BlockSpec(memory_space=VMEM)] * 3,
        out_specs=pl.BlockSpec(memory_space=VMEM),
    )(x, w, b.reshape(1, N))


def _stage_kernel(h_ref, wqk_ref, bqk_ref, wout_ref, bout_ref,
                  wd1_ref, bd1_ref, wff_ref, bff_ref, wd2_ref, bd2_ref,
                  alpha_ref, att0t_ref, o_ref, *, S, Dq, Dout, denom):
    """One full attention stage (spatial or temporal) for one sample.

    h_ref block: (1, R, Din) where
      spatial : R = V, Din = T*Cin, columns ordered (t, c)
      temporal: R = T, Din = V*Cin, columns ordered (v, c)
    All 1x1 convs are matmuls against host-packed block-diagonal weights.
    """
    f32 = jnp.float32
    h = h_ref[0]                                                   # (R, Din)
    # fused in_net conv for all 2*S subsets (q then k), bias included
    qk = jnp.dot(h, wqk_ref[...], preferred_element_type=f32) + bqk_ref[...]
    # x pre-multiplied by per-subset out_net weights: (R, S*Dout)
    hw = jnp.dot(h, wout_ref[...], preferred_element_type=f32)
    inv = 1.0 / denom
    acc = jnp.zeros((h.shape[0], Dout), f32)
    for s in range(S):                                             # unrolled, in-VMEM
        qs = qk[:, s * Dq:(s + 1) * Dq]                            # (R, Dq)
        ks = qk[:, (S + s) * Dq:(S + s + 1) * Dq]                  # (R, Dq)
        # logits^T[b, a] = sum_d ks[b, d] * qs[a, d]
        logits_t = jax.lax.dot_general(ks, qs, _TRANS_B,
                                       preferred_element_type=f32)  # (R, R)
        att_t = jnp.tanh(logits_t * inv) * alpha_ref[s] + att0t_ref[s]
        acc = acc + jnp.dot(att_t, hw[:, s * Dout:(s + 1) * Dout],
                            preferred_element_type=f32)
    out_att = acc + bout_ref[...]                                  # out_net bias (+BN)
    # residual 1 + LeakyReLU
    d1 = jnp.dot(h, wd1_ref[...], preferred_element_type=f32) + bd1_ref[...]
    y = d1 + out_att
    y = jnp.where(y >= 0, y, 0.1 * y)
    # feed-forward conv + residual 2 + LeakyReLU
    ff = jnp.dot(y, wff_ref[...], preferred_element_type=f32) + bff_ref[...]
    d2 = jnp.dot(h, wd2_ref[...], preferred_element_type=f32) + bd2_ref[...]
    z = d2 + ff
    z = jnp.where(z >= 0, z, 0.1 * z)
    o_ref[0] = z


def run_stage(h, p, *, S, Dq, Dout, denom):
    """h: (NM, R, Din) -> (NM, R, Dout); one fused pallas_call, grid over samples."""
    NM, R, Din = h.shape
    kernel = functools.partial(_stage_kernel, S=S, Dq=Dq, Dout=Dout, denom=denom)

    def _w(shape):
        return pl.BlockSpec(shape, lambda n, _s=len(shape): (0,) * _s)

    return pl.pallas_call(
        kernel,
        out_shape=jax.ShapeDtypeStruct((NM, R, Dout), jnp.float32),
        grid=(NM,),
        in_specs=[
            pl.BlockSpec((1, R, Din), lambda n: (n, 0, 0)),        # activations
            _w(p["wqk"].shape), _w(p["bqk"].shape),
            _w(p["wout"].shape), _w(p["bout"].shape),
            _w(p["wd1"].shape), _w(p["bd1"].shape),
            _w(p["wff"].shape), _w(p["bff"].shape),
            _w(p["wd2"].shape), _w(p["bd2"].shape),
            pl.BlockSpec(memory_space=SMEM),                       # alpha (S,)
            _w(p["att0T"].shape),                                  # (S, R, R)
        ],
        out_specs=pl.BlockSpec((1, R, Dout), lambda n: (n, 0, 0)),
        compiler_params=pltpu.CompilerParams(
            dimension_semantics=("parallel",)),
    )(h, p["wqk"], p["bqk"], p["wout"], p["bout"], p["wd1"], p["bd1"],
      p["wff"], p["bff"], p["wd2"], p["bd2"], p["alpha"], p["att0T"])


def _pool_fc_kernel(pm_ref, z_ref, w_ref, b_ref, o_ref):
    pooled = jnp.dot(pm_ref[...], z_ref[...], preferred_element_type=jnp.float32)
    o_ref[...] = jnp.dot(pooled, w_ref[...],
                         preferred_element_type=jnp.float32) + b_ref[...]


def pool_fc(z2d, pm, wpf, b):
    """Global mean (as pooling-matrix matmul) + final Linear in one kernel."""
    Nn = pm.shape[0]
    K = wpf.shape[1]
    return pl.pallas_call(
        _pool_fc_kernel,
        out_shape=jax.ShapeDtypeStruct((Nn, K), jnp.float32),
        in_specs=[pl.BlockSpec(memory_space=VMEM)] * 4,
        out_specs=pl.BlockSpec(memory_space=VMEM),
    )(pm, z2d, wpf, b.reshape(1, K))


# ----------------------------------------------------------------------------
# Host-side weight packing (done once at parameter build time)
# ----------------------------------------------------------------------------


def kron_eye(w, reps):
    """kron(I_reps, w): block-diagonal (reps*Cin, reps*Cout) from w (Cin, Cout)."""
    cin, cout = w.shape
    eye = jnp.eye(reps, dtype=w.dtype)
    return (eye[:, None, :, None] * w[None, :, None, :]).reshape(reps * cin, reps * cout)


def pack_conv(w, b, reps):
    """Plain 1x1 conv -> block-diagonal weight for the (R, reps*C) layout."""
    return kron_eye(w, reps), jnp.tile(b, reps)


def pack_grouped_out_conv(w, b, groups, reps):
    """Conv whose OUTPUT channels split into `groups` (in_nets / in_nett).
    w: (Cin, groups*Cg) -> (reps*Cin, groups*reps*Cg), columns ordered (g, r, cg)."""
    cin = w.shape[0]
    cg = w.shape[1] // groups
    w3 = w.reshape(cin, groups, cg)
    wbd = jnp.concatenate([kron_eye(w3[:, g, :], reps) for g in range(groups)], axis=1)
    b3 = b.reshape(groups, cg)
    bbd = jnp.concatenate([jnp.tile(b3[g], reps) for g in range(groups)], axis=0)
    return wbd, bbd


def pack_grouped_in_conv(w, b, groups, reps):
    """Conv whose INPUT channels split into `groups` (out_nets / out_nett).
    w: (groups*Cg, Cout) -> (reps*Cg, groups*reps*Cout), columns ordered (g, r, co)."""
    cout = w.shape[1]
    cg = w.shape[0] // groups
    w3 = w.reshape(groups, cg, cout)
    wbd = jnp.concatenate([kron_eye(w3[g], reps) for g in range(groups)], axis=1)
    return wbd, jnp.tile(b, reps)


# ----------------------------------------------------------------------------
# Parameter initialization (deterministic, mirrors PyTorch __init__ shapes)
# ----------------------------------------------------------------------------


def init_conv(key, cin, cout):
    """Kaiming-normal (fan_out) 1x1 conv, stored as (Cin, Cout), plus bias."""
    kw, kb = jax.random.split(key)
    w = jax.random.normal(kw, (cin, cout), jnp.float32) * math.sqrt(2.0 / cout)
    bound = 1.0 / math.sqrt(cin)
    b = jax.random.uniform(kb, (cout,), jnp.float32, -bound, bound)
    return w, b


def fold_bn(w, b, eps=1e-5):
    """Fold inference-mode BatchNorm (gamma=1, beta=0, mean=0, var=1) into conv."""
    s = 1.0 / math.sqrt(1.0 + eps)
    return w * s, b * s


def pack_stage(in_conv, out_conv, d1, ff, d2, alpha, att0, *, S, reps):
    wqk, bqk = pack_grouped_out_conv(in_conv[0], in_conv[1], 2 * S, reps)
    wout, bout = pack_grouped_in_conv(out_conv[0], out_conv[1], S, reps)
    wd1, bd1 = pack_conv(d1[0], d1[1], reps)
    wff, bff = pack_conv(ff[0], ff[1], reps)
    wd2, bd2 = pack_conv(d2[0], d2[1], reps)
    return {
        "wqk": wqk, "bqk": bqk.reshape(1, -1),
        "wout": wout, "bout": bout.reshape(1, -1),
        "wd1": wd1, "bd1": bd1.reshape(1, -1),
        "wff": wff, "bff": bff.reshape(1, -1),
        "wd2": wd2, "bd2": bd2.reshape(1, -1),
        "alpha": alpha,
        "att0T": jnp.transpose(att0, (0, 2, 1)),   # kernel uses attention^T
    }


def init_block_params(key, Cin, Cout, Cint, S, T, V):
    ks = jax.random.split(key, 10)
    in_s = init_conv(ks[0], Cin, 2 * S * Cint)
    out_s = fold_bn(*init_conv(ks[1], S * Cin, Cout))
    ff_s = fold_bn(*init_conv(ks[2], Cout, Cout))
    in_t = init_conv(ks[3], Cout, 2 * S * Cint)
    out_t = fold_bn(*init_conv(ks[4], S * Cout, Cout))
    ff_t = fold_bn(*init_conv(ks[5], Cout, Cout))
    if Cin != Cout:   # stride is 1 for every config entry in this script
        d1 = fold_bn(*init_conv(ks[6], Cin, Cout))
        d2 = fold_bn(*init_conv(ks[7], Cin, Cout))
        dt1 = fold_bn(*init_conv(ks[8], Cout, Cout))
        dt2 = fold_bn(*init_conv(ks[9], Cout, Cout))
    else:             # identity skip connections expressed as identity 1x1 convs
        ident_in = (jnp.eye(Cin, dtype=jnp.float32), jnp.zeros((Cin,), jnp.float32))
        ident_out = (jnp.eye(Cout, dtype=jnp.float32), jnp.zeros((Cout,), jnp.float32))
        d1, d2, dt1, dt2 = ident_in, ident_in, ident_out, ident_out
    alphas = jnp.ones((S,), jnp.float32)
    alphat = jnp.ones((S,), jnp.float32)
    att0s = jnp.ones((S, V, V), jnp.float32) / V
    att0t = jnp.zeros((S, T, T), jnp.float32) + jnp.eye(T, dtype=jnp.float32)
    return {
        "spatial": pack_stage(in_s, out_s, d1, ff_s, d2, alphas, att0s, S=S, reps=T),
        "temporal": pack_stage(in_t, out_t, dt1, ff_t, dt2, alphat, att0t, S=S, reps=V),
    }


def build_params(key, num_channel, num_class, config, S, T, V):
    k_in, k_fc, k_blocks = jax.random.split(key, 3)
    C0 = config[0][0]
    w_im, b_im = fold_bn(*init_conv(k_in, num_channel, C0))
    w_im_bd, b_im_bd = pack_conv(w_im, b_im, T)        # input_map in (V, T*C) layout
    block_keys = jax.random.split(k_blocks, len(config))
    blocks = [init_block_params(bk, cin, cout, cint, S, T, V)
              for bk, (cin, cout, cint, _stride) in zip(block_keys, config)]
    Cl = config[-1][1]
    w_fc = (jax.random.normal(k_fc, (Cl, num_class), jnp.float32)
            * math.sqrt(2.0 / (Cl + num_class)))       # xavier-normal, bias 0
    b_fc = jnp.zeros((num_class,), jnp.float32)
    # fold the mean over V (joints) into the fc weight; rows ordered (v, c)
    w_fc_packed = jnp.tile(w_fc, (V, 1)) / V
    return {"input_map": (w_im_bd, b_im_bd), "blocks": blocks,
            "fc": (w_fc_packed, b_fc)}


# ----------------------------------------------------------------------------
# Model forward
# ----------------------------------------------------------------------------


def fan_forward(x, params, config, S):
    N, C, T, V, M = x.shape
    NM = N * M
    # (N, C, T, V, M) -> spatial layout (NM, V, T*C)   [row = joint, col = (frame, ch)]
    h = jnp.transpose(x, (0, 4, 3, 2, 1)).reshape(NM, V, T * C)
    # input_map: conv + folded BN + LeakyReLU as one fused matmul over all rows
    C0 = config[0][0]
    w_im, b_im = params["input_map"]
    h = mm_bias_lrelu(h.reshape(NM * V, T * C), w_im, b_im).reshape(NM, V, T * C0)

    n_blocks = len(config)
    for idx, ((cin, cout, cint, _stride), bp) in enumerate(zip(config, params["blocks"])):
        # spatial attention stage: (NM, V, T*cin) -> (NM, V, T*cout)
        hs = run_stage(h, bp["spatial"], S=S, Dq=T * cint, Dout=T * cout,
                       denom=float(cint * T))
        # relayout to temporal layout (NM, T, V*cout)
        ht = hs.reshape(NM, V, T, cout).transpose(0, 2, 1, 3).reshape(NM, T, V * cout)
        # temporal attention stage: (NM, T, V*cout) -> (NM, T, V*cout)
        zt = run_stage(ht, bp["temporal"], S=S, Dq=V * cint, Dout=V * cout,
                       denom=float(cint * V))
        if idx + 1 < n_blocks:
            h = zt.reshape(NM, T, V, cout).transpose(0, 2, 1, 3).reshape(NM, V, T * cout)
        else:
            h = zt                                        # keep temporal layout

    # global mean over (M, T, V) + Linear, fused into one kernel
    Cl = config[-1][1]
    z2d = h.reshape(N * M * T, V * Cl)                    # pure leading-dim reshape
    pm = jnp.kron(jnp.eye(N, dtype=jnp.float32),
                  jnp.ones((1, M * T), jnp.float32) / (M * T))   # mean over (m, t)
    w_fc_packed, b_fc = params["fc"]                      # mean over v folded in weight
    return pool_fc(z2d, pm, w_fc_packed, b_fc)


# ----------------------------------------------------------------------------
# Main
# ----------------------------------------------------------------------------

if __name__ == "__main__":
    key = jax.random.PRNGKey(0)
    N, C, T, V, M = 2, 3, 8, 8, 2            # batch, channels, frames, joints, persons
    S = 3                                    # num_subset
    num_class = 10
    config = ((8, 8, 4, 1), (8, 16, 4, 1))   # (in_ch, out_ch, inter_ch, stride)

    k_params, k_x = jax.random.split(key)
    params = build_params(k_params, C, num_class, config, S, T, V)
    x = jax.random.normal(k_x, (N, C, T, V, M), jnp.float32)

    forward = jax.jit(functools.partial(fan_forward, config=config, S=S))
    out = jax.block_until_ready(forward(x, params))

    assert out.shape == (N, num_class) and out.dtype == jnp.float32
    assert bool(jnp.all(jnp.isfinite(out)))
    print("KERNEL_OK")
</pallas_src>

<mosaic_0001>
module attributes {stable_mosaic.version = 11 : i64} {
  func.func @_mm_bias_lrelu_kernel(%arg0: memref<32x24xf32, #tpu.memory_space<vmem>>, %arg1: memref<24x64xf32, #tpu.memory_space<vmem>>, %arg2: memref<1x64xf32, #tpu.memory_space<vmem>>, %arg3: memref<32x64xf32, #tpu.memory_space<vmem>>) attributes {dimension_semantics = [], scalar_prefetch = 0 : i64, scratch_operands = 0 : i64, tpu.core_type = #tpu.core_type<tc>} {
    %c0 = arith.constant 0 : index
    %c0_0 = arith.constant 0 : index
    %0 = vector.load %arg0[%c0, %c0_0] : memref<32x24xf32, #tpu.memory_space<vmem>>, vector<32x24xf32>
    %c0_1 = arith.constant 0 : index
    %c0_2 = arith.constant 0 : index
    %1 = vector.load %arg1[%c0_1, %c0_2] : memref<24x64xf32, #tpu.memory_space<vmem>>, vector<24x64xf32>
    %cst = arith.constant dense<0.000000e+00> : vector<32x64xf32>
    %2 = tpu.matmul %0, %1, %cst {dimension_numbers = #tpu.dot_dimension_numbers<[1], [0], [0], [1], [0, 0, 1, 1], [], []>} : vector<32x24xf32>, vector<24x64xf32>, vector<32x64xf32> -> vector<32x64xf32>
    %c0_3 = arith.constant 0 : index
    %c0_4 = arith.constant 0 : index
    %3 = vector.load %arg2[%c0_3, %c0_4] : memref<1x64xf32, #tpu.memory_space<vmem>>, vector<1x64xf32>
    %4 = vector.broadcast %3 : vector<1x64xf32> to vector<32x64xf32>
    %5 = arith.addf %2, %4 : vector<32x64xf32>
    %cst_5 = arith.constant 0.000000e+00 : f32
    %6 = vector.broadcast %cst_5 : f32 to vector<32x64xf32>
    %7 = arith.cmpf oge, %5, %6 : vector<32x64xf32>
    %cst_6 = arith.constant 1.000000e-01 : f32
    %8 = vector.broadcast %cst_6 : f32 to vector<32x64xf32>
    %9 = arith.mulf %8, %5 : vector<32x64xf32>
    %10 = arith.select %7, %5, %9 : vector<32x64xi1>, vector<32x64xf32>
    %c0_7 = arith.constant 0 : index
    %c0_8 = arith.constant 0 : index
    %11 = vector.load %arg3[%c0_7, %c0_8] : memref<32x64xf32, #tpu.memory_space<vmem>>, vector<32x64xf32>
    tpu.vector_store %arg3[%c0_7, %c0_8], %10 {strides = array<i32>} : memref<32x64xf32, #tpu.memory_space<vmem>>, vector<32x64xf32>,
    return
  }
}

module attributes {stable_mosaic.version = 11 : i64} {
  func.func @_stage_kernel(%arg0: i32, %arg1: memref<1x8x64xf32, #tpu.memory_space<vmem>>, %arg2: memref<64x192xf32, #tpu.memory_space<vmem>>, %arg3: memref<1x192xf32, #tpu.memory_space<vmem>>, %arg4: memref<64x192xf32, #tpu.memory_space<vmem>>, %arg5: memref<1x64xf32, #tpu.memory_space<vmem>>, %arg6: memref<64x64xf32, #tpu.memory_space<vmem>>, %arg7: memref<1x64xf32, #tpu.memory_space<vmem>>, %arg8: memref<64x64xf32, #tpu.memory_space<vmem>>, %arg9: memref<1x64xf32, #tpu.memory_space<vmem>>, %arg10: memref<64x64xf32, #tpu.memory_space<vmem>>, %arg11: memref<1x64xf32, #tpu.memory_space<vmem>>, %arg12: memref<3xf32, #tpu.memory_space<smem>>, %arg13: memref<3x8x8xf32, #tpu.memory_space<vmem>>, %arg14: memref<1x8x64xf32, #tpu.memory_space<vmem>>) attributes {dimension_semantics = [#tpu.dimension_semantics<parallel>], iteration_bounds = array<i64: 4>, scalar_prefetch = 0 : i64, scratch_operands = 0 : i64, tpu.core_type = #tpu.core_type<tc>, window_params = [{transform_indices = @transform_0, window_bounds = array<i64: 1, 8, 64>}, {pipeline_mode = #tpu.pipeline_mode<synchronous>, transform_indices = @transform_1, window_bounds = array<i64: 64, 192>}, {pipeline_mode = #tpu.pipeline_mode<synchronous>, transform_indices = @transform_2, window_bounds = array<i64: 1, 192>}, {pipeline_mode = #tpu.pipeline_mode<synchronous>, transform_indices = @transform_3, window_bounds = array<i64: 64, 192>}, {pipeline_mode = #tpu.pipeline_mode<synchronous>, transform_indices = @transform_4, window_bounds = array<i64: 1, 64>}, {pipeline_mode = #tpu.pipeline_mode<synchronous>, transform_indices = @transform_5, window_bounds = array<i64: 64, 64>}, {pipeline_mode = #tpu.pipeline_mode<synchronous>, transform_indices = @transform_6, window_bounds = array<i64: 1, 64>}, {pipeline_mode = #tpu.pipeline_mode<synchronous>, transform_indices = @transform_7, window_bounds = array<i64: 64, 64>}, {pipeline_mode = #tpu.pipeline_mode<synchronous>, transform_indices = @transform_8, window_bounds = array<i64: 1, 64>}, {pipeline_mode = #tpu.pipeline_mode<synchronous>, transform_indices = @transform_9, window_bounds = array<i64: 64, 64>}, {pipeline_mode = #tpu.pipeline_mode<synchronous>, transform_indices = @transform_10, window_bounds = array<i64: 1, 64>}, {transform_indices = @transform_11, window_bounds = array<i64: 3>}, {pipeline_mode = #tpu.pipeline_mode<synchronous>, transform_indices = @transform_12, window_bounds = array<i64: 3, 8, 8>}, {transform_indices = @transform_13, window_bounds = array<i64: 1, 8, 64>}]} {
    %c0 = arith.constant 0 : index
    %c0_0 = arith.constant 0 : index
    %c0_1 = arith.constant 0 : index
    %0 = vector.load %arg1[%c0, %c0_0, %c0_1] : memref<1x8x64xf32, #tpu.memory_space<vmem>>, vector<1x8x64xf32>
    %1 = vector.shape_cast %0 : vector<1x8x64xf32> to vector<8x64xf32>
    %c0_2 = arith.constant 0 : index
    %c0_3 = arith.constant 0 : index
    %2 = vector.load %arg2[%c0_2, %c0_3] : memref<64x192xf32, #tpu.memory_space<vmem>>, vector<64x192xf32>
    %cst = arith.constant dense<0.000000e+00> : vector<8x192xf32>
    %3 = tpu.matmul %1, %2, %cst {dimension_numbers = #tpu.dot_dimension_numbers<[1], [0], [0], [1], [0, 0, 1, 1], [], []>} : vector<8x64xf32>, vector<64x192xf32>, vector<8x192xf32> -> vector<8x192xf32>
    %c0_4 = arith.constant 0 : index
    %c0_5 = arith.constant 0 : index
    %4 = vector.load %arg3[%c0_4, %c0_5] : memref<1x192xf32, #tpu.memory_space<vmem>>, vector<1x192xf32>
    %5 = vector.broadcast %4 : vector<1x192xf32> to vector<8x192xf32>
    %6 = arith.addf %3, %5 : vector<8x192xf32>
    %c0_6 = arith.constant 0 : index
    %c0_7 = arith.constant 0 : index
    %7 = vector.load %arg4[%c0_6, %c0_7] : memref<64x192xf32, #tpu.memory_space<vmem>>, vector<64x192xf32>
    %cst_8 = arith.constant dense<0.000000e+00> : vector<8x192xf32>
    %8 = tpu.matmul %1, %7, %cst_8 {dimension_numbers = #tpu.dot_dimension_numbers<[1], [0], [0], [1], [0, 0, 1, 1], [], []>} : vector<8x64xf32>, vector<64x192xf32>, vector<8x192xf32> -> vector<8x192xf32>
    %cst_9 = arith.constant 0.000000e+00 : f32
    %9 = vector.broadcast %cst_9 : f32 to vector<8x64xf32>
    %10 = vector.extract_strided_slice %6 {offsets = [0, 0], sizes = [8, 32], strides = [1, 1]} : vector<8x192xf32> to vector<8x32xf32>
    %11 = vector.extract_strided_slice %6 {offsets = [0, 96], sizes = [8, 32], strides = [1, 1]} : vector<8x192xf32> to vector<8x32xf32>
    %cst_10 = arith.constant dense<0.000000e+00> : vector<8x8xf32>
    %12 = tpu.matmul %11, %10, %cst_10 {dimension_numbers = #tpu.dot_dimension_numbers<[1], [1], [0], [0], [0, 0, 1, 0], [], []>} : vector<8x32xf32>, vector<8x32xf32>, vector<8x8xf32> -> vector<8x8xf32>
    %cst_11 = arith.constant 3.125000e-02 : f32
    %13 = vector.broadcast %cst_11 : f32 to vector<8x8xf32>
    %14 = arith.mulf %12, %13 : vector<8x8xf32>
    %15 = math.tanh %14 : vector<8x8xf32>
    %c0_12 = arith.constant 0 : index
    %16 = memref.load %arg12[%c0_12] : memref<3xf32, #tpu.memory_space<smem>>
    %17 = vector.broadcast %16 : f32 to vector<8x8xf32>
    %18 = arith.mulf %15, %17 : vector<8x8xf32>
    %c0_13 = arith.constant 0 : index
    %c0_14 = arith.constant 0 : index
    %c0_15 = arith.constant 0 : index
    %19 = vector.load %arg13[%c0_13, %c0_14, %c0_15] : memref<3x8x8xf32, #tpu.memory_space<vmem>>, vector<1x8x8xf32>
    %20 = vector.shape_cast %19 : vector<1x8x8xf32> to vector<8x8xf32>
    %21 = arith.addf %18, %20 : vector<8x8xf32>
    %22 = vector.extract_strided_slice %8 {offsets = [0, 0], sizes = [8, 64], strides = [1, 1]} : vector<8x192xf32> to vector<8x64xf32>
    %cst_16 = arith.constant dense<0.000000e+00> : vector<8x64xf32>
    %23 = tpu.matmul %21, %22, %cst_16 {dimension_numbers = #tpu.dot_dimension_numbers<[1], [0], [0], [1], [0, 0, 1, 1], [], []>} : vector<8x8xf32>, vector<8x64xf32>, vector<8x64xf32> -> vector<8x64xf32>
    %24 = arith.addf %9, %23 : vector<8x64xf32>
    %25 = vector.extract_strided_slice %6 {offsets = [0, 32], sizes = [8, 32], strides = [1, 1]} : vector<8x192xf32> to vector<8x32xf32>
    %26 = vector.extract_strided_slice %6 {offsets = [0, 128], sizes = [8, 32], strides = [1, 1]} : vector<8x192xf32> to vector<8x32xf32>
    %cst_17 = arith.constant dense<0.000000e+00> : vector<8x8xf32>
    %27 = tpu.matmul %26, %25, %cst_17 {dimension_numbers = #tpu.dot_dimension_numbers<[1], [1], [0], [0], [0, 0, 1, 0], [], []>} : vector<8x32xf32>, vector<8x32xf32>, vector<8x8xf32> -> vector<8x8xf32>
    %cst_18 = arith.constant 3.125000e-02 : f32
    %28 = vector.broadcast %cst_18 : f32 to vector<8x8xf32>
    %29 = arith.mulf %27, %28 : vector<8x8xf32>
    %30 = math.tanh %29 : vector<8x8xf32>
    %c1 = arith.constant 1 : index
    %31 = memref.load %arg12[%c1] : memref<3xf32, #tpu.memory_space<smem>>
    %32 = vector.broadcast %31 : f32 to vector<8x8xf32>
    %33 = arith.mulf %30, %32 : vector<8x8xf32>
    %c1_19 = arith.constant 1 : index
    %c0_20 = arith.constant 0 : index
    %c0_21 = arith.constant 0 : index
    %34 = vector.load %arg13[%c1_19, %c0_20, %c0_21] : memref<3x8x8xf32, #tpu.memory_space<vmem>>, vector<1x8x8xf32>
    %35 = vector.shape_cast %34 : vector<1x8x8xf32> to vector<8x8xf32>
    %36 = arith.addf %33, %35 : vector<8x8xf32>
    %37 = vector.extract_strided_slice %8 {offsets = [0, 64], sizes = [8, 64], strides = [1, 1]} : vector<8x192xf32> to vector<8x64xf32>
    %cst_22 = arith.constant dense<0.000000e+00> : vector<8x64xf32>
    %38 = tpu.matmul %36, %37, %cst_22 {dimension_numbers = #tpu.dot_dimension_numbers<[1], [0], [0], [1], [0, 0, 1, 1], [], []>} : vector<8x8xf32>, vector<8x64xf32>, vector<8x64xf32> -> vector<8x64xf32>
    %39 = arith.addf %24, %38 : vector<8x64xf32>
    %40 = vector.extract_strided_slice %6 {offsets = [0, 64], sizes = [8, 32], strides = [1, 1]} : vector<8x192xf32> to vector<8x32xf32>
    %41 = vector.extract_strided_slice %6 {offsets = [0, 160], sizes = [8, 32], strides = [1, 1]} : vector<8x192xf32> to vector<8x32xf32>
    %cst_23 = arith.constant dense<0.000000e+00> : vector<8x8xf32>
    %42 = tpu.matmul %41, %40, %cst_23 {dimension_numbers = #tpu.dot_dimension_numbers<[1], [1], [0], [0], [0, 0, 1, 0], [], []>} : vector<8x32xf32>, vector<8x32xf32>, vector<8x8xf32> -> vector<8x8xf32>
    %cst_24 = arith.constant 3.125000e-02 : f32
    %43 = vector.broadcast %cst_24 : f32 to vector<8x8xf32>
    %44 = arith.mulf %42, %43 : vector<8x8xf32>
    %45 = math.tanh %44 : vector<8x8xf32>
    %c2 = arith.constant 2 : index
    %46 = memref.load %arg12[%c2] : memref<3xf32, #tpu.memory_space<smem>>
    %47 = vector.broadcast %46 : f32 to vector<8x8xf32>
    %48 = arith.mulf %45, %47 : vector<8x8xf32>
    %c2_25 = arith.constant 2 : index
    %c0_26 = arith.constant 0 : index
    %c0_27 = arith.constant 0 : index
    %49 = vector.load %arg13[%c2_25, %c0_26, %c0_27] : memref<3x8x8xf32, #tpu.memory_space<vmem>>, vector<1x8x8xf32>
    %50 = vector.shape_cast %49 : vector<1x8x8xf32> to vector<8x8xf32>
    %51 = arith.addf %48, %50 : vector<8x8xf32>
    %52 = vector.extract_strided_slice %8 {offsets = [0, 128], sizes = [8, 64], strides = [1, 1]} : vector<8x192xf32> to vector<8x64xf32>
    %cst_28 = arith.constant dense<0.000000e+00> : vector<8x64xf32>
    %53 = tpu.matmul %51, %52, %cst_28 {dimension_numbers = #tpu.dot_dimension_numbers<[1], [0], [0], [1], [0, 0, 1, 1], [], []>} : vector<8x8xf32>, vector<8x64xf32>, vector<8x64xf32> -> vector<8x64xf32>
    %54 = arith.addf %39, %53 : vector<8x64xf32>
    %c0_29 = arith.constant 0 : index
    %c0_30 = arith.constant 0 : index
    %55 = vector.load %arg5[%c0_29, %c0_30] : memref<1x64xf32, #tpu.memory_space<vmem>>, vector<1x64xf32>
    %56 = vector.broadcast %55 : vector<1x64xf32> to vector<8x64xf32>
    %57 = arith.addf %54, %56 : vector<8x64xf32>
    %c0_31 = arith.constant 0 : index
    %c0_32 = arith.constant 0 : index
    %58 = vector.load %arg6[%c0_31, %c0_32] : memref<64x64xf32, #tpu.memory_space<vmem>>, vector<64x64xf32>
    %cst_33 = arith.constant dense<0.000000e+00> : vector<8x64xf32>
    %59 = tpu.matmul %1, %58, %cst_33 {dimension_numbers = #tpu.dot_dimension_numbers<[1], [0], [0], [1], [0, 0, 1, 1], [], []>} : vector<8x64xf32>, vector<64x64xf32>, vector<8x64xf32> -> vector<8x64xf32>
    %c0_34 = arith.constant 0 : index
    %c0_35 = arith.constant 0 : index
    %60 = vector.load %arg7[%c0_34, %c0_35] : memref<1x64xf32, #tpu.memory_space<vmem>>, vector<1x64xf32>
    %61 = vector.broadcast %60 : vector<1x64xf32> to vector<8x64xf32>
    %62 = arith.addf %59, %61 : vector<8x64xf32>
    %63 = arith.addf %62, %57 : vector<8x64xf32>
    %cst_36 = arith.constant 0.000000e+00 : f32
    %64 = vector.broadcast %cst_36 : f32 to vector<8x64xf32>
    %65 = arith.cmpf oge, %63, %64 : vector<8x64xf32>
    %cst_37 = arith.constant 1.000000e-01 : f32
    %66 = vector.broadcast %cst_37 : f32 to vector<8x64xf32>
    %67 = arith.mulf %66, %63 : vector<8x64xf32>
    %68 = arith.select %65, %63, %67 : vector<8x64xi1>, vector<8x64xf32>
    %c0_38 = arith.constant 0 : index
    %c0_39 = arith.constant 0 : index
    %69 = vector.load %arg8[%c0_38, %c0_39] : memref<64x64xf32, #tpu.memory_space<vmem>>, vector<64x64xf32>
    %cst_40 = arith.constant dense<0.000000e+00> : vector<8x64xf32>
    %70 = tpu.matmul %68, %69, %cst_40 {dimension_numbers = #tpu.dot_dimension_numbers<[1], [0], [0], [1], [0, 0, 1, 1], [], []>} : vector<8x64xf32>, vector<64x64xf32>, vector<8x64xf32> -> vector<8x64xf32>
    %c0_41 = arith.constant 0 : index
    %c0_42 = arith.constant 0 : index
    %71 = vector.load %arg9[%c0_41, %c0_42] : memref<1x64xf32, #tpu.memory_space<vmem>>, vector<1x64xf32>
    %72 = vector.broadcast %71 : vector<1x64xf32> to vector<8x64xf32>
    %73 = arith.addf %70, %72 : vector<8x64xf32>
    %c0_43 = arith.constant 0 : index
    %c0_44 = arith.constant 0 : index
    %74 = vector.load %arg10[%c0_43, %c0_44] : memref<64x64xf32, #tpu.memory_space<vmem>>, vector<64x64xf32>
    %cst_45 = arith.constant dense<0.000000e+00> : vector<8x64xf32>
    %75 = tpu.matmul %1, %74, %cst_45 {dimension_numbers = #tpu.dot_dimension_numbers<[1], [0], [0], [1], [0, 0, 1, 1], [], []>} : vector<8x64xf32>, vector<64x64xf32>, vector<8x64xf32> -> vector<8x64xf32>
    %c0_46 = arith.constant 0 : index
    %c0_47 = arith.constant 0 : index
    %76 = vector.load %arg11[%c0_46, %c0_47] : memref<1x64xf32, #tpu.memory_space<vmem>>, vector<1x64xf32>
    %77 = vector.broadcast %76 : vector<1x64xf32> to vector<8x64xf32>
    %78 = arith.addf %75, %77 : vector<8x64xf32>
    %79 = arith.addf %78, %73 : vector<8x64xf32>
    %cst_48 = arith.constant 0.000000e+00 : f32
    %80 = vector.broadcast %cst_48 : f32 to vector<8x64xf32>
    %81 = arith.cmpf oge, %79, %80 : vector<8x64xf32>
    %cst_49 = arith.constant 1.000000e-01 : f32
    %82 = vector.broadcast %cst_49 : f32 to vector<8x64xf32>
    %83 = arith.mulf %82, %79 : vector<8x64xf32>
    %84 = arith.select %81, %79, %83 : vector<8x64xi1>, vector<8x64xf32>
    %c0_50 = arith.constant 0 : index
    %c0_51 = arith.constant 0 : index
    %c0_52 = arith.constant 0 : index
    %85 = vector.load %arg14[%c0_50, %c0_51, %c0_52] : memref<1x8x64xf32, #tpu.memory_space<vmem>>, vector<1x8x64xf32>
    %86 = vector.shape_cast %85 : vector<1x8x64xf32> to vector<8x64xf32>
    %87 = vector.shape_cast %84 : vector<8x64xf32> to vector<1x8x64xf32>
    tpu.vector_store %arg14[%c0_50, %c0_51, %c0_52], %87 {strides = array<i32>} : memref<1x8x64xf32, #tpu.memory_space<vmem>>, vector<1x8x64xf32>,
    return
  }
  func.func @transform_0(%arg0: i32) -> (i32, i32, i32) {
    %c0_i32 = arith.constant 0 : i32
    %c0_i32_0 = arith.constant 0 : i32
    %c0_i32_1 = arith.constant 0 : i32
    return %arg0, %c0_i32, %c0_i32_0 : i32, i32, i32
  }
  func.func @transform_1(%arg0: i32) -> (i32, i32) {
    %c0_i32 = arith.constant 0 : i32
    %c0_i32_0 = arith.constant 0 : i32
    %c0_i32_1 = arith.constant 0 : i32
    return %c0_i32, %c0_i32_0 : i32, i32
  }
  func.func @transform_2(%arg0: i32) -> (i32, i32) {
    %c0_i32 = arith.constant 0 : i32
    %c0_i32_0 = arith.constant 0 : i32
    %c0_i32_1 = arith.constant 0 : i32
    return %c0_i32, %c0_i32_0 : i32, i32
  }
  func.func @transform_3(%arg0: i32) -> (i32, i32) {
    %c0_i32 = arith.constant 0 : i32
    %c0_i32_0 = arith.constant 0 : i32
    %c0_i32_1 = arith.constant 0 : i32
    return %c0_i32, %c0_i32_0 : i32, i32
  }
  func.func @transform_4(%arg0: i32) -> (i32, i32) {
    %c0_i32 = arith.constant 0 : i32
    %c0_i32_0 = arith.constant 0 : i32
    %c0_i32_1 = arith.constant 0 : i32
    return %c0_i32, %c0_i32_0 : i32, i32
  }
  func.func @transform_5(%arg0: i32) -> (i32, i32) {
    %c0_i32 = arith.constant 0 : i32
    %c0_i32_0 = arith.constant 0 : i32
    %c0_i32_1 = arith.constant 0 : i32
    return %c0_i32, %c0_i32_0 : i32, i32
  }
  func.func @transform_6(%arg0: i32) -> (i32, i32) {
    %c0_i32 = arith.constant 0 : i32
    %c0_i32_0 = arith.constant 0 : i32
    %c0_i32_1 = arith.constant 0 : i32
    return %c0_i32, %c0_i32_0 : i32, i32
  }
  func.func @transform_7(%arg0: i32) -> (i32, i32) {
    %c0_i32 = arith.constant 0 : i32
    %c0_i32_0 = arith.constant 0 : i32
    %c0_i32_1 = arith.constant 0 : i32
    return %c0_i32, %c0_i32_0 : i32, i32
  }
  func.func @transform_8(%arg0: i32) -> (i32, i32) {
    %c0_i32 = arith.constant 0 : i32
    %c0_i32_0 = arith.constant 0 : i32
    %c0_i32_1 = arith.constant 0 : i32
    return %c0_i32, %c0_i32_0 : i32, i32
  }
  func.func @transform_9(%arg0: i32) -> (i32, i32) {
    %c0_i32 = arith.constant 0 : i32
    %c0_i32_0 = arith.constant 0 : i32
    %c0_i32_1 = arith.constant 0 : i32
    return %c0_i32, %c0_i32_0 : i32, i32
  }
  func.func @transform_10(%arg0: i32) -> (i32, i32) {
    %c0_i32 = arith.constant 0 : i32
    %c0_i32_0 = arith.constant 0 : i32
    %c0_i32_1 = arith.constant 0 : i32
    return %c0_i32, %c0_i32_0 : i32, i32
  }
  func.func @transform_11(%arg0: i32) -> i32 {
    %c0_i32 = arith.constant 0 : i32
    %c0_i32_0 = arith.constant 0 : i32
    return %c0_i32 : i32
  }
  func.func @transform_12(%arg0: i32) -> (i32, i32, i32) {
    %c0_i32 = arith.constant 0 : i32
    %c0_i32_0 = arith.constant 0 : i32
    %c0_i32_1 = arith.constant 0 : i32
    %c0_i32_2 = arith.constant 0 : i32
    return %c0_i32, %c0_i32_0, %c0_i32_1 : i32, i32, i32
  }
  func.func @transform_13(%arg0: i32) -> (i32, i32, i32) {
    %c0_i32 = arith.constant 0 : i32
    %c0_i32_0 = arith.constant 0 : i32
    %c0_i32_1 = arith.constant 0 : i32
    return %arg0, %c0_i32, %c0_i32_0 : i32, i32, i32
  }
}

module attributes {stable_mosaic.version = 11 : i64} {
  func.func @_stage_kernel(%arg0: i32, %arg1: memref<1x8x64xf32, #tpu.memory_space<vmem>>, %arg2: memref<64x192xf32, #tpu.memory_space<vmem>>, %arg3: memref<1x192xf32, #tpu.memory_space<vmem>>, %arg4: memref<64x384xf32, #tpu.memory_space<vmem>>, %arg5: memref<1x128xf32, #tpu.memory_space<vmem>>, %arg6: memref<64x128xf32, #tpu.memory_space<vmem>>, %arg7: memref<1x128xf32, #tpu.memory_space<vmem>>, %arg8: memref<128x128xf32, #tpu.memory_space<vmem>>, %arg9: memref<1x128xf32, #tpu.memory_space<vmem>>, %arg10: memref<64x128xf32, #tpu.memory_space<vmem>>, %arg11: memref<1x128xf32, #tpu.memory_space<vmem>>, %arg12: memref<3xf32, #tpu.memory_space<smem>>, %arg13: memref<3x8x8xf32, #tpu.memory_space<vmem>>, %arg14: memref<1x8x128xf32, #tpu.memory_space<vmem>>) attributes {dimension_semantics = [#tpu.dimension_semantics<parallel>], iteration_bounds = array<i64: 4>, scalar_prefetch = 0 : i64, scratch_operands = 0 : i64, tpu.core_type = #tpu.core_type<tc>, window_params = [{transform_indices = @transform_0, window_bounds = array<i64: 1, 8, 64>}, {pipeline_mode = #tpu.pipeline_mode<synchronous>, transform_indices = @transform_1, window_bounds = array<i64: 64, 192>}, {pipeline_mode = #tpu.pipeline_mode<synchronous>, transform_indices = @transform_2, window_bounds = array<i64: 1, 192>}, {pipeline_mode = #tpu.pipeline_mode<synchronous>, transform_indices = @transform_3, window_bounds = array<i64: 64, 384>}, {pipeline_mode = #tpu.pipeline_mode<synchronous>, transform_indices = @transform_4, window_bounds = array<i64: 1, 128>}, {pipeline_mode = #tpu.pipeline_mode<synchronous>, transform_indices = @transform_5, window_bounds = array<i64: 64, 128>}, {pipeline_mode = #tpu.pipeline_mode<synchronous>, transform_indices = @transform_6, window_bounds = array<i64: 1, 128>}, {pipeline_mode = #tpu.pipeline_mode<synchronous>, transform_indices = @transform_7, window_bounds = array<i64: 128, 128>}, {pipeline_mode = #tpu.pipeline_mode<synchronous>, transform_indices = @transform_8, window_bounds = array<i64: 1, 128>}, {pipeline_mode = #tpu.pipeline_mode<synchronous>, transform_indices = @transform_9, window_bounds = array<i64: 64, 128>}, {pipeline_mode = #tpu.pipeline_mode<synchronous>, transform_indices = @transform_10, window_bounds = array<i64: 1, 128>}, {transform_indices = @transform_11, window_bounds = array<i64: 3>}, {pipeline_mode = #tpu.pipeline_mode<synchronous>, transform_indices = @transform_12, window_bounds = array<i64: 3, 8, 8>}, {transform_indices = @transform_13, window_bounds = array<i64: 1, 8, 128>}]} {
    %c0 = arith.constant 0 : index
    %c0_0 = arith.constant 0 : index
    %c0_1 = arith.constant 0 : index
    %0 = vector.load %arg1[%c0, %c0_0, %c0_1] : memref<1x8x64xf32, #tpu.memory_space<vmem>>, vector<1x8x64xf32>
    %1 = vector.shape_cast %0 : vector<1x8x64xf32> to vector<8x64xf32>
    %c0_2 = arith.constant 0 : index
    %c0_3 = arith.constant 0 : index
    %2 = vector.load %arg2[%c0_2, %c0_3] : memref<64x192xf32, #tpu.memory_space<vmem>>, vector<64x192xf32>
    %cst = arith.constant dense<0.000000e+00> : vector<8x192xf32>
    %3 = tpu.matmul %1, %2, %cst {dimension_numbers = #tpu.dot_dimension_numbers<[1], [0], [0], [1], [0, 0, 1, 1], [], []>} : vector<8x64xf32>, vector<64x192xf32>, vector<8x192xf32> -> vector<8x192xf32>
    %c0_4 = arith.constant 0 : index
    %c0_5 = arith.constant 0 : index
    %4 = vector.load %arg3[%c0_4, %c0_5] : memref<1x192xf32, #tpu.memory_space<vmem>>, vector<1x192xf32>
    %5 = vector.broadcast %4 : vector<1x192xf32> to vector<8x192xf32>
    %6 = arith.addf %3, %5 : vector<8x192xf32>
    %c0_6 = arith.constant 0 : index
    %c0_7 = arith.constant 0 : index
    %7 = vector.load %arg4[%c0_6, %c0_7] : memref<64x384xf32, #tpu.memory_space<vmem>>, vector<64x384xf32>
    %cst_8 = arith.constant dense<0.000000e+00> : vector<8x384xf32>
    %8 = tpu.matmul %1, %7, %cst_8 {dimension_numbers = #tpu.dot_dimension_numbers<[1], [0], [0], [1], [0, 0, 1, 1], [], []>} : vector<8x64xf32>, vector<64x384xf32>, vector<8x384xf32> -> vector<8x384xf32>
    %cst_9 = arith.constant 0.000000e+00 : f32
    %9 = vector.broadcast %cst_9 : f32 to vector<8x128xf32>
    %10 = vector.extract_strided_slice %6 {offsets = [0, 0], sizes = [8, 32], strides = [1, 1]} : vector<8x192xf32> to vector<8x32xf32>
    %11 = vector.extract_strided_slice %6 {offsets = [0, 96], sizes = [8, 32], strides = [1, 1]} : vector<8x192xf32> to vector<8x32xf32>
    %cst_10 = arith.constant dense<0.000000e+00> : vector<8x8xf32>
    %12 = tpu.matmul %11, %10, %cst_10 {dimension_numbers = #tpu.dot_dimension_numbers<[1], [1], [0], [0], [0, 0, 1, 0], [], []>} : vector<8x32xf32>, vector<8x32xf32>, vector<8x8xf32> -> vector<8x8xf32>
    %cst_11 = arith.constant 3.125000e-02 : f32
    %13 = vector.broadcast %cst_11 : f32 to vector<8x8xf32>
    %14 = arith.mulf %12, %13 : vector<8x8xf32>
    %15 = math.tanh %14 : vector<8x8xf32>
    %c0_12 = arith.constant 0 : index
    %16 = memref.load %arg12[%c0_12] : memref<3xf32, #tpu.memory_space<smem>>
    %17 = vector.broadcast %16 : f32 to vector<8x8xf32>
    %18 = arith.mulf %15, %17 : vector<8x8xf32>
    %c0_13 = arith.constant 0 : index
    %c0_14 = arith.constant 0 : index
    %c0_15 = arith.constant 0 : index
    %19 = vector.load %arg13[%c0_13, %c0_14, %c0_15] : memref<3x8x8xf32, #tpu.memory_space<vmem>>, vector<1x8x8xf32>
    %20 = vector.shape_cast %19 : vector<1x8x8xf32> to vector<8x8xf32>
    %21 = arith.addf %18, %20 : vector<8x8xf32>
    %22 = vector.extract_strided_slice %8 {offsets = [0, 0], sizes = [8, 128], strides = [1, 1]} : vector<8x384xf32> to vector<8x128xf32>
    %cst_16 = arith.constant dense<0.000000e+00> : vector<8x128xf32>
    %23 = tpu.matmul %21, %22, %cst_16 {dimension_numbers = #tpu.dot_dimension_numbers<[1], [0], [0], [1], [0, 0, 1, 1], [], []>} : vector<8x8xf32>, vector<8x128xf32>, vector<8x128xf32> -> vector<8x128xf32>
    %24 = arith.addf %9, %23 : vector<8x128xf32>
    %25 = vector.extract_strided_slice %6 {offsets = [0, 32], sizes = [8, 32], strides = [1, 1]} : vector<8x192xf32> to vector<8x32xf32>
    %26 = vector.extract_strided_slice %6 {offsets = [0, 128], sizes = [8, 32], strides = [1, 1]} : vector<8x192xf32> to vector<8x32xf32>
    %cst_17 = arith.constant dense<0.000000e+00> : vector<8x8xf32>
    %27 = tpu.matmul %26, %25, %cst_17 {dimension_numbers = #tpu.dot_dimension_numbers<[1], [1], [0], [0], [0, 0, 1, 0], [], []>} : vector<8x32xf32>, vector<8x32xf32>, vector<8x8xf32> -> vector<8x8xf32>
    %cst_18 = arith.constant 3.125000e-02 : f32
    %28 = vector.broadcast %cst_18 : f32 to vector<8x8xf32>
    %29 = arith.mulf %27, %28 : vector<8x8xf32>
    %30 = math.tanh %29 : vector<8x8xf32>
    %c1 = arith.constant 1 : index
    %31 = memref.load %arg12[%c1] : memref<3xf32, #tpu.memory_space<smem>>
    %32 = vector.broadcast %31 : f32 to vector<8x8xf32>
    %33 = arith.mulf %30, %32 : vector<8x8xf32>
    %c1_19 = arith.constant 1 : index
    %c0_20 = arith.constant 0 : index
    %c0_21 = arith.constant 0 : index
    %34 = vector.load %arg13[%c1_19, %c0_20, %c0_21] : memref<3x8x8xf32, #tpu.memory_space<vmem>>, vector<1x8x8xf32>
    %35 = vector.shape_cast %34 : vector<1x8x8xf32> to vector<8x8xf32>
    %36 = arith.addf %33, %35 : vector<8x8xf32>
    %37 = vector.extract_strided_slice %8 {offsets = [0, 128], sizes = [8, 128], strides = [1, 1]} : vector<8x384xf32> to vector<8x128xf32>
    %cst_22 = arith.constant dense<0.000000e+00> : vector<8x128xf32>
    %38 = tpu.matmul %36, %37, %cst_22 {dimension_numbers = #tpu.dot_dimension_numbers<[1], [0], [0], [1], [0, 0, 1, 1], [], []>} : vector<8x8xf32>, vector<8x128xf32>, vector<8x128xf32> -> vector<8x128xf32>
    %39 = arith.addf %24, %38 : vector<8x128xf32>
    %40 = vector.extract_strided_slice %6 {offsets = [0, 64], sizes = [8, 32], strides = [1, 1]} : vector<8x192xf32> to vector<8x32xf32>
    %41 = vector.extract_strided_slice %6 {offsets = [0, 160], sizes = [8, 32], strides = [1, 1]} : vector<8x192xf32> to vector<8x32xf32>
    %cst_23 = arith.constant dense<0.000000e+00> : vector<8x8xf32>
    %42 = tpu.matmul %41, %40, %cst_23 {dimension_numbers = #tpu.dot_dimension_numbers<[1], [1], [0], [0], [0, 0, 1, 0], [], []>} : vector<8x32xf32>, vector<8x32xf32>, vector<8x8xf32> -> vector<8x8xf32>
    %cst_24 = arith.constant 3.125000e-02 : f32
    %43 = vector.broadcast %cst_24 : f32 to vector<8x8xf32>
    %44 = arith.mulf %42, %43 : vector<8x8xf32>
    %45 = math.tanh %44 : vector<8x8xf32>
    %c2 = arith.constant 2 : index
    %46 = memref.load %arg12[%c2] : memref<3xf32, #tpu.memory_space<smem>>
    %47 = vector.broadcast %46 : f32 to vector<8x8xf32>
    %48 = arith.mulf %45, %47 : vector<8x8xf32>
    %c2_25 = arith.constant 2 : index
    %c0_26 = arith.constant 0 : index
    %c0_27 = arith.constant 0 : index
    %49 = vector.load %arg13[%c2_25, %c0_26, %c0_27] : memref<3x8x8xf32, #tpu.memory_space<vmem>>, vector<1x8x8xf32>
    %50 = vector.shape_cast %49 : vector<1x8x8xf32> to vector<8x8xf32>
    %51 = arith.addf %48, %50 : vector<8x8xf32>
    %52 = vector.extract_strided_slice %8 {offsets = [0, 256], sizes = [8, 128], strides = [1, 1]} : vector<8x384xf32> to vector<8x128xf32>
    %cst_28 = arith.constant dense<0.000000e+00> : vector<8x128xf32>
    %53 = tpu.matmul %51, %52, %cst_28 {dimension_numbers = #tpu.dot_dimension_numbers<[1], [0], [0], [1], [0, 0, 1, 1], [], []>} : vector<8x8xf32>, vector<8x128xf32>, vector<8x128xf32> -> vector<8x128xf32>
    %54 = arith.addf %39, %53 : vector<8x128xf32>
    %c0_29 = arith.constant 0 : index
    %c0_30 = arith.constant 0 : index
    %55 = vector.load %arg5[%c0_29, %c0_30] : memref<1x128xf32, #tpu.memory_space<vmem>>, vector<1x128xf32>
    %56 = vector.broadcast %55 : vector<1x128xf32> to vector<8x128xf32>
    %57 = arith.addf %54, %56 : vector<8x128xf32>
    %c0_31 = arith.constant 0 : index
    %c0_32 = arith.constant 0 : index
    %58 = vector.load %arg6[%c0_31, %c0_32] : memref<64x128xf32, #tpu.memory_space<vmem>>, vector<64x128xf32>
    %cst_33 = arith.constant dense<0.000000e+00> : vector<8x128xf32>
    %59 = tpu.matmul %1, %58, %cst_33 {dimension_numbers = #tpu.dot_dimension_numbers<[1], [0], [0], [1], [0, 0, 1, 1], [], []>} : vector<8x64xf32>, vector<64x128xf32>, vector<8x128xf32> -> vector<8x128xf32>
    %c0_34 = arith.constant 0 : index
    %c0_35 = arith.constant 0 : index
    %60 = vector.load %arg7[%c0_34, %c0_35] : memref<1x128xf32, #tpu.memory_space<vmem>>, vector<1x128xf32>
    %61 = vector.broadcast %60 : vector<1x128xf32> to vector<8x128xf32>
    %62 = arith.addf %59, %61 : vector<8x128xf32>
    %63 = arith.addf %62, %57 : vector<8x128xf32>
    %cst_36 = arith.constant 0.000000e+00 : f32
    %64 = vector.broadcast %cst_36 : f32 to vector<8x128xf32>
    %65 = arith.cmpf oge, %63, %64 : vector<8x128xf32>
    %cst_37 = arith.constant 1.000000e-01 : f32
    %66 = vector.broadcast %cst_37 : f32 to vector<8x128xf32>
    %67 = arith.mulf %66, %63 : vector<8x128xf32>
    %68 = arith.select %65, %63, %67 : vector<8x128xi1>, vector<8x128xf32>
    %c0_38 = arith.constant 0 : index
    %c0_39 = arith.constant 0 : index
    %69 = vector.load %arg8[%c0_38, %c0_39] : memref<128x128xf32, #tpu.memory_space<vmem>>, vector<128x128xf32>
    %cst_40 = arith.constant dense<0.000000e+00> : vector<8x128xf32>
    %70 = tpu.matmul %68, %69, %cst_40 {dimension_numbers = #tpu.dot_dimension_numbers<[1], [0], [0], [1], [0, 0, 1, 1], [], []>} : vector<8x128xf32>, vector<128x128xf32>, vector<8x128xf32> -> vector<8x128xf32>
    %c0_41 = arith.constant 0 : index
    %c0_42 = arith.constant 0 : index
    %71 = vector.load %arg9[%c0_41, %c0_42] : memref<1x128xf32, #tpu.memory_space<vmem>>, vector<1x128xf32>
    %72 = vector.broadcast %71 : vector<1x128xf32> to vector<8x128xf32>
    %73 = arith.addf %70, %72 : vector<8x128xf32>
    %c0_43 = arith.constant 0 : index
    %c0_44 = arith.constant 0 : index
    %74 = vector.load %arg10[%c0_43, %c0_44] : memref<64x128xf32, #tpu.memory_space<vmem>>, vector<64x128xf32>
    %cst_45 = arith.constant dense<0.000000e+00> : vector<8x128xf32>
    %75 = tpu.matmul %1, %74, %cst_45 {dimension_numbers = #tpu.dot_dimension_numbers<[1], [0], [0], [1], [0, 0, 1, 1], [], []>} : vector<8x64xf32>, vector<64x128xf32>, vector<8x128xf32> -> vector<8x128xf32>
    %c0_46 = arith.constant 0 : index
    %c0_47 = arith.constant 0 : index
    %76 = vector.load %arg11[%c0_46, %c0_47] : memref<1x128xf32, #tpu.memory_space<vmem>>, vector<1x128xf32>
    %77 = vector.broadcast %76 : vector<1x128xf32> to vector<8x128xf32>
    %78 = arith.addf %75, %77 : vector<8x128xf32>
    %79 = arith.addf %78, %73 : vector<8x128xf32>
    %cst_48 = arith.constant 0.000000e+00 : f32
    %80 = vector.broadcast %cst_48 : f32 to vector<8x128xf32>
    %81 = arith.cmpf oge, %79, %80 : vector<8x128xf32>
    %cst_49 = arith.constant 1.000000e-01 : f32
    %82 = vector.broadcast %cst_49 : f32 to vector<8x128xf32>
    %83 = arith.mulf %82, %79 : vector<8x128xf32>
    %84 = arith.select %81, %79, %83 : vector<8x128xi1>, vector<8x128xf32>
    %c0_50 = arith.constant 0 : index
    %c0_51 = arith.constant 0 : index
    %c0_52 = arith.constant 0 : index
    %85 = vector.load %arg14[%c0_50, %c0_51, %c0_52] : memref<1x8x128xf32, #tpu.memory_space<vmem>>, vector<1x8x128xf32>
    %86 = vector.shape_cast %85 : vector<1x8x128xf32> to vector<8x128xf32>
    %87 = vector.shape_cast %84 : vector<8x128xf32> to vector<1x8x128xf32>
    tpu.vector_store %arg14[%c0_50, %c0_51, %c0_52], %87 {strides = array<i32>} : memref<1x8x128xf32, #tpu.memory_space<vmem>>, vector<1x8x128xf32>,
    return
  }
  func.func @transform_0(%arg0: i32) -> (i32, i32, i32) {
    %c0_i32 = arith.constant 0 : i32
    %c0_i32_0 = arith.constant 0 : i32
    %c0_i32_1 = arith.constant 0 : i32
    return %arg0, %c0_i32, %c0_i32_0 : i32, i32, i32
  }
  func.func @transform_1(%arg0: i32) -> (i32, i32) {
    %c0_i32 = arith.constant 0 : i32
    %c0_i32_0 = arith.constant 0 : i32
    %c0_i32_1 = arith.constant 0 : i32
    return %c0_i32, %c0_i32_0 : i32, i32
  }
  func.func @transform_2(%arg0: i32) -> (i32, i32) {
    %c0_i32 = arith.constant 0 : i32
    %c0_i32_0 = arith.constant 0 : i32
    %c0_i32_1 = arith.constant 0 : i32
    return %c0_i32, %c0_i32_0 : i32, i32
  }
  func.func @transform_3(%arg0: i32) -> (i32, i32) {
    %c0_i32 = arith.constant 0 : i32
    %c0_i32_0 = arith.constant 0 : i32
    %c0_i32_1 = arith.constant 0 : i32
    return %c0_i32, %c0_i32_0 : i32, i32
  }
  func.func @transform_4(%arg0: i32) -> (i32, i32) {
    %c0_i32 = arith.constant 0 : i32
    %c0_i32_0 = arith.constant 0 : i32
    %c0_i32_1 = arith.constant 0 : i32
    return %c0_i32, %c0_i32_0 : i32, i32
  }
  func.func @transform_5(%arg0: i32) -> (i32, i32) {
    %c0_i32 = arith.constant 0 : i32
    %c0_i32_0 = arith.constant 0 : i32
    %c0_i32_1 = arith.constant 0 : i32
    return %c0_i32, %c0_i32_0 : i32, i32
  }
  func.func @transform_6(%arg0: i32) -> (i32, i32) {
    %c0_i32 = arith.constant 0 : i32
    %c0_i32_0 = arith.constant 0 : i32
    %c0_i32_1 = arith.constant 0 : i32
    return %c0_i32, %c0_i32_0 : i32, i32
  }
  func.func @transform_7(%arg0: i32) -> (i32, i32) {
    %c0_i32 = arith.constant 0 : i32
    %c0_i32_0 = arith.constant 0 : i32
    %c0_i32_1 = arith.constant 0 : i32
    return %c0_i32, %c0_i32_0 : i32, i32
  }
  func.func @transform_8(%arg0: i32) -> (i32, i32) {
    %c0_i32 = arith.constant 0 : i32
    %c0_i32_0 = arith.constant 0 : i32
    %c0_i32_1 = arith.constant 0 : i32
    return %c0_i32, %c0_i32_0 : i32, i32
  }
  func.func @transform_9(%arg0: i32) -> (i32, i32) {
    %c0_i32 = arith.constant 0 : i32
    %c0_i32_0 = arith.constant 0 : i32
    %c0_i32_1 = arith.constant 0 : i32
    return %c0_i32, %c0_i32_0 : i32, i32
  }
  func.func @transform_10(%arg0: i32) -> (i32, i32) {
    %c0_i32 = arith.constant 0 : i32
    %c0_i32_0 = arith.constant 0 : i32
    %c0_i32_1 = arith.constant 0 : i32
    return %c0_i32, %c0_i32_0 : i32, i32
  }
  func.func @transform_11(%arg0: i32) -> i32 {
    %c0_i32 = arith.constant 0 : i32
    %c0_i32_0 = arith.constant 0 : i32
    return %c0_i32 : i32
  }
  func.func @transform_12(%arg0: i32) -> (i32, i32, i32) {
    %c0_i32 = arith.constant 0 : i32
    %c0_i32_0 = arith.constant 0 : i32
    %c0_i32_1 = arith.constant 0 : i32
    %c0_i32_2 = arith.constant 0 : i32
    return %c0_i32, %c0_i32_0, %c0_i32_1 : i32, i32, i32
  }
  func.func @transform_13(%arg0: i32) -> (i32, i32, i32) {
    %c0_i32 = arith.constant 0 : i32
    %c0_i32_0 = arith.constant 0 : i32
    %c0_i32_1 = arith.constant 0 : i32
    return %arg0, %c0_i32, %c0_i32_0 : i32, i32, i32
  }
}

module attributes {stable_mosaic.version = 11 : i64} {
  func.func @_stage_kernel(%arg0: i32, %arg1: memref<1x8x128xf32, #tpu.memory_space<vmem>>, %arg2: memref<128x192xf32, #tpu.memory_space<vmem>>, %arg3: memref<1x192xf32, #tpu.memory_space<vmem>>, %arg4: memref<128x384xf32, #tpu.memory_space<vmem>>, %arg5: memref<1x128xf32, #tpu.memory_space<vmem>>, %arg6: memref<128x128xf32, #tpu.memory_space<vmem>>, %arg7: memref<1x128xf32, #tpu.memory_space<vmem>>, %arg8: memref<128x128xf32, #tpu.memory_space<vmem>>, %arg9: memref<1x128xf32, #tpu.memory_space<vmem>>, %arg10: memref<128x128xf32, #tpu.memory_space<vmem>>, %arg11: memref<1x128xf32, #tpu.memory_space<vmem>>, %arg12: memref<3xf32, #tpu.memory_space<smem>>, %arg13: memref<3x8x8xf32, #tpu.memory_space<vmem>>, %arg14: memref<1x8x128xf32, #tpu.memory_space<vmem>>) attributes {dimension_semantics = [#tpu.dimension_semantics<parallel>], iteration_bounds = array<i64: 4>, scalar_prefetch = 0 : i64, scratch_operands = 0 : i64, tpu.core_type = #tpu.core_type<tc>, window_params = [{transform_indices = @transform_0, window_bounds = array<i64: 1, 8, 128>}, {pipeline_mode = #tpu.pipeline_mode<synchronous>, transform_indices = @transform_1, window_bounds = array<i64: 128, 192>}, {pipeline_mode = #tpu.pipeline_mode<synchronous>, transform_indices = @transform_2, window_bounds = array<i64: 1, 192>}, {pipeline_mode = #tpu.pipeline_mode<synchronous>, transform_indices = @transform_3, window_bounds = array<i64: 128, 384>}, {pipeline_mode = #tpu.pipeline_mode<synchronous>, transform_indices = @transform_4, window_bounds = array<i64: 1, 128>}, {pipeline_mode = #tpu.pipeline_mode<synchronous>, transform_indices = @transform_5, window_bounds = array<i64: 128, 128>}, {pipeline_mode = #tpu.pipeline_mode<synchronous>, transform_indices = @transform_6, window_bounds = array<i64: 1, 128>}, {pipeline_mode = #tpu.pipeline_mode<synchronous>, transform_indices = @transform_7, window_bounds = array<i64: 128, 128>}, {pipeline_mode = #tpu.pipeline_mode<synchronous>, transform_indices = @transform_8, window_bounds = array<i64: 1, 128>}, {pipeline_mode = #tpu.pipeline_mode<synchronous>, transform_indices = @transform_9, window_bounds = array<i64: 128, 128>}, {pipeline_mode = #tpu.pipeline_mode<synchronous>, transform_indices = @transform_10, window_bounds = array<i64: 1, 128>}, {transform_indices = @transform_11, window_bounds = array<i64: 3>}, {pipeline_mode = #tpu.pipeline_mode<synchronous>, transform_indices = @transform_12, window_bounds = array<i64: 3, 8, 8>}, {transform_indices = @transform_13, window_bounds = array<i64: 1, 8, 128>}]} {
    %c0 = arith.constant 0 : index
    %c0_0 = arith.constant 0 : index
    %c0_1 = arith.constant 0 : index
    %0 = vector.load %arg1[%c0, %c0_0, %c0_1] : memref<1x8x128xf32, #tpu.memory_space<vmem>>, vector<1x8x128xf32>
    %1 = vector.shape_cast %0 : vector<1x8x128xf32> to vector<8x128xf32>
    %c0_2 = arith.constant 0 : index
    %c0_3 = arith.constant 0 : index
    %2 = vector.load %arg2[%c0_2, %c0_3] : memref<128x192xf32, #tpu.memory_space<vmem>>, vector<128x192xf32>
    %cst = arith.constant dense<0.000000e+00> : vector<8x192xf32>
    %3 = tpu.matmul %1, %2, %cst {dimension_numbers = #tpu.dot_dimension_numbers<[1], [0], [0], [1], [0, 0, 1, 1], [], []>} : vector<8x128xf32>, vector<128x192xf32>, vector<8x192xf32> -> vector<8x192xf32>
    %c0_4 = arith.constant 0 : index
    %c0_5 = arith.constant 0 : index
    %4 = vector.load %arg3[%c0_4, %c0_5] : memref<1x192xf32, #tpu.memory_space<vmem>>, vector<1x192xf32>
    %5 = vector.broadcast %4 : vector<1x192xf32> to vector<8x192xf32>
    %6 = arith.addf %3, %5 : vector<8x192xf32>
    %c0_6 = arith.constant 0 : index
    %c0_7 = arith.constant 0 : index
    %7 = vector.load %arg4[%c0_6, %c0_7] : memref<128x384xf32, #tpu.memory_space<vmem>>, vector<128x384xf32>
    %cst_8 = arith.constant dense<0.000000e+00> : vector<8x384xf32>
    %8 = tpu.matmul %1, %7, %cst_8 {dimension_numbers = #tpu.dot_dimension_numbers<[1], [0], [0], [1], [0, 0, 1, 1], [], []>} : vector<8x128xf32>, vector<128x384xf32>, vector<8x384xf32> -> vector<8x384xf32>
    %cst_9 = arith.constant 0.000000e+00 : f32
    %9 = vector.broadcast %cst_9 : f32 to vector<8x128xf32>
    %10 = vector.extract_strided_slice %6 {offsets = [0, 0], sizes = [8, 32], strides = [1, 1]} : vector<8x192xf32> to vector<8x32xf32>
    %11 = vector.extract_strided_slice %6 {offsets = [0, 96], sizes = [8, 32], strides = [1, 1]} : vector<8x192xf32> to vector<8x32xf32>
    %cst_10 = arith.constant dense<0.000000e+00> : vector<8x8xf32>
    %12 = tpu.matmul %11, %10, %cst_10 {dimension_numbers = #tpu.dot_dimension_numbers<[1], [1], [0], [0], [0, 0, 1, 0], [], []>} : vector<8x32xf32>, vector<8x32xf32>, vector<8x8xf32> -> vector<8x8xf32>
    %cst_11 = arith.constant 3.125000e-02 : f32
    %13 = vector.broadcast %cst_11 : f32 to vector<8x8xf32>
    %14 = arith.mulf %12, %13 : vector<8x8xf32>
    %15 = math.tanh %14 : vector<8x8xf32>
    %c0_12 = arith.constant 0 : index
    %16 = memref.load %arg12[%c0_12] : memref<3xf32, #tpu.memory_space<smem>>
    %17 = vector.broadcast %16 : f32 to vector<8x8xf32>
    %18 = arith.mulf %15, %17 : vector<8x8xf32>
    %c0_13 = arith.constant 0 : index
    %c0_14 = arith.constant 0 : index
    %c0_15 = arith.constant 0 : index
    %19 = vector.load %arg13[%c0_13, %c0_14, %c0_15] : memref<3x8x8xf32, #tpu.memory_space<vmem>>, vector<1x8x8xf32>
    %20 = vector.shape_cast %19 : vector<1x8x8xf32> to vector<8x8xf32>
    %21 = arith.addf %18, %20 : vector<8x8xf32>
    %22 = vector.extract_strided_slice %8 {offsets = [0, 0], sizes = [8, 128], strides = [1, 1]} : vector<8x384xf32> to vector<8x128xf32>
    %cst_16 = arith.constant dense<0.000000e+00> : vector<8x128xf32>
    %23 = tpu.matmul %21, %22, %cst_16 {dimension_numbers = #tpu.dot_dimension_numbers<[1], [0], [0], [1], [0, 0, 1, 1], [], []>} : vector<8x8xf32>, vector<8x128xf32>, vector<8x128xf32> -> vector<8x128xf32>
    %24 = arith.addf %9, %23 : vector<8x128xf32>
    %25 = vector.extract_strided_slice %6 {offsets = [0, 32], sizes = [8, 32], strides = [1, 1]} : vector<8x192xf32> to vector<8x32xf32>
    %26 = vector.extract_strided_slice %6 {offsets = [0, 128], sizes = [8, 32], strides = [1, 1]} : vector<8x192xf32> to vector<8x32xf32>
    %cst_17 = arith.constant dense<0.000000e+00> : vector<8x8xf32>
    %27 = tpu.matmul %26, %25, %cst_17 {dimension_numbers = #tpu.dot_dimension_numbers<[1], [1], [0], [0], [0, 0, 1, 0], [], []>} : vector<8x32xf32>, vector<8x32xf32>, vector<8x8xf32> -> vector<8x8xf32>
    %cst_18 = arith.constant 3.125000e-02 : f32
    %28 = vector.broadcast %cst_18 : f32 to vector<8x8xf32>
    %29 = arith.mulf %27, %28 : vector<8x8xf32>
    %30 = math.tanh %29 : vector<8x8xf32>
    %c1 = arith.constant 1 : index
    %31 = memref.load %arg12[%c1] : memref<3xf32, #tpu.memory_space<smem>>
    %32 = vector.broadcast %31 : f32 to vector<8x8xf32>
    %33 = arith.mulf %30, %32 : vector<8x8xf32>
    %c1_19 = arith.constant 1 : index
    %c0_20 = arith.constant 0 : index
    %c0_21 = arith.constant 0 : index
    %34 = vector.load %arg13[%c1_19, %c0_20, %c0_21] : memref<3x8x8xf32, #tpu.memory_space<vmem>>, vector<1x8x8xf32>
    %35 = vector.shape_cast %34 : vector<1x8x8xf32> to vector<8x8xf32>
    %36 = arith.addf %33, %35 : vector<8x8xf32>
    %37 = vector.extract_strided_slice %8 {offsets = [0, 128], sizes = [8, 128], strides = [1, 1]} : vector<8x384xf32> to vector<8x128xf32>
    %cst_22 = arith.constant dense<0.000000e+00> : vector<8x128xf32>
    %38 = tpu.matmul %36, %37, %cst_22 {dimension_numbers = #tpu.dot_dimension_numbers<[1], [0], [0], [1], [0, 0, 1, 1], [], []>} : vector<8x8xf32>, vector<8x128xf32>, vector<8x128xf32> -> vector<8x128xf32>
    %39 = arith.addf %24, %38 : vector<8x128xf32>
    %40 = vector.extract_strided_slice %6 {offsets = [0, 64], sizes = [8, 32], strides = [1, 1]} : vector<8x192xf32> to vector<8x32xf32>
    %41 = vector.extract_strided_slice %6 {offsets = [0, 160], sizes = [8, 32], strides = [1, 1]} : vector<8x192xf32> to vector<8x32xf32>
    %cst_23 = arith.constant dense<0.000000e+00> : vector<8x8xf32>
    %42 = tpu.matmul %41, %40, %cst_23 {dimension_numbers = #tpu.dot_dimension_numbers<[1], [1], [0], [0], [0, 0, 1, 0], [], []>} : vector<8x32xf32>, vector<8x32xf32>, vector<8x8xf32> -> vector<8x8xf32>
    %cst_24 = arith.constant 3.125000e-02 : f32
    %43 = vector.broadcast %cst_24 : f32 to vector<8x8xf32>
    %44 = arith.mulf %42, %43 : vector<8x8xf32>
    %45 = math.tanh %44 : vector<8x8xf32>
    %c2 = arith.constant 2 : index
    %46 = memref.load %arg12[%c2] : memref<3xf32, #tpu.memory_space<smem>>
    %47 = vector.broadcast %46 : f32 to vector<8x8xf32>
    %48 = arith.mulf %45, %47 : vector<8x8xf32>
    %c2_25 = arith.constant 2 : index
    %c0_26 = arith.constant 0 : index
    %c0_27 = arith.constant 0 : index
    %49 = vector.load %arg13[%c2_25, %c0_26, %c0_27] : memref<3x8x8xf32, #tpu.memory_space<vmem>>, vector<1x8x8xf32>
    %50 = vector.shape_cast %49 : vector<1x8x8xf32> to vector<8x8xf32>
    %51 = arith.addf %48, %50 : vector<8x8xf32>
    %52 = vector.extract_strided_slice %8 {offsets = [0, 256], sizes = [8, 128], strides = [1, 1]} : vector<8x384xf32> to vector<8x128xf32>
    %cst_28 = arith.constant dense<0.000000e+00> : vector<8x128xf32>
    %53 = tpu.matmul %51, %52, %cst_28 {dimension_numbers = #tpu.dot_dimension_numbers<[1], [0], [0], [1], [0, 0, 1, 1], [], []>} : vector<8x8xf32>, vector<8x128xf32>, vector<8x128xf32> -> vector<8x128xf32>
    %54 = arith.addf %39, %53 : vector<8x128xf32>
    %c0_29 = arith.constant 0 : index
    %c0_30 = arith.constant 0 : index
    %55 = vector.load %arg5[%c0_29, %c0_30] : memref<1x128xf32, #tpu.memory_space<vmem>>, vector<1x128xf32>
    %56 = vector.broadcast %55 : vector<1x128xf32> to vector<8x128xf32>
    %57 = arith.addf %54, %56 : vector<8x128xf32>
    %c0_31 = arith.constant 0 : index
    %c0_32 = arith.constant 0 : index
    %58 = vector.load %arg6[%c0_31, %c0_32] : memref<128x128xf32, #tpu.memory_space<vmem>>, vector<128x128xf32>
    %cst_33 = arith.constant dense<0.000000e+00> : vector<8x128xf32>
    %59 = tpu.matmul %1, %58, %cst_33 {dimension_numbers = #tpu.dot_dimension_numbers<[1], [0], [0], [1], [0, 0, 1, 1], [], []>} : vector<8x128xf32>, vector<128x128xf32>, vector<8x128xf32> -> vector<8x128xf32>
    %c0_34 = arith.constant 0 : index
    %c0_35 = arith.constant 0 : index
    %60 = vector.load %arg7[%c0_34, %c0_35] : memref<1x128xf32, #tpu.memory_space<vmem>>, vector<1x128xf32>
    %61 = vector.broadcast %60 : vector<1x128xf32> to vector<8x128xf32>
    %62 = arith.addf %59, %61 : vector<8x128xf32>
    %63 = arith.addf %62, %57 : vector<8x128xf32>
    %cst_36 = arith.constant 0.000000e+00 : f32
    %64 = vector.broadcast %cst_36 : f32 to vector<8x128xf32>
    %65 = arith.cmpf oge, %63, %64 : vector<8x128xf32>
    %cst_37 = arith.constant 1.000000e-01 : f32
    %66 = vector.broadcast %cst_37 : f32 to vector<8x128xf32>
    %67 = arith.mulf %66, %63 : vector<8x128xf32>
    %68 = arith.select %65, %63, %67 : vector<8x128xi1>, vector<8x128xf32>
    %c0_38 = arith.constant 0 : index
    %c0_39 = arith.constant 0 : index
    %69 = vector.load %arg8[%c0_38, %c0_39] : memref<128x128xf32, #tpu.memory_space<vmem>>, vector<128x128xf32>
    %cst_40 = arith.constant dense<0.000000e+00> : vector<8x128xf32>
    %70 = tpu.matmul %68, %69, %cst_40 {dimension_numbers = #tpu.dot_dimension_numbers<[1], [0], [0], [1], [0, 0, 1, 1], [], []>} : vector<8x128xf32>, vector<128x128xf32>, vector<8x128xf32> -> vector<8x128xf32>
    %c0_41 = arith.constant 0 : index
    %c0_42 = arith.constant 0 : index
    %71 = vector.load %arg9[%c0_41, %c0_42] : memref<1x128xf32, #tpu.memory_space<vmem>>, vector<1x128xf32>
    %72 = vector.broadcast %71 : vector<1x128xf32> to vector<8x128xf32>
    %73 = arith.addf %70, %72 : vector<8x128xf32>
    %c0_43 = arith.constant 0 : index
    %c0_44 = arith.constant 0 : index
    %74 = vector.load %arg10[%c0_43, %c0_44] : memref<128x128xf32, #tpu.memory_space<vmem>>, vector<128x128xf32>
    %cst_45 = arith.constant dense<0.000000e+00> : vector<8x128xf32>
    %75 = tpu.matmul %1, %74, %cst_45 {dimension_numbers = #tpu.dot_dimension_numbers<[1], [0], [0], [1], [0, 0, 1, 1], [], []>} : vector<8x128xf32>, vector<128x128xf32>, vector<8x128xf32> -> vector<8x128xf32>
    %c0_46 = arith.constant 0 : index
    %c0_47 = arith.constant 0 : index
    %76 = vector.load %arg11[%c0_46, %c0_47] : memref<1x128xf32, #tpu.memory_space<vmem>>, vector<1x128xf32>
    %77 = vector.broadcast %76 : vector<1x128xf32> to vector<8x128xf32>
    %78 = arith.addf %75, %77 : vector<8x128xf32>
    %79 = arith.addf %78, %73 : vector<8x128xf32>
    %cst_48 = arith.constant 0.000000e+00 : f32
    %80 = vector.broadcast %cst_48 : f32 to vector<8x128xf32>
    %81 = arith.cmpf oge, %79, %80 : vector<8x128xf32>
    %cst_49 = arith.constant 1.000000e-01 : f32
    %82 = vector.broadcast %cst_49 : f32 to vector<8x128xf32>
    %83 = arith.mulf %82, %79 : vector<8x128xf32>
    %84 = arith.select %81, %79, %83 : vector<8x128xi1>, vector<8x128xf32>
    %c0_50 = arith.constant 0 : index
    %c0_51 = arith.constant 0 : index
    %c0_52 = arith.constant 0 : index
    %85 = vector.load %arg14[%c0_50, %c0_51, %c0_52] : memref<1x8x128xf32, #tpu.memory_space<vmem>>, vector<1x8x128xf32>
    %86 = vector.shape_cast %85 : vector<1x8x128xf32> to vector<8x128xf32>
    %87 = vector.shape_cast %84 : vector<8x128xf32> to vector<1x8x128xf32>
    tpu.vector_store %arg14[%c0_50, %c0_51, %c0_52], %87 {strides = array<i32>} : memref<1x8x128xf32, #tpu.memory_space<vmem>>, vector<1x8x128xf32>,
    return
  }
  func.func @transform_0(%arg0: i32) -> (i32, i32, i32) {
    %c0_i32 = arith.constant 0 : i32
    %c0_i32_0 = arith.constant 0 : i32
    %c0_i32_1 = arith.constant 0 : i32
    return %arg0, %c0_i32, %c0_i32_0 : i32, i32, i32
  }
  func.func @transform_1(%arg0: i32) -> (i32, i32) {
    %c0_i32 = arith.constant 0 : i32
    %c0_i32_0 = arith.constant 0 : i32
    %c0_i32_1 = arith.constant 0 : i32
    return %c0_i32, %c0_i32_0 : i32, i32
  }
  func.func @transform_2(%arg0: i32) -> (i32, i32) {
    %c0_i32 = arith.constant 0 : i32
    %c0_i32_0 = arith.constant 0 : i32
    %c0_i32_1 = arith.constant 0 : i32
    return %c0_i32, %c0_i32_0 : i32, i32
  }
  func.func @transform_3(%arg0: i32) -> (i32, i32) {
    %c0_i32 = arith.constant 0 : i32
    %c0_i32_0 = arith.constant 0 : i32
    %c0_i32_1 = arith.constant 0 : i32
    return %c0_i32, %c0_i32_0 : i32, i32
  }
  func.func @transform_4(%arg0: i32) -> (i32, i32) {
    %c0_i32 = arith.constant 0 : i32
    %c0_i32_0 = arith.constant 0 : i32
    %c0_i32_1 = arith.constant 0 : i32
    return %c0_i32, %c0_i32_0 : i32, i32
  }
  func.func @transform_5(%arg0: i32) -> (i32, i32) {
    %c0_i32 = arith.constant 0 : i32
    %c0_i32_0 = arith.constant 0 : i32
    %c0_i32_1 = arith.constant 0 : i32
    return %c0_i32, %c0_i32_0 : i32, i32
  }
  func.func @transform_6(%arg0: i32) -> (i32, i32) {
    %c0_i32 = arith.constant 0 : i32
    %c0_i32_0 = arith.constant 0 : i32
    %c0_i32_1 = arith.constant 0 : i32
    return %c0_i32, %c0_i32_0 : i32, i32
  }
  func.func @transform_7(%arg0: i32) -> (i32, i32) {
    %c0_i32 = arith.constant 0 : i32
    %c0_i32_0 = arith.constant 0 : i32
    %c0_i32_1 = arith.constant 0 : i32
    return %c0_i32, %c0_i32_0 : i32, i32
  }
  func.func @transform_8(%arg0: i32) -> (i32, i32) {
    %c0_i32 = arith.constant 0 : i32
    %c0_i32_0 = arith.constant 0 : i32
    %c0_i32_1 = arith.constant 0 : i32
    return %c0_i32, %c0_i32_0 : i32, i32
  }
  func.func @transform_9(%arg0: i32) -> (i32, i32) {
    %c0_i32 = arith.constant 0 : i32
    %c0_i32_0 = arith.constant 0 : i32
    %c0_i32_1 = arith.constant 0 : i32
    return %c0_i32, %c0_i32_0 : i32, i32
  }
  func.func @transform_10(%arg0: i32) -> (i32, i32) {
    %c0_i32 = arith.constant 0 : i32
    %c0_i32_0 = arith.constant 0 : i32
    %c0_i32_1 = arith.constant 0 : i32
    return %c0_i32, %c0_i32_0 : i32, i32
  }
  func.func @transform_11(%arg0: i32) -> i32 {
    %c0_i32 = arith.constant 0 : i32
    %c0_i32_0 = arith.constant 0 : i32
    return %c0_i32 : i32
  }
  func.func @transform_12(%arg0: i32) -> (i32, i32, i32) {
    %c0_i32 = arith.constant 0 : i32
    %c0_i32_0 = arith.constant 0 : i32
    %c0_i32_1 = arith.constant 0 : i32
    %c0_i32_2 = arith.constant 0 : i32
    return %c0_i32, %c0_i32_0, %c0_i32_1 : i32, i32, i32
  }
  func.func @transform_13(%arg0: i32) -> (i32, i32, i32) {
    %c0_i32 = arith.constant 0 : i32
    %c0_i32_0 = arith.constant 0 : i32
    %c0_i32_1 = arith.constant 0 : i32
    return %arg0, %c0_i32, %c0_i32_0 : i32, i32, i32
  }
}

module attributes {stable_mosaic.version = 11 : i64} {
  func.func @_pool_fc_kernel(%arg0: memref<2x32xf32, #tpu.memory_space<vmem>>, %arg1: memref<32x128xf32, #tpu.memory_space<vmem>>, %arg2: memref<128x10xf32, #tpu.memory_space<vmem>>, %arg3: memref<1x10xf32, #tpu.memory_space<vmem>>, %arg4: memref<2x10xf32, #tpu.memory_space<vmem>>) attributes {dimension_semantics = [], scalar_prefetch = 0 : i64, scratch_operands = 0 : i64, tpu.core_type = #tpu.core_type<tc>} {
    %c0 = arith.constant 0 : index
    %c0_0 = arith.constant 0 : index
    %0 = vector.load %arg0[%c0, %c0_0] : memref<2x32xf32, #tpu.memory_space<vmem>>, vector<2x32xf32>
    %c0_1 = arith.constant 0 : index
    %c0_2 = arith.constant 0 : index
    %1 = vector.load %arg1[%c0_1, %c0_2] : memref<32x128xf32, #tpu.memory_space<vmem>>, vector<32x128xf32>
    %cst = arith.constant dense<0.000000e+00> : vector<2x128xf32>
    %2 = tpu.matmul %0, %1, %cst {dimension_numbers = #tpu.dot_dimension_numbers<[1], [0], [0], [1], [0, 0, 1, 1], [], []>} : vector<2x32xf32>, vector<32x128xf32>, vector<2x128xf32> -> vector<2x128xf32>
    %c0_3 = arith.constant 0 : index
    %c0_4 = arith.constant 0 : index
    %3 = vector.load %arg2[%c0_3, %c0_4] : memref<128x10xf32, #tpu.memory_space<vmem>>, vector<128x10xf32>
    %cst_5 = arith.constant dense<0.000000e+00> : vector<2x10xf32>
    %4 = tpu.matmul %2, %3, %cst_5 {dimension_numbers = #tpu.dot_dimension_numbers<[1], [0], [0], [1], [0, 0, 1, 1], [], []>} : vector<2x128xf32>, vector<128x10xf32>, vector<2x10xf32> -> vector<2x10xf32>
    %c0_6 = arith.constant 0 : index
    %c0_7 = arith.constant 0 : index
    %5 = vector.load %arg3[%c0_6, %c0_7] : memref<1x10xf32, #tpu.memory_space<vmem>>, vector<1x10xf32>
    %6 = vector.broadcast %5 : vector<1x10xf32> to vector<2x10xf32>
    %7 = arith.addf %4, %6 : vector<2x10xf32>
    %c0_8 = arith.constant 0 : index
    %c0_9 = arith.constant 0 : index
    %8 = vector.load %arg4[%c0_8, %c0_9] : memref<2x10xf32, #tpu.memory_space<vmem>>, vector<2x10xf32>
    tpu.vector_store %arg4[%c0_8, %c0_9], %7 {strides = array<i32>} : memref<2x10xf32, #tpu.memory_space<vmem>>, vector<2x10xf32>,
    return
  }
}

</mosaic_0001>

<llo_original>
// kernel: fan_forward.6
$region0: #{fan_forward.6}
  #allocation0 [shape = 'u32[]', space=smem, size = 0x4, offset = 0x4, fixed_abs, tag = 'smem constant byte address 0x4 - core index']
  #allocation1 [shape = 'u32[144,128]{1,0:T(1,128)}', space=vmem, size = 0x12000, scoped, tag = 'internal scratch']
  %s0 = inlined_call_operand.vmem [shape: f32[32,24], index: 0, kind: input, shape index: {}]
  %s1 = inlined_call_operand.vmem [shape: f32[24,64], index: 1, kind: input, shape index: {}]
  %s2 = inlined_call_operand.vmem [shape: f32[1,64], index: 2, kind: input, shape index: {}]
  %s3 = inlined_call_operand.vmem [shape: f32[32,64], index: 3, kind: output, shape index: {}]
  %s4 = sld [smem:[#allocation0]]
  $region22: #{fan_forward.6} parent=0
    _
  %s6 = ssub.s32 1, %s4
  %s7 = scalar_select 0, %s6, %s4
  // Predicated region
  $region2: #{fan_forward.6} parent=0 // pred_check
    _
  $region3: #{fan_forward.6} parent=0 // pred_check_branch
    %9 = sbr.rel (0) target = $region5
  $region4: #{fan_forward.6} parent=0 // pred_region
    _
  $region5: #{fan_forward.6} parent=0 // pred_fallthru
    _
  // Predicated region
  $region6: #{fan_forward.6} parent=0 // pred_check
    _
  $region7: #{fan_forward.6} parent=0 // pred_check_branch
    %11 = sbr.rel (0) target = $region9
  $region8: #{fan_forward.6} parent=0 // pred_region
    _
  $region9: #{fan_forward.6} parent=0 // pred_fallthru
    _
  // Predicated region
  $region10: #{fan_forward.6} parent=0 // pred_check
    _
  $region11: #{fan_forward.6} parent=0 // pred_check_branch
    %13 = sbr.rel (0) target = $region13
  $region12: #{fan_forward.6} parent=0 // pred_region
    _
  $region13: #{fan_forward.6} parent=0 // pred_fallthru
    _
  %v14 = vld [vmem:[%s0] sm:$0xff]
  %v15 = vld [vmem:[%s0 + $0x8] sm:$0xff]
  %v16 = vld [vmem:[%s0 + $0x10] sm:$0xff]
  %v17 = vld [vmem:[%s0 + $0x18] sm:$0xff]
  %v18 = vld [vmem:[%s1] sm:$0xff]
  %v19 = vld [vmem:[%s1 + $0x8] sm:$0xff]
  %v20 = vld [vmem:[%s1 + $0x10] sm:$0xff]
  %v21 = vld [vmem:[%s2] sm:$0x1]
  %v23 = vlaneseq
  %v24 = vshrl.u32 %v23, 7
  %v25 = vsub.s32 0, %v24
  %v26 = vrot.slane %v21, %v25
  %vm28 = vcmask 195584
  %v30 = vsel %vm28, %v14, 0
  %v33 = vsel %vm28, %v15, 0
  %v36 = vsel %vm28, %v16, 0
  %v39 = vsel %vm28, %v17, 0
  %41 = vmatprep.subr.mxu0 0.0
  %42 = vmatpush1.msra.mxu0 %v18
  %43 = vmatprep.subr.mxu0 0.0
  %44 = vmatpush1.msra.mxu0 %v19
  %45 = vmatprep.subr.mxu0 0.0
  %46 = vmatpush1.msra.mxu0 %v20
  %47 = vmatprep.subr.mxu0 0.0
  %48 = vmatpush1.msra.mxu0 0.0
  %49 = vmatprep.subr.mxu0 0.0
  %50 = vmatpush1.msra.mxu0 0.0
  %51 = vmatprep.subr.mxu0 0.0
  %52 = vmatpush1.msra.mxu0 0.0
  %53 = vmatprep.subr.mxu0 0.0
  %54 = vmatpush1.msra.mxu0 0.0
  %55 = vmatprep.subr.mxu0 0.0
  %56 = vmatpush1.msra.mxu0 0.0
  %57 = vmatprep.subr.mxu0 0.0
  %58 = vmatpush1.msra.mxu0 0.0
  %59 = vmatprep.subr.mxu0 0.0
  %60 = vmatpush1.msra.mxu0 0.0
  %61 = vmatprep.subr.mxu0 0.0
  %62 = vmatpush1.msra.mxu0 0.0
  %63 = vmatprep.subr.mxu0 0.0
  %64 = vmatpush1.msra.mxu0 0.0
  %65 = vmatprep.subr.mxu0 0.0
  %66 = vmatpush1.msra.mxu0 0.0
  %67 = vmatprep.subr.mxu0 0.0
  %68 = vmatpush1.msra.mxu0 0.0
  %69 = vmatprep.subr.mxu0 0.0
  %70 = vmatpush1.msra.mxu0 0.0
  %71 = vmatprep.subr.mxu0 0.0
  %72 = vmatpush1.msra.mxu0 0.0
  %73 = vmatprep.subr.mxu0 0.0
  %74 = vmatpush1.msra.mxu0 0.0
  %75 = vmatprep.subr.mxu0 0.0
  %76 = vmatpush1.msra.mxu0 0.0
  %77 = vmatprep.subr.mxu0 0.0
  %78 = vmatpush1.msra.mxu0 0.0
  %79 = vmatprep.subr.mxu0 0.0
  %80 = vmatpush1.msra.mxu0 0.0
  %81 = vmatprep.subr.mxu0 0.0
  %82 = vmatpush1.msra.mxu0 0.0
  %83 = vmatprep.subr.mxu0 0.0
  %84 = vmatpush1.msra.mxu0 0.0
  %85 = vmatprep.subr.mxu0 0.0
  %86 = vmatpush1.msra.mxu0 0.0
  %87 = vmatprep.subr.mxu0 0.0
  %88 = vmatpush1.msra.mxu0 0.0
  %89 = vmatprep.subr.mxu0 0.0
  %90 = vmatpush1.msra.mxu0 0.0
  %91 = vmatprep.subr.mxu0 0.0
  %92 = vmatpush1.msra.mxu0 0.0
  %93 = vmatprep.subr.mxu0 0.0
  %94 = vmatpush1.msra.mxu0 0.0
  %95 = vmatprep.subr.mxu0 0.0
  %96 = vmatpush1.msra.mxu0 0.0
  %97 = vmatprep.subr.mxu0 0.0
  %98 = vmatpush1.msra.mxu0 0.0
  %99 = vmatprep.subr.mxu0 0.0
  %100 = vmatpush1.msra.mxu0 0.0
  %101 = vmatprep.subr.mxu0 0.0
  %102 = vmatpush1.msra.mxu0 0.0
  %103 = vmatprep.subr.mxu0 0.0
  %104 = vmatpush1.msra.mxu0 0.0
  %105 = vmatprep.mubr.f32.mxu0 0.0
  %106 = vmatmul.mubr.f32.gmra.mrb[0].mxu0 %v30
  %v107 = vpop.f32.mrb[0].mxu0
  %v108 = vadd.f32 %v26, %v107
  %v109 = vpop.f32.mrb[0].mxu0
  %110 = vmatprep.mubr.f32.mxu0 0.0
  %111 = vmatmul.mubr.f32.gmra.mrb[0].mxu0 %v33
  %v112 = vpop.f32.mrb[0].mxu0
  %v113 = vadd.f32 %v26, %v112
  %v114 = vpop.f32.mrb[0].mxu0
  %115 = vmatprep.mubr.f32.mxu0 0.0
  %116 = vmatmul.mubr.f32.gmra.mrb[0].mxu0 %v36
  %v117 = vpop.f32.mrb[0].mxu0
  %v118 = vadd.f32 %v26, %v117
  %v119 = vpop.f32.mrb[0].mxu0
  %120 = vmatprep.mubr.f32.mxu0 0.0
  %121 = vmatmul.mubr.f32.gmra.mrb[0].mxu0 %v39
  %v122 = vpop.f32.mrb[0].mxu0
  %v123 = vadd.f32 %v26, %v122
  %v124 = vpop.f32.mrb[0].mxu0
  %125 = vdwg.mxu0
  %vm126 = vcmp.ge.f32.partialorder %v108, 0.0
  %vm127 = vcmp.ge.f32.partialorder %v113, 0.0
  %vm128 = vcmp.ge.f32.partialorder %v118, 0.0
  %vm129 = vcmp.ge.f32.partialorder %v123, 0.0
  %v130 = vmul.f32 %v108, 0.1
  %v131 = vmul.f32 %v113, 0.1
  %v132 = vmul.f32 %v118, 0.1
  %v133 = vmul.f32 %v123, 0.1
  %v134 = vsel %vm126, %v108, %v130
  %v135 = vsel %vm127, %v113, %v131
  %v136 = vsel %vm128, %v118, %v132
  %v137 = vsel %vm129, %v123, %v133
  %vm138 = vcmask 523264
  %139 = vst.msk [vmem:[%s3] sm:$0xff] %vm138, %v134
  %140 = vst.msk [vmem:[%s3 + $0x8] sm:$0xff] %vm138, %v135
  %141 = vst.msk [vmem:[%s3 + $0x10] sm:$0xff] %vm138, %v136
  %142 = vst.msk [vmem:[%s3 + $0x18] sm:$0xff] %vm138, %v137
  // Predicated region
  $region14: #{fan_forward.6} parent=0 // pred_check
    _
  $region15: #{fan_forward.6} parent=0 // pred_check_branch
    %144 = sbr.rel (0) target = $region17
  $region16: #{fan_forward.6} parent=0 // pred_region
    _
  $region17: #{fan_forward.6} parent=0 // pred_fallthru
    _
  // Predicated region
  $region18: #{fan_forward.6} parent=0 // pred_check
    _
  $region19: #{fan_forward.6} parent=0 // pred_check_branch
    %146 = sbr.rel (0) target = $region21
  $region20: #{fan_forward.6} parent=0 // pred_region
    _
  $region21: #{fan_forward.6} parent=0 // pred_fallthru
    _

// kernel: fan_forward.7
$region0: #{fan_forward.7}
  #allocation0 [shape = 'u32[]', space=smem, size = 0x4, offset = 0x4, fixed_abs, tag = 'smem constant byte address 0x4 - core index']
  #allocation1 [shape = 'u32[144,128]{1,0:T(1,128)}', space=vmem, size = 0x12000, scoped, tag = 'internal scratch']
  %s0 = inlined_call_operand.vmem [shape: f32[4,8,64], index: 0, kind: input, shape index: {}]
  %s1 = inlined_call_operand.vmem [shape: f32[64,192], index: 1, kind: input, shape index: {}]
  %s2 = inlined_call_operand.vmem [shape: f32[1,192], index: 2, kind: input, shape index: {}]
  %s3 = inlined_call_operand.vmem [shape: f32[64,192], index: 3, kind: input, shape index: {}]
  %s4 = inlined_call_operand.vmem [shape: f32[1,64], index: 4, kind: input, shape index: {}]
  %s5 = inlined_call_operand.vmem [shape: f32[64,64], index: 5, kind: input, shape index: {}]
  %s6 = inlined_call_operand.vmem [shape: f32[1,64], index: 6, kind: input, shape index: {}]
  %s7 = inlined_call_operand.vmem [shape: f32[64,64], index: 7, kind: input, shape index: {}]
  %s8 = inlined_call_operand.vmem [shape: f32[1,64], index: 8, kind: input, shape index: {}]
  %s9 = inlined_call_operand.vmem [shape: f32[64,64], index: 9, kind: input, shape index: {}]
  %s10 = inlined_call_operand.vmem [shape: f32[1,64], index: 10, kind: input, shape index: {}]
  %s11 = inlined_call_operand.vmem [shape: f32[3], index: 11, kind: input, shape index: {}]
  %s12 = inlined_call_operand.vmem [shape: f32[3,8,8], index: 12, kind: input, shape index: {}]
  %s13 = inlined_call_operand.vmem [shape: f32[4,8,64], index: 13, kind: output, shape index: {}]
  %s14 = sld [smem:[#allocation0]]
  $region89: #{fan_forward.7} parent=0
    _
  %s16 = ssub.s32 1, %s14
  %s17 = scalar_select 0, %s16, %s14
  $region1: #{fan_forward.7} parent=0
    #allocation2 [shape = 'u8[512]{0}', space=smem, size = 0x200, scoped, tag = 'input window, operand 11, single buffered']
    #allocation3 [shape = 's32[2]{0}', space=sflag, size = 0x8, scoped, tag = 'scoped memory for fan_forward.7']
    %18 = vsyncpa [#allocation3], 0
    loop: start=0, step=1, limit=6
    $region2: #{fan_forward.7} parent=1 // loop_pre_header
      _
    $region3: #{fan_forward.7} parent=1 // loop_header
      %s20 = sphi 0, %s24
      %p21 = scmp.ge.s32.totalorder %s20, 6
      %s30 = sphi 0, %s32
      %s33 = sphi 0, %s30
      %s34 = sphi 0, %s33
      %s50 = sphi 0, %s34
      %s54 = sphi 0, %s54
      %s56 = sphi 0, %s54
      %s57 = sphi 0, %s56
      %s71 = sphi 0, %s57
      %s75 = sphi 0, %s75
      %s77 = sphi 0, %s75
      %s78 = sphi 0, %s77
      %s92 = sphi 0, %s78
      %s96 = sphi 0, %s96
      %s98 = sphi 0, %s96
      %s99 = sphi 0, %s98
      %s113 = sphi 0, %s99
      %s117 = sphi 0, %s117
      %s119 = sphi 0, %s117
      %s120 = sphi 0, %s119
      %s134 = sphi 0, %s120
      %s138 = sphi 0, %s138
      %s140 = sphi 0, %s138
      %s141 = sphi 0, %s140
      %s155 = sphi 0, %s141
      %s159 = sphi 0, %s159
      %s161 = sphi 0, %s159
      %s162 = sphi 0, %s161
      %s176 = sphi 0, %s162
      %s180 = sphi 0, %s180
      %s182 = sphi 0, %s180
      %s183 = sphi 0, %s182
      %s197 = sphi 0, %s183
      %s201 = sphi 0, %s201
      %s203 = sphi 0, %s201
      %s204 = sphi 0, %s203
      %s218 = sphi 0, %s204
      %s222 = sphi 0, %s222
      %s224 = sphi 0, %s222
      %s225 = sphi 0, %s224
      %s239 = sphi 0, %s225
      %s243 = sphi 0, %s243
      %s245 = sphi 0, %s243
      %s246 = sphi 0, %s245
      %s260 = sphi 0, %s246
      %s264 = sphi 0, %s264
      %s266 = sphi 0, %s264
      %s267 = sphi 0, %s266
      %s281 = sphi 0, %s267
      %s285 = sphi 0, %s285
      %s287 = sphi 0, %s285
      %s288 = sphi 0, %s287
      %s302 = sphi 0, %s288
      %s308 = sphi 0, %s310
      %s311 = sphi 0, %s308
      %s312 = sphi 0, %s311
      %s328 = sphi 0, %s312
    $region4: #{fan_forward.7} parent=1 // loop_header_branch
      %23 = sbr.rel (%p21) target = $region8
    $region5: #{fan_forward.7} parent=1 // loop_body
      %s25 = ssub.s32 %s20, 1
      %s26 = ssub.s32 %s20, 2
      %s27 = sadd.s32 %s20, 1
      %s28 = ssub.s32 %s20, %s27
      %p29 = scmp.eq.s32.totalorder %s28, 0
      %s31 = sadd.s32 %s30, 1
      %s32 = scalar_select %p29, %s30, %s31
      %p35 = pneg %p29
      %p36 = scmp.eq.s32.totalorder %s20, 3
      %p37 = por %p35, %p36
      %p38 = scmp.ne.s32.totalorder %s30, %s33
      %p39 = scmp.eq.s32.totalorder %s20, 0
      %p40 = por %p38, %p39
      %p41 = scmp.ne.s32.totalorder %s30, %s33
      %p42 = scmp.eq.s32.totalorder %s25, 3
      %p43 = por %p41, %p42
      %p44 = scmp.ne.s32.totalorder %s33, %s34
      %p45 = scmp.eq.s32.totalorder %s25, 0
      %p46 = por %p44, %p45
      %p47 = scmp.ne.s32.totalorder %s33, %s34
      %p48 = scmp.eq.s32.totalorder %s26, 3
      %p49 = por %p47, %p48
      %p51 = scmp.ne.s32.totalorder %s34, %s50
      %p52 = scmp.eq.s32.totalorder %s26, 0
      %p53 = por %p51, %p52
      %s55 = sadd.s32 %s54, 1
      %p58 = scmp.eq.s32.totalorder %s20, 3
      %p59 = scmp.ne.s32.totalorder %s54, %s56
      %p60 = scmp.eq.s32.totalorder %s20, 0
      %p61 = por %p59, %p60
      %p62 = scmp.ne.s32.totalorder %s54, %s56
      %p63 = scmp.eq.s32.totalorder %s25, 3
      %p64 = por %p62, %p63
      %p65 = scmp.ne.s32.totalorder %s56, %s57
      %p66 = scmp.eq.s32.totalorder %s25, 0
      %p67 = por %p65, %p66
      %p68 = scmp.ne.s32.totalorder %s56, %s57
      %p69 = scmp.eq.s32.totalorder %s26, 3
      %p70 = por %p68, %p69
      %p72 = scmp.ne.s32.totalorder %s57, %s71
      %p73 = scmp.eq.s32.totalorder %s26, 0
      %p74 = por %p72, %p73
      %s76 = sadd.s32 %s75, 1
      %p79 = scmp.eq.s32.totalorder %s20, 3
      %p80 = scmp.ne.s32.totalorder %s75, %s77
      %p81 = scmp.eq.s32.totalorder %s20, 0
      %p82 = por %p80, %p81
      %p83 = scmp.ne.s32.totalorder %s75, %s77
      %p84 = scmp.eq.s32.totalorder %s25, 3
      %p85 = por %p83, %p84
      %p86 = scmp.ne.s32.totalorder %s77, %s78
      %p87 = scmp.eq.s32.totalorder %s25, 0
      %p88 = por %p86, %p87
      %p89 = scmp.ne.s32.totalorder %s77, %s78
      %p90 = scmp.eq.s32.totalorder %s26, 3
      %p91 = por %p89, %p90
      %p93 = scmp.ne.s32.totalorder %s78, %s92
      %p94 = scmp.eq.s32.totalorder %s26, 0
      %p95 = por %p93, %p94
      %s97 = sadd.s32 %s96, 1
      %p100 = scmp.eq.s32.totalorder %s20, 3
      %p101 = scmp.ne.s32.totalorder %s96, %s98
      %p102 = scmp.eq.s32.totalorder %s20, 0
      %p103 = por %p101, %p102
      %p104 = scmp.ne.s32.totalorder %s96, %s98
      %p105 = scmp.eq.s32.totalorder %s25, 3
      %p106 = por %p104, %p105
      %p107 = scmp.ne.s32.totalorder %s98, %s99
      %p108 = scmp.eq.s32.totalorder %s25, 0
      %p109 = por %p107, %p108
      %p110 = scmp.ne.s32.totalorder %s98, %s99
      %p111 = scmp.eq.s32.totalorder %s26, 3
      %p112 = por %p110, %p111
      %p114 = scmp.ne.s32.totalorder %s99, %s113
      %p115 = scmp.eq.s32.totalorder %s26, 0
      %p116 = por %p114, %p115
      %s118 = sadd.s32 %s117, 1
      %p121 = scmp.eq.s32.totalorder %s20, 3
      %p122 = scmp.ne.s32.totalorder %s117, %s119
      %p123 = scmp.eq.s32.totalorder %s20, 0
      %p124 = por %p122, %p123
      %p125 = scmp.ne.s32.totalorder %s117, %s119
      %p126 = scmp.eq.s32.totalorder %s25, 3
      %p127 = por %p125, %p126
      %p128 = scmp.ne.s32.totalorder %s119, %s120
      %p129 = scmp.eq.s32.totalorder %s25, 0
      %p130 = por %p128, %p129
      %p131 = scmp.ne.s32.totalorder %s119, %s120
      %p132 = scmp.eq.s32.totalorder %s26, 3
      %p133 = por %p131, %p132
      %p135 = scmp.ne.s32.totalorder %s120, %s134
      %p136 = scmp.eq.s32.totalorder %s26, 0
      %p137 = por %p135, %p136
      %s139 = sadd.s32 %s138, 1
      %p142 = scmp.eq.s32.totalorder %s20, 3
      %p143 = scmp.ne.s32.totalorder %s138, %s140
      %p144 = scmp.eq.s32.totalorder %s20, 0
      %p145 = por %p143, %p144
      %p146 = scmp.ne.s32.totalorder %s138, %s140
      %p147 = scmp.eq.s32.totalorder %s25, 3
      %p148 = por %p146, %p147
      %p149 = scmp.ne.s32.totalorder %s140, %s141
      %p150 = scmp.eq.s32.totalorder %s25, 0
      %p151 = por %p149, %p150
      %p152 = scmp.ne.s32.totalorder %s140, %s141
      %p153 = scmp.eq.s32.totalorder %s26, 3
      %p154 = por %p152, %p153
      %p156 = scmp.ne.s32.totalorder %s141, %s155
      %p157 = scmp.eq.s32.totalorder %s26, 0
      %p158 = por %p156, %p157
      %s160 = sadd.s32 %s159, 1
      %p163 = scmp.eq.s32.totalorder %s20, 3
      %p164 = scmp.ne.s32.totalorder %s159, %s161
      %p165 = scmp.eq.s32.totalorder %s20, 0
      %p166 = por %p164, %p165
      %p167 = scmp.ne.s32.totalorder %s159, %s161
      %p168 = scmp.eq.s32.totalorder %s25, 3
      %p169 = por %p167, %p168
      %p170 = scmp.ne.s32.totalorder %s161, %s162
      %p171 = scmp.eq.s32.totalorder %s25, 0
      %p172 = por %p170, %p171
      %p173 = scmp.ne.s32.totalorder %s161, %s162
      %p174 = scmp.eq.s32.totalorder %s26, 3
      %p175 = por %p173, %p174
      %p177 = scmp.ne.s32.totalorder %s162, %s176
      %p178 = scmp.eq.s32.totalorder %s26, 0
      %p179 = por %p177, %p178
      %s181 = sadd.s32 %s180, 1
      %p184 = scmp.eq.s32.totalorder %s20, 3
      %p185 = scmp.ne.s32.totalorder %s180, %s182
      %p186 = scmp.eq.s32.totalorder %s20, 0
      %p187 = por %p185, %p186
      %p188 = scmp.ne.s32.totalorder %s180, %s182
      %p189 = scmp.eq.s32.totalorder %s25, 3
      %p190 = por %p188, %p189
      %p191 = scmp.ne.s32.totalorder %s182, %s183
      %p192 = scmp.eq.s32.totalorder %s25, 0
      %p193 = por %p191, %p192
      %p194 = scmp.ne.s32.totalorder %s182, %s183
      %p195 = scmp.eq.s32.totalorder %s26, 3
      %p196 = por %p194, %p195
      %p198 = scmp.ne.s32.totalorder %s183, %s197
      %p199 = scmp.eq.s32.totalorder %s26, 0
      %p200 = por %p198, %p199
      %s202 = sadd.s32 %s201, 1
      %p205 = scmp.eq.s32.totalorder %s20, 3
      %p206 = scmp.ne.s32.totalorder %s201, %s203
      %p207 = scmp.eq.s32.totalorder %s20, 0
      %p208 = por %p206, %p207
      %p209 = scmp.ne.s32.totalorder %s201, %s203
      %p210 = scmp.eq.s32.totalorder %s25, 3
      %p211 = por %p209, %p210
      %p212 = scmp.ne.s32.totalorder %s203, %s204
      %p213 = scmp.eq.s32.totalorder %s25, 0
      %p214 = por %p212, %p213
      %p215 = scmp.ne.s32.totalorder %s203, %s204
      %p216 = scmp.eq.s32.totalorder %s26, 3
      %p217 = por %p215, %p216
      %p219 = scmp.ne.s32.totalorder %s204, %s218
      %p220 = scmp.eq.s32.totalorder %s26, 0
      %p221 = por %p219, %p220
      %s223 = sadd.s32 %s222, 1
      %p226 = scmp.eq.s32.totalorder %s20, 3
      %p227 = scmp.ne.s32.totalorder %s222, %s224
      %p228 = scmp.eq.s32.totalorder %s20, 0
      %p229 = por %p227, %p228
      %p230 = scmp.ne.s32.totalorder %s222, %s224
      %p231 = scmp.eq.s32.totalorder %s25, 3
      %p232 = por %p230, %p231
      %p233 = scmp.ne.s32.totalorder %s224, %s225
      %p234 = scmp.eq.s32.totalorder %s25, 0
      %p235 = por %p233, %p234
      %p236 = scmp.ne.s32.totalorder %s224, %s225
      %p237 = scmp.eq.s32.totalorder %s26, 3
      %p238 = por %p236, %p237
      %p240 = scmp.ne.s32.totalorder %s225, %s239
      %p241 = scmp.eq.s32.totalorder %s26, 0
      %p242 = por %p240, %p241
      %s244 = sadd.s32 %s243, 1
      %p247 = scmp.eq.s32.totalorder %s20, 3
      %p248 = scmp.ne.s32.totalorder %s243, %s245
      %p249 = scmp.eq.s32.totalorder %s20, 0
      %p250 = por %p248, %p249
      %p251 = scmp.ne.s32.totalorder %s243, %s245
      %p252 = scmp.eq.s32.totalorder %s25, 3
      %p253 = por %p251, %p252
      %p254 = scmp.ne.s32.totalorder %s245, %s246
      %p255 = scmp.eq.s32.totalorder %s25, 0
      %p256 = por %p254, %p255
      %p257 = scmp.ne.s32.totalorder %s245, %s246
      %p258 = scmp.eq.s32.totalorder %s26, 3
      %p259 = por %p257, %p258
      %p261 = scmp.ne.s32.totalorder %s246, %s260
      %p262 = scmp.eq.s32.totalorder %s26, 0
      %p263 = por %p261, %p262
      %s265 = sadd.s32 %s264, 1
      %p268 = scmp.eq.s32.totalorder %s20, 3
      %p269 = scmp.ne.s32.totalorder %s264, %s266
      %p270 = scmp.eq.s32.totalorder %s20, 0
      %p271 = por %p269, %p270
      %p272 = scmp.ne.s32.totalorder %s264, %s266
      %p273 = scmp.eq.s32.totalorder %s25, 3
      %p274 = por %p272, %p273
      %p275 = scmp.ne.s32.totalorder %s266, %s267
      %p276 = scmp.eq.s32.totalorder %s25, 0
      %p277 = por %p275, %p276
      %p278 = scmp.ne.s32.totalorder %s266, %s267
      %p279 = scmp.eq.s32.totalorder %s26, 3
      %p280 = por %p278, %p279
      %p282 = scmp.ne.s32.totalorder %s267, %s281
      %p283 = scmp.eq.s32.totalorder %s26, 0
      %p284 = por %p282, %p283
      %s286 = sadd.s32 %s285, 1
      %p289 = scmp.eq.s32.totalorder %s20, 3
      %p290 = scmp.ne.s32.totalorder %s285, %s287
      %p291 = scmp.eq.s32.totalorder %s20, 0
      %p292 = por %p290, %p291
      %p293 = scmp.ne.s32.totalorder %s285, %s287
      %p294 = scmp.eq.s32.totalorder %s25, 3
      %p295 = por %p293, %p294
      %p296 = scmp.ne.s32.totalorder %s287, %s288
      %p297 = scmp.eq.s32.totalorder %s25, 0
      %p298 = por %p296, %p297
      %p299 = scmp.ne.s32.totalorder %s287, %s288
      %p300 = scmp.eq.s32.totalorder %s26, 3
      %p301 = por %p299, %p300
      %p303 = scmp.ne.s32.totalorder %s288, %s302
      %p304 = scmp.eq.s32.totalorder %s26, 0
      %p305 = por %p303, %p304
      %s306 = ssub.s32 %s20, %s27
      %p307 = scmp.eq.s32.totalorder %s306, 0
      %s309 = sadd.s32 %s308, 1
      %s310 = scalar_select %p307, %s308, %s309
      %p313 = pneg %p307
      %p314 = scmp.eq.s32.totalorder %s20, 3
      %p315 = por %p313, %p314
      %p316 = scmp.ne.s32.totalorder %s308, %s311
      %p317 = scmp.eq.s32.totalorder %s20, 0
      %p318 = por %p316, %p317
      %p319 = scmp.ne.s32.totalorder %s308, %s311
      %p320 = scmp.eq.s32.totalorder %s25, 3
      %p321 = por %p319, %p320
      %p322 = scmp.ne.s32.totalorder %s311, %s312
      %p323 = scmp.eq.s32.totalorder %s25, 0
      %p324 = por %p322, %p323
      %p325 = scmp.ne.s32.totalorder %s311, %s312
      %p326 = scmp.eq.s32.totalorder %s26, 3
      %p327 = por %p325, %p326
      %p329 = scmp.ne.s32.totalorder %s312, %s328
      %p330 = scmp.eq.s32.totalorder %s26, 0
      %p331 = por %p329, %p330
      %p332 = scmp.le.s32.totalorder 1, %s20
      %p333 = scmp.lt.s32.totalorder %s20, 5
      %p334 = pnand %p332, %p333
      %p335 = pneg %p334
      // Predicated region
      $region9: #{fan_forward.7} parent=5 // pred_check
        _
      $region10: #{fan_forward.7} parent=5 // pred_check_branch
        %337 = sbr.rel (%p334) target = $region12
      $region11: #{fan_forward.7} parent=5 // pred_region
        %s338 = ssub.s32 %s20, 1
        // Predicated region
        $region13: #{fan_forward.7} parent=11 // pred_check
          %p339 = pneg %p67
        $region14: #{fan_forward.7} parent=11 // pred_check_branch
          %341 = sbr.rel (%p339) target = $region16
        $region15: #{fan_forward.7} parent=11 // pred_region
          _
        $region16: #{fan_forward.7} parent=11 // pred_fallthru
          _
        // Predicated region
        $region17: #{fan_forward.7} parent=11 // pred_check
          %p342 = pneg %p88
        $region18: #{fan_forward.7} parent=11 // pred_check_branch
          %344 = sbr.rel (%p342) target = $region20
        $region19: #{fan_forward.7} parent=11 // pred_region
          _
        $region20: #{fan_forward.7} parent=11 // pred_fallthru
          _
        // Predicated region
        $region21: #{fan_forward.7} parent=11 // pred_check
          %p345 = pneg %p109
        $region22: #{fan_forward.7} parent=11 // pred_check_branch
          %347 = sbr.rel (%p345) target = $region24
        $region23: #{fan_forward.7} parent=11 // pred_region
          _
        $region24: #{fan_forward.7} parent=11 // pred_fallthru
          _
        // Predicated region
        $region25: #{fan_forward.7} parent=11 // pred_check
          %p348 = pneg %p130
        $region26: #{fan_forward.7} parent=11 // pred_check_branch
          %350 = sbr.rel (%p348) target = $region28
        $region27: #{fan_forward.7} parent=11 // pred_region
          _
        $region28: #{fan_forward.7} parent=11 // pred_fallthru
          _
        // Predicated region
        $region29: #{fan_forward.7} parent=11 // pred_check
          %p351 = pneg %p151
        $region30: #{fan_forward.7} parent=11 // pred_check_branch
          %353 = sbr.rel (%p351) target = $region32
        $region31: #{fan_forward.7} parent=11 // pred_region
          _
        $region32: #{fan_forward.7} parent=11 // pred_fallthru
          _
        // Predicated region
        $region33: #{fan_forward.7} parent=11 // pred_check
          %p354 = pneg %p172
        $region34: #{fan_forward.7} parent=11 // pred_check_branch
          %356 = sbr.rel (%p354) target = $region36
        $region35: #{fan_forward.7} parent=11 // pred_region
          _
        $region36: #{fan_forward.7} parent=11 // pred_fallthru
          _
        // Predicated region
        $region37: #{fan_forward.7} parent=11 // pred_check
          %p357 = pneg %p193
        $region38: #{fan_forward.7} parent=11 // pred_check_branch
          %359 = sbr.rel (%p357) target = $region40
        $region39: #{fan_forward.7} parent=11 // pred_region
          _
        $region40: #{fan_forward.7} parent=11 // pred_fallthru
          _
        // Predicated region
        $region41: #{fan_forward.7} parent=11 // pred_check
          %p360 = pneg %p214
        $region42: #{fan_forward.7} parent=11 // pred_check_branch
          %362 = sbr.rel (%p360) target = $region44
        $region43: #{fan_forward.7} parent=11 // pred_region
          _
        $region44: #{fan_forward.7} parent=11 // pred_fallthru
          _
        // Predicated region
        $region45: #{fan_forward.7} parent=11 // pred_check
          %p363 = pneg %p235
        $region46: #{fan_forward.7} parent=11 // pred_check_branch
          %365 = sbr.rel (%p363) target = $region48
        $region47: #{fan_forward.7} parent=11 // pred_region
          _
        $region48: #{fan_forward.7} parent=11 // pred_fallthru
          _
        // Predicated region
        $region49: #{fan_forward.7} parent=11 // pred_check
          %p366 = pneg %p256
        $region50: #{fan_forward.7} parent=11 // pred_check_branch
          %368 = sbr.rel (%p366) target = $region52
        $region51: #{fan_forward.7} parent=11 // pred_region
          _
        $region52: #{fan_forward.7} parent=11 // pred_fallthru
          _
        // Predicated region
        $region53: #{fan_forward.7} parent=11 // pred_check
          %p369 = pneg %p277
        $region54: #{fan_forward.7} parent=11 // pred_check_branch
          %371 = sbr.rel (%p369) target = $region56
        $region55: #{fan_forward.7} parent=11 // pred_region
          %s373 = ssub.s32 16, 16
          %374 = vsyncadd [#allocation3], %s373
          %s376 = sshll.u32 %s11, 4
          %s377 = int_to_ptr.vmem [resolvable:$true] %s376
          %379 = dma.vmem_to_smem %s377, 16, [#allocation2], [#allocation3]
        $region56: #{fan_forward.7} parent=11 // pred_fallthru
          _
        // Predicated region
        $region57: #{fan_forward.7} parent=11 // pred_check
          %p380 = pneg %p298
        $region58: #{fan_forward.7} parent=11 // pred_check_branch
          %382 = sbr.rel (%p380) target = $region60
        $region59: #{fan_forward.7} parent=11 // pred_region
          _
        $region60: #{fan_forward.7} parent=11 // pred_fallthru
          _
      $region12: #{fan_forward.7} parent=5 // pred_fallthru
        _
      %p383 = scmp.lt.s32.totalorder %s20, 4
      // Predicated region
      $region61: #{fan_forward.7} parent=5 // pred_check
        %p384 = pneg %p383
      $region62: #{fan_forward.7} parent=5 // pred_check_branch
        %386 = sbr.rel (%p384) target = $region64
      $region63: #{fan_forward.7} parent=5 // pred_region
        // Predicated region
        $region65: #{fan_forward.7} parent=63 // pred_check
          %p387 = pneg %p40
        $region66: #{fan_forward.7} parent=63 // pred_check_branch
          %389 = sbr.rel (%p387) target = $region68
        $region67: #{fan_forward.7} parent=63 // pred_region
          %p390 = scmp.lt.s32.totalorder %s20, 3
          %s391 = scalar_select %p390, %s20, 3
          %s392 = smul.addr %s391, 8
          %s393 = scalar_lea.vmem %s0, %s392
        $region68: #{fan_forward.7} parent=63 // pred_fallthru
          _
      $region64: #{fan_forward.7} parent=5 // pred_fallthru
        _
      %p394 = scmp.le.s32.totalorder 1, %s20
      %p395 = scmp.lt.s32.totalorder %s20, 5
      %p396 = pnand %p394, %p395
      %p397 = pneg %p396
      // Predicated region
      $region69: #{fan_forward.7} parent=5 // pred_check
        _
      $region70: #{fan_forward.7} parent=5 // pred_check_branch
        %399 = sbr.rel (%p396) target = $region72
      $region71: #{fan_forward.7} parent=5 // pred_region
        %s400 = ssub.s32 %s20, 1
        // Predicated region
        $region73: #{fan_forward.7} parent=71 // pred_check
          %p401 = pneg %p277
        $region74: #{fan_forward.7} parent=71 // pred_check_branch
          %403 = sbr.rel (%p401) target = $region76
        $region75: #{fan_forward.7} parent=71 // pred_region
          %404 = dma.done [#allocation3], 16
        $region76: #{fan_forward.7} parent=71 // pred_fallthru
          _
        %405 = sfence
        %p406 = scmp.lt.s32.totalorder %s25, 3
        %s407 = scalar_select %p406, %s25, 3
        %s408 = smul.addr %s407, 8
        %s409 = scalar_lea.vmem %s0, %s408
        %p410 = pneg %p46
        %p411 = pneg %p43
        %p412 = pneg %p67
        %p413 = pneg %p64
        %p414 = pneg %p88
        %p415 = pneg %p85
        %p416 = pneg %p109
        %p417 = pneg %p106
        %p418 = pneg %p130
        %p419 = pneg %p127
        %p420 = pneg %p151
        %p421 = pneg %p148
        %p422 = pneg %p172
        %p423 = pneg %p169
        %p424 = pneg %p193
        %p425 = pneg %p190
        %p426 = pneg %p214
        %p427 = pneg %p211
        %p428 = pneg %p235
        %p429 = pneg %p232
        %p430 = pneg %p256
        %p431 = pneg %p253
        %p432 = pneg %p277
        %p433 = pneg %p274
        %p434 = pneg %p298
        %p435 = pneg %p295
        %p436 = pneg %p324
        %p437 = pneg %p321
        %p438 = scmp.lt.s32.totalorder %s25, 3
        %s439 = scalar_select %p438, %s25, 3
        %s440 = smul.addr %s439, 8
        %s441 = scalar_lea.vmem %s13, %s440
        %p442 = scmp.lt.s32.totalorder %s25, 3
        %s443 = scalar_select %p442, %s25, 3
        %s444 = smul.addr %s443, 8
        %s445 = scalar_lea.vmem %s0, %s444
        %p446 = scmp.lt.s32.totalorder %s25, 3
        %s447 = scalar_select %p446, %s25, 3
        %s448 = smul.addr %s447, 8
        %s449 = scalar_lea.vmem %s13, %s448
        %v450 = vld [vmem:[%s445] sm:$0xff]
        %v451 = vld [vmem:[%s1] sm:$0xff]
        %v452 = vld [vmem:[%s1 + $0x8] sm:$0xff]
        %v453 = vld [vmem:[%s1 + $0x10] sm:$0xff]
        %v454 = vld [vmem:[%s1 + $0x18] sm:$0xff]
        %v455 = vld [vmem:[%s1 + $0x20] sm:$0xff]
        %v456 = vld [vmem:[%s1 + $0x28] sm:$0xff]
        %v457 = vld [vmem:[%s1 + $0x30] sm:$0xff]
        %v458 = vld [vmem:[%s1 + $0x38] sm:$0xff]
        %v459 = vld [vmem:[%s1 + $0x40] sm:$0xff]
        %v460 = vld [vmem:[%s1 + $0x48] sm:$0xff]
        %v461 = vld [vmem:[%s1 + $0x50] sm:$0xff]
        %v462 = vld [vmem:[%s1 + $0x58] sm:$0xff]
        %v463 = vld [vmem:[%s1 + $0x60] sm:$0xff]
        %v464 = vld [vmem:[%s1 + $0x68] sm:$0xff]
        %v465 = vld [vmem:[%s1 + $0x70] sm:$0xff]
        %v466 = vld [vmem:[%s1 + $0x78] sm:$0xff]
        %v467 = vld [vmem:[%s2] sm:$0x3]
        %v469 = vlaneseq
        %v470 = vshrl.u32 %v469, 7
        %v471 = vsub.s32 0, %v470
        %v472 = vrot.slane %v467, %v471
        %v473 = vlaneseq
        %v474 = vshrl.u32 %v473, 7
        %v475 = vsub.s32 1, %v474
        %v476 = vrot.slane %v467, %v475
        %vm479 = vcmask 523264
        %v481 = vsel %vm479, %v450, 0
        %483 = vmatprep.subr.mxu0 %v452
        %484 = vmatpush1.msra.mxu0 %v451
        %485 = vmatprep.subr.mxu0 %v454
        %486 = vmatpush1.msra.mxu0 %v453
        %487 = vmatprep.subr.mxu0 %v456
        %488 = vmatpush1.msra.mxu0 %v455
        %489 = vmatprep.subr.mxu0 %v458
        %490 = vmatpush1.msra.mxu0 %v457
        %491 = vmatprep.subr.mxu0 %v460
        %492 = vmatpush1.msra.mxu0 %v459
        %493 = vmatprep.subr.mxu0 %v462
        %494 = vmatpush1.msra.mxu0 %v461
        %495 = vmatprep.subr.mxu0 %v464
        %496 = vmatpush1.msra.mxu0 %v463
        %497 = vmatprep.subr.mxu0 %v466
        %498 = vmatpush1.msra.mxu0 %v465
        %499 = vmatprep.subr.mxu0 0.0
        %500 = vmatpush1.msra.mxu0 0.0
        %501 = vmatprep.subr.mxu0 0.0
        %502 = vmatpush1.msra.mxu0 0.0
        %503 = vmatprep.subr.mxu0 0.0
        %504 = vmatpush1.msra.mxu0 0.0
        %505 = vmatprep.subr.mxu0 0.0
        %506 = vmatpush1.msra.mxu0 0.0
        %507 = vmatprep.subr.mxu0 0.0
        %508 = vmatpush1.msra.mxu0 0.0
        %509 = vmatprep.subr.mxu0 0.0
        %510 = vmatpush1.msra.mxu0 0.0
        %511 = vmatprep.subr.mxu0 0.0
        %512 = vmatpush1.msra.mxu0 0.0
        %513 = vmatprep.subr.mxu0 0.0
        %514 = vmatpush1.msra.mxu0 0.0
        %515 = vmatprep.subr.mxu0 0.0
        %516 = vmatpush1.msra.mxu0 0.0
        %517 = vmatprep.subr.mxu0 0.0
        %518 = vmatpush1.msra.mxu0 0.0
        %519 = vmatprep.subr.mxu0 0.0
        %520 = vmatpush1.msra.mxu0 0.0
        %521 = vmatprep.subr.mxu0 0.0
        %522 = vmatpush1.msra.mxu0 0.0
        %523 = vmatprep.subr.mxu0 0.0
        %524 = vmatpush1.msra.mxu0 0.0
        %525 = vmatprep.subr.mxu0 0.0
        %526 = vmatpush1.msra.mxu0 0.0
        %527 = vmatprep.subr.mxu0 0.0
        %528 = vmatpush1.msra.mxu0 0.0
        %529 = vmatprep.subr.mxu0 0.0
        %530 = vmatpush1.msra.mxu0 0.0
        %531 = vmatprep.subr.mxu0 0.0
        %532 = vmatpush1.msra.mxu0 0.0
        %533 = vmatprep.subr.mxu0 0.0
        %534 = vmatpush1.msra.mxu0 0.0
        %535 = vmatprep.subr.mxu0 0.0
        %536 = vmatpush1.msra.mxu0 0.0
        %537 = vmatprep.subr.mxu0 0.0
        %538 = vmatpush1.msra.mxu0 0.0
        %539 = vmatprep.subr.mxu0 0.0
        %540 = vmatpush1.msra.mxu0 0.0
        %541 = vmatprep.subr.mxu0 0.0
        %542 = vmatpush1.msra.mxu0 0.0
        %543 = vmatprep.subr.mxu0 0.0
        %544 = vmatpush1.msra.mxu0 0.0
        %545 = vmatprep.subr.mxu0 0.0
        %546 = vmatpush1.msra.mxu0 0.0
        %547 = vmatprep.mubr.f32.mxu0 0.0
        %548 = vmatmul.mubr.f32.gmra.mrb[0].mxu0 %v481
        %v549 = vpop.f32.mrb[0].mxu0
        %v550 = vadd.f32 %v472, %v549
        %v551 = vpop.f32.mrb[0].mxu0
        %v552 = vadd.f32 %v476, %v551
        %553 = vdwg.mxu0
        %v554 = vld [vmem:[%s3] sm:$0xff]
        %v555 = vld [vmem:[%s3 + $0x8] sm:$0xff]
        %v556 = vld [vmem:[%s3 + $0x10] sm:$0xff]
        %v557 = vld [vmem:[%s3 + $0x18] sm:$0xff]
        %v558 = vld [vmem:[%s3 + $0x20] sm:$0xff]
        %v559 = vld [vmem:[%s3 + $0x28] sm:$0xff]
        %v560 = vld [vmem:[%s3 + $0x30] sm:$0xff]
        %v561 = vld [vmem:[%s3 + $0x38] sm:$0xff]
        %v562 = vld [vmem:[%s3 + $0x40] sm:$0xff]
        %v563 = vld [vmem:[%s3 + $0x48] sm:$0xff]
        %v564 = vld [vmem:[%s3 + $0x50] sm:$0xff]
        %v565 = vld [vmem:[%s3 + $0x58] sm:$0xff]
        %v566 = vld [vmem:[%s3 + $0x60] sm:$0xff]
        %v567 = vld [vmem:[%s3 + $0x68] sm:$0xff]
        %v568 = vld [vmem:[%s3 + $0x70] sm:$0xff]
        %v569 = vld [vmem:[%s3 + $0x78] sm:$0xff]
        %570 = vmatprep.subr.mxu0 %v555
        %571 = vmatpush1.msra.mxu0 %v554
        %572 = vmatprep.subr.mxu0 %v557
        %573 = vmatpush1.msra.mxu0 %v556
        %574 = vmatprep.subr.mxu0 %v559
        %575 = vmatpush1.msra.mxu0 %v558
        %576 = vmatprep.subr.mxu0 %v561
        %577 = vmatpush1.msra.mxu0 %v560
        %578 = vmatprep.subr.mxu0 %v563
        %579 = vmatpush1.msra.mxu0 %v562
        %580 = vmatprep.subr.mxu0 %v565
        %581 = vmatpush1.msra.mxu0 %v564
        %582 = vmatprep.subr.mxu0 %v567
        %583 = vmatpush1.msra.mxu0 %v566
        %584 = vmatprep.subr.mxu0 %v569
        %585 = vmatpush1.msra.mxu0 %v568
        %586 = vmatprep.subr.mxu0 0.0
        %587 = vmatpush1.msra.mxu0 0.0
        %588 = vmatprep.subr.mxu0 0.0
        %589 = vmatpush1.msra.mxu0 0.0
        %590 = vmatprep.subr.mxu0 0.0
        %591 = vmatpush1.msra.mxu0 0.0
        %592 = vmatprep.subr.mxu0 0.0
        %593 = vmatpush1.msra.mxu0 0.0
        %594 = vmatprep.subr.mxu0 0.0
        %595 = vmatpush1.msra.mxu0 0.0
        %596 = vmatprep.subr.mxu0 0.0
        %597 = vmatpush1.msra.mxu0 0.0
        %598 = vmatprep.subr.mxu0 0.0
        %599 = vmatpush1.msra.mxu0 0.0
        %600 = vmatprep.subr.mxu0 0.0
        %601 = vmatpush1.msra.mxu0 0.0
        %602 = vmatprep.subr.mxu0 0.0
        %603 = vmatpush1.msra.mxu0 0.0
        %604 = vmatprep.subr.mxu0 0.0
        %605 = vmatpush1.msra.mxu0 0.0
        %606 = vmatprep.subr.mxu0 0.0
        %607 = vmatpush1.msra.mxu0 0.0
        %608 = vmatprep.subr.mxu0 0.0
        %609 = vmatpush1.msra.mxu0 0.0
        %610 = vmatprep.subr.mxu0 0.0
        %611 = vmatpush1.msra.mxu0 0.0
        %612 = vmatprep.subr.mxu0 0.0
        %613 = vmatpush1.msra.mxu0 0.0
        %614 = vmatprep.subr.mxu0 0.0
        %615 = vmatpush1.msra.mxu0 0.0
        %616 = vmatprep.subr.mxu0 0.0
        %617 = vmatpush1.msra.mxu0 0.0
        %618 = vmatprep.subr.mxu0 0.0
        %619 = vmatpush1.msra.mxu0 0.0
        %620 = vmatprep.subr.mxu0 0.0
        %621 = vmatpush1.msra.mxu0 0.0
        %622 = vmatprep.subr.mxu0 0.0
        %623 = vmatpush1.msra.mxu0 0.0
        %624 = vmatprep.subr.mxu0 0.0
        %625 = vmatpush1.msra.mxu0 0.0
        %626 = vmatprep.subr.mxu0 0.0
        %627 = vmatpush1.msra.mxu0 0.0
        %628 = vmatprep.subr.mxu0 0.0
        %629 = vmatpush1.msra.mxu0 0.0
        %630 = vmatprep.subr.mxu0 0.0
        %631 = vmatpush1.msra.mxu0 0.0
        %632 = vmatprep.subr.mxu0 0.0
        %633 = vmatpush1.msra.mxu0 0.0
        %634 = vmatprep.mubr.f32.mxu0 0.0
        %635 = vmatmul.mubr.f32.gmra.mrb[0].mxu0 %v481
        %v636 = vpop.f32.mrb[0].mxu0
        %v637 = vadd.f32 0.0, %v636
        %v638 = vpop.f32.mrb[0].mxu0
        %v639 = vadd.f32 0.0, %v638
        %640 = vdwg.mxu0
        %642 = vrot.lane.b32.xlu0 %v550, 32
        %v643 = vpop.permute.xlu0 %642
        %vm644 = vcmask 261120
        %v645 = vsel %vm644, %v643, 0
        %v647 = vsel %vm644, %v550, 0
        %649 = vmatprep.subr.mxu0 0.0
        %650 = vmatpush1.xpose.msra.mxu0 %v647
        %651 = vmatprep.subr.mxu0 0.0
        %652 = vmatpush1.xpose.msra.mxu0 0.0
        %653 = vmatprep.subr.mxu0 0.0
        %654 = vmatpush1.xpose.msra.mxu0 0.0
        %655 = vmatprep.subr.mxu0 0.0
        %656 = vmatpush1.xpose.msra.mxu0 0.0
        %657 = vmatprep.subr.mxu0 0.0
        %658 = vmatpush1.xpose.msra.mxu0 0.0
        %659 = vmatprep.subr.mxu0 0.0
        %660 = vmatpush1.xpose.msra.mxu0 0.0
        %661 = vmatprep.subr.mxu0 0.0
        %662 = vmatpush1.xpose.msra.mxu0 0.0
        %663 = vmatprep.subr.mxu0 0.0
        %664 = vmatpush1.xpose.msra.mxu0 0.0
        %665 = vmatprep.subr.mxu0 0.0
        %666 = vmatpush1.xpose.msra.mxu0 0.0
        %667 = vmatprep.subr.mxu0 0.0
        %668 = vmatpush1.xpose.msra.mxu0 0.0
        %669 = vmatprep.subr.mxu0 0.0
        %670 = vmatpush1.xpose.msra.mxu0 0.0
        %671 = vmatprep.subr.mxu0 0.0
        %672 = vmatpush1.xpose.msra.mxu0 0.0
        %673 = vmatprep.subr.mxu0 0.0
        %674 = vmatpush1.xpose.msra.mxu0 0.0
        %675 = vmatprep.subr.mxu0 0.0
        %676 = vmatpush1.xpose.msra.mxu0 0.0
        %677 = vmatprep.subr.mxu0 0.0
        %678 = vmatpush1.xpose.msra.mxu0 0.0
        %679 = vmatprep.subr.mxu0 0.0
        %680 = vmatpush1.xpose.msra.mxu0 0.0
        %681 = vmatprep.subr.mxu0 0.0
        %682 = vmatpush1.xpose.msra.mxu0 0.0
        %683 = vmatprep.subr.mxu0 0.0
        %684 = vmatpush1.xpose.msra.mxu0 0.0
        %685 = vmatprep.subr.mxu0 0.0
        %686 = vmatpush1.xpose.msra.mxu0 0.0
        %687 = vmatprep.subr.mxu0 0.0
        %688 = vmatpush1.xpose.msra.mxu0 0.0
        %689 = vmatprep.subr.mxu0 0.0
        %690 = vmatpush1.xpose.msra.mxu0 0.0
        %691 = vmatprep.subr.mxu0 0.0
        %692 = vmatpush1.xpose.msra.mxu0 0.0
        %693 = vmatprep.subr.mxu0 0.0
        %694 = vmatpush1.xpose.msra.mxu0 0.0
        %695 = vmatprep.subr.mxu0 0.0
        %696 = vmatpush1.xpose.msra.mxu0 0.0
        %697 = vmatprep.subr.mxu0 0.0
        %698 = vmatpush1.xpose.msra.mxu0 0.0
        %699 = vmatprep.subr.mxu0 0.0
        %700 = vmatpush1.xpose.msra.mxu0 0.0
        %701 = vmatprep.subr.mxu0 0.0
        %702 = vmatpush1.xpose.msra.mxu0 0.0
        %703 = vmatprep.subr.mxu0 0.0
        %704 = vmatpush1.xpose.msra.mxu0 0.0
        %705 = vmatprep.subr.mxu0 0.0
        %706 = vmatpush1.xpose.msra.mxu0 0.0
        %707 = vmatprep.subr.mxu0 0.0
        %708 = vmatpush1.xpose.msra.mxu0 0.0
        %709 = vmatprep.subr.mxu0 0.0
        %710 = vmatpush1.xpose.msra.mxu0 0.0
        %711 = vmatprep.subr.mxu0 0.0
        %712 = vmatpush1.xpose.msra.mxu0 0.0
        %713 = vmatprep.mubr.f32.mxu0 0.0
        %714 = vmatmul.mubr.f32.gmra.mrb[0].mxu0 %v645
        %v715 = vpop.f32.mrb[0].mxu0
        %v716 = vadd.f32 0.0, %v715
        %v717 = vpop.f32.mrb[0].mxu0
        %718 = vdwg.mxu0
        %v719 = vmul.f32 %v716, 0.03125
        %v720 = vtanh.pop %v719
        %s721 = sld [smem:[#allocation2]]
        %v722 = vstv %s721
        %v723 = vmul.f32 %v720, %v722
        %v724 = vld [vmem:[%s12] sm:$0xff]
        %v725 = vadd.f32 %v723, %v724
        %726 = vrot.lane.b32.xlu0 %v550, 96
        %v727 = vpop.permute.xlu0 %726
        %v729 = vsel %vm644, %v552, 0
        %v731 = vsel %vm644, %v727, 0
        %733 = vmatprep.subr.mxu0 0.0
        %734 = vmatpush1.xpose.msra.mxu0 %v731
        %735 = vmatprep.subr.mxu0 0.0
        %736 = vmatpush1.xpose.msra.mxu0 0.0
        %737 = vmatprep.subr.mxu0 0.0
        %738 = vmatpush1.xpose.msra.mxu0 0.0
        %739 = vmatprep.subr.mxu0 0.0
        %740 = vmatpush1.xpose.msra.mxu0 0.0
        %741 = vmatprep.subr.mxu0 0.0
        %742 = vmatpush1.xpose.msra.mxu0 0.0
        %743 = vmatprep.subr.mxu0 0.0
        %744 = vmatpush1.xpose.msra.mxu0 0.0
        %745 = vmatprep.subr.mxu0 0.0
        %746 = vmatpush1.xpose.msra.mxu0 0.0
        %747 = vmatprep.subr.mxu0 0.0
        %748 = vmatpush1.xpose.msra.mxu0 0.0
        %749 = vmatprep.subr.mxu0 0.0
        %750 = vmatpush1.xpose.msra.mxu0 0.0
        %751 = vmatprep.subr.mxu0 0.0
        %752 = vmatpush1.xpose.msra.mxu0 0.0
        %753 = vmatprep.subr.mxu0 0.0
        %754 = vmatpush1.xpose.msra.mxu0 0.0
        %755 = vmatprep.subr.mxu0 0.0
        %756 = vmatpush1.xpose.msra.mxu0 0.0
        %757 = vmatprep.subr.mxu0 0.0
        %758 = vmatpush1.xpose.msra.mxu0 0.0
        %759 = vmatprep.subr.mxu0 0.0
        %760 = vmatpush1.xpose.msra.mxu0 0.0
        %761 = vmatprep.subr.mxu0 0.0
        %762 = vmatpush1.xpose.msra.mxu0 0.0
        %763 = vmatprep.subr.mxu0 0.0
        %764 = vmatpush1.xpose.msra.mxu0 0.0
        %765 = vmatprep.subr.mxu0 0.0
        %766 = vmatpush1.xpose.msra.mxu0 0.0
        %767 = vmatprep.subr.mxu0 0.0
        %768 = vmatpush1.xpose.msra.mxu0 0.0
        %769 = vmatprep.subr.mxu0 0.0
        %770 = vmatpush1.xpose.msra.mxu0 0.0
        %771 = vmatprep.subr.mxu0 0.0
        %772 = vmatpush1.xpose.msra.mxu0 0.0
        %773 = vmatprep.subr.mxu0 0.0
        %774 = vmatpush1.xpose.msra.mxu0 0.0
        %775 = vmatprep.subr.mxu0 0.0
        %776 = vmatpush1.xpose.msra.mxu0 0.0
        %777 = vmatprep.subr.mxu0 0.0
        %778 = vmatpush1.xpose.msra.mxu0 0.0
        %779 = vmatprep.subr.mxu0 0.0
        %780 = vmatpush1.xpose.msra.mxu0 0.0
        %781 = vmatprep.subr.mxu0 0.0
        %782 = vmatpush1.xpose.msra.mxu0 0.0
        %783 = vmatprep.subr.mxu0 0.0
        %784 = vmatpush1.xpose.msra.mxu0 0.0
        %785 = vmatprep.subr.mxu0 0.0
        %786 = vmatpush1.xpose.msra.mxu0 0.0
        %787 = vmatprep.subr.mxu0 0.0
        %788 = vmatpush1.xpose.msra.mxu0 0.0
        %789 = vmatprep.subr.mxu0 0.0
        %790 = vmatpush1.xpose.msra.mxu0 0.0
        %791 = vmatprep.subr.mxu0 0.0
        %792 = vmatpush1.xpose.msra.mxu0 0.0
        %793 = vmatprep.subr.mxu0 0.0
        %794 = vmatpush1.xpose.msra.mxu0 0.0
        %795 = vmatprep.subr.mxu0 0.0
        %796 = vmatpush1.xpose.msra.mxu0 0.0
        %797 = vmatprep.mubr.f32.mxu0 0.0
        %798 = vmatmul.mubr.f32.gmra.mrb[0].mxu0 %v729
        %v799 = vpop.f32.mrb[0].mxu0
        %v800 = vadd.f32 0.0, %v799
        %v801 = vpop.f32.mrb[0].mxu0
        %802 = vdwg.mxu0
        %v803 = vmul.f32 %v800, 0.03125
        %v804 = vtanh.pop %v803
        %s805 = sld [smem:[#allocation2 + $0x1]]
        %v806 = vstv %s805
        %v807 = vmul.f32 %v804, %v806
        %s808 = scalar_lea.vmem %s12, 8
        %v809 = vld [vmem:[%s808] sm:$0xff]
        %v810 = vadd.f32 %v807, %v809
        %812 = vrot.lane.b32.xlu0 %v637, 64
        %v813 = vpop.permute.xlu0 %812
        %vm815 = vcmask 64512
        %v817 = vsel %vm815, %v810, 0
        %819 = vmatprep.subr.mxu0 0.0
        %820 = vmatpush1.msra.mxu0 %v813
        %821 = vmatprep.subr.mxu0 0.0
        %822 = vmatpush1.msra.mxu0 0.0
        %823 = vmatprep.subr.mxu0 0.0
        %824 = vmatpush1.msra.mxu0 0.0
        %825 = vmatprep.subr.mxu0 0.0
        %826 = vmatpush1.msra.mxu0 0.0
        %827 = vmatprep.subr.mxu0 0.0
        %828 = vmatpush1.msra.mxu0 0.0
        %829 = vmatprep.subr.mxu0 0.0
        %830 = vmatpush1.msra.mxu0 0.0
        %831 = vmatprep.subr.mxu0 0.0
        %832 = vmatpush1.msra.mxu0 0.0
        %833 = vmatprep.subr.mxu0 0.0
        %834 = vmatpush1.msra.mxu0 0.0
        %835 = vmatprep.subr.mxu0 0.0
        %836 = vmatpush1.msra.mxu0 0.0
        %837 = vmatprep.subr.mxu0 0.0
        %838 = vmatpush1.msra.mxu0 0.0
        %839 = vmatprep.subr.mxu0 0.0
        %840 = vmatpush1.msra.mxu0 0.0
        %841 = vmatprep.subr.mxu0 0.0
        %842 = vmatpush1.msra.mxu0 0.0
        %843 = vmatprep.subr.mxu0 0.0
        %844 = vmatpush1.msra.mxu0 0.0
        %845 = vmatprep.subr.mxu0 0.0
        %846 = vmatpush1.msra.mxu0 0.0
        %847 = vmatprep.subr.mxu0 0.0
        %848 = vmatpush1.msra.mxu0 0.0
        %849 = vmatprep.subr.mxu0 0.0
        %850 = vmatpush1.msra.mxu0 0.0
        %851 = vmatprep.subr.mxu0 0.0
        %852 = vmatpush1.msra.mxu0 0.0
        %853 = vmatprep.subr.mxu0 0.0
        %854 = vmatpush1.msra.mxu0 0.0
        %855 = vmatprep.subr.mxu0 0.0
        %856 = vmatpush1.msra.mxu0 0.0
        %857 = vmatprep.subr.mxu0 0.0
        %858 = vmatpush1.msra.mxu0 0.0
        %859 = vmatprep.subr.mxu0 0.0
        %860 = vmatpush1.msra.mxu0 0.0
        %861 = vmatprep.subr.mxu0 0.0
        %862 = vmatpush1.msra.mxu0 0.0
        %863 = vmatprep.subr.mxu0 0.0
        %864 = vmatpush1.msra.mxu0 0.0
        %865 = vmatprep.subr.mxu0 0.0
        %866 = vmatpush1.msra.mxu0 0.0
        %867 = vmatprep.subr.mxu0 0.0
        %868 = vmatpush1.msra.mxu0 0.0
        %869 = vmatprep.subr.mxu0 0.0
        %870 = vmatpush1.msra.mxu0 0.0
        %871 = vmatprep.subr.mxu0 0.0
        %872 = vmatpush1.msra.mxu0 0.0
        %873 = vmatprep.subr.mxu0 0.0
        %874 = vmatpush1.msra.mxu0 0.0
        %875 = vmatprep.subr.mxu0 0.0
        %876 = vmatpush1.msra.mxu0 0.0
        %877 = vmatprep.subr.mxu0 0.0
        %878 = vmatpush1.msra.mxu0 0.0
        %879 = vmatprep.subr.mxu0 0.0
        %880 = vmatpush1.msra.mxu0 0.0
        %881 = vmatprep.subr.mxu0 0.0
        %882 = vmatpush1.msra.mxu0 0.0
        %883 = vmatprep.mubr.f32.mxu0 0.0
        %884 = vmatmul.mubr.f32.gmra.mrb[0].mxu0 %v817
        %v885 = vpop.f32.mrb[0].mxu0
        %v886 = vadd.f32 0.0, %v885
        %v887 = vpop.f32.mrb[0].mxu0
        %888 = vdwg.mxu0
        %v890 = vsel %vm815, %v725, 0
        %892 = vmatprep.subr.mxu0 0.0
        %893 = vmatpush1.msra.mxu0 %v637
        %894 = vmatprep.subr.mxu0 0.0
        %895 = vmatpush1.msra.mxu0 0.0
        %896 = vmatprep.subr.mxu0 0.0
        %897 = vmatpush1.msra.mxu0 0.0
        %898 = vmatprep.subr.mxu0 0.0
        %899 = vmatpush1.msra.mxu0 0.0
        %900 = vmatprep.subr.mxu0 0.0
        %901 = vmatpush1.msra.mxu0 0.0
        %902 = vmatprep.subr.mxu0 0.0
        %903 = vmatpush1.msra.mxu0 0.0
        %904 = vmatprep.subr.mxu0 0.0
        %905 = vmatpush1.msra.mxu0 0.0
        %906 = vmatprep.subr.mxu0 0.0
        %907 = vmatpush1.msra.mxu0 0.0
        %908 = vmatprep.subr.mxu0 0.0
        %909 = vmatpush1.msra.mxu0 0.0
        %910 = vmatprep.subr.mxu0 0.0
        %911 = vmatpush1.msra.mxu0 0.0
        %912 = vmatprep.subr.mxu0 0.0
        %913 = vmatpush1.msra.mxu0 0.0
        %914 = vmatprep.subr.mxu0 0.0
        %915 = vmatpush1.msra.mxu0 0.0
        %916 = vmatprep.subr.mxu0 0.0
        %917 = vmatpush1.msra.mxu0 0.0
        %918 = vmatprep.subr.mxu0 0.0
        %919 = vmatpush1.msra.mxu0 0.0
        %920 = vmatprep.subr.mxu0 0.0
        %921 = vmatpush1.msra.mxu0 0.0
        %922 = vmatprep.subr.mxu0 0.0
        %923 = vmatpush1.msra.mxu0 0.0
        %924 = vmatprep.subr.mxu0 0.0
        %925 = vmatpush1.msra.mxu0 0.0
        %926 = vmatprep.subr.mxu0 0.0
        %927 = vmatpush1.msra.mxu0 0.0
        %928 = vmatprep.subr.mxu0 0.0
        %929 = vmatpush1.msra.mxu0 0.0
        %930 = vmatprep.subr.mxu0 0.0
        %931 = vmatpush1.msra.mxu0 0.0
        %932 = vmatprep.subr.mxu0 0.0
        %933 = vmatpush1.msra.mxu0 0.0
        %934 = vmatprep.subr.mxu0 0.0
        %935 = vmatpush1.msra.mxu0 0.0
        %936 = vmatprep.subr.mxu0 0.0
        %937 = vmatpush1.msra.mxu0 0.0
        %938 = vmatprep.subr.mxu0 0.0
        %939 = vmatpush1.msra.mxu0 0.0
        %940 = vmatprep.subr.mxu0 0.0
        %941 = vmatpush1.msra.mxu0 0.0
        %942 = vmatprep.subr.mxu0 0.0
        %943 = vmatpush1.msra.mxu0 0.0
        %944 = vmatprep.subr.mxu0 0.0
        %945 = vmatpush1.msra.mxu0 0.0
        %946 = vmatprep.subr.mxu0 0.0
        %947 = vmatpush1.msra.mxu0 0.0
        %948 = vmatprep.subr.mxu0 0.0
        %949 = vmatpush1.msra.mxu0 0.0
        %950 = vmatprep.subr.mxu0 0.0
        %951 = vmatpush1.msra.mxu0 0.0
        %952 = vmatprep.subr.mxu0 0.0
        %953 = vmatpush1.msra.mxu0 0.0
        %954 = vmatprep.subr.mxu0 0.0
        %955 = vmatpush1.msra.mxu0 0.0
        %956 = vmatprep.mubr.f32.mxu0 0.0
        %957 = vmatmul.mubr.f32.gmra.mrb[0].mxu0 %v890
        %v958 = vpop.f32.mrb[0].mxu0
        %v959 = vadd.f32 %v886, %v958
        %v960 = vpop.f32.mrb[0].mxu0
        %961 = vdwg.mxu0
        %962 = vrot.lane.b32.xlu0 %v552, 96
        %v963 = vpop.permute.xlu0 %962
        %964 = vrot.lane.b32.xlu0 %v550, 64
        %v965 = vpop.permute.xlu0 %964
        %v966 = vsel %vm644, %v963, 0
        %v968 = vsel %vm644, %v965, 0
        %970 = vmatprep.subr.mxu0 0.0
        %971 = vmatpush1.xpose.msra.mxu0 %v968
        %972 = vmatprep.subr.mxu0 0.0
        %973 = vmatpush1.xpose.msra.mxu0 0.0
        %974 = vmatprep.subr.mxu0 0.0
        %975 = vmatpush1.xpose.msra.mxu0 0.0
        %976 = vmatprep.subr.mxu0 0.0
        %977 = vmatpush1.xpose.msra.mxu0 0.0
        %978 = vmatprep.subr.mxu0 0.0
        %979 = vmatpush1.xpose.msra.mxu0 0.0
        %980 = vmatprep.subr.mxu0 0.0
        %981 = vmatpush1.xpose.msra.mxu0 0.0
        %982 = vmatprep.subr.mxu0 0.0
        %983 = vmatpush1.xpose.msra.mxu0 0.0
        %984 = vmatprep.subr.mxu0 0.0
        %985 = vmatpush1.xpose.msra.mxu0 0.0
        %986 = vmatprep.subr.mxu0 0.0
        %987 = vmatpush1.xpose.msra.mxu0 0.0
        %988 = vmatprep.subr.mxu0 0.0
        %989 = vmatpush1.xpose.msra.mxu0 0.0
        %990 = vmatprep.subr.mxu0 0.0
        %991 = vmatpush1.xpose.msra.mxu0 0.0
        %992 = vmatprep.subr.mxu0 0.0
        %993 = vmatpush1.xpose.msra.mxu0 0.0
        %994 = vmatprep.subr.mxu0 0.0
        %995 = vmatpush1.xpose.msra.mxu0 0.0
        %996 = vmatprep.subr.mxu0 0.0
        %997 = vmatpush1.xpose.msra.mxu0 0.0
        %998 = vmatprep.subr.mxu0 0.0
        %999 = vmatpush1.xpose.msra.mxu0 0.0
        %1000 = vmatprep.subr.mxu0 0.0
        %1001 = vmatpush1.xpose.msra.mxu0 0.0
        %1002 = vmatprep.subr.mxu0 0.0
        %1003 = vmatpush1.xpose.msra.mxu0 0.0
        %1004 = vmatprep.subr.mxu0 0.0
        %1005 = vmatpush1.xpose.msra.mxu0 0.0
        %1006 = vmatprep.subr.mxu0 0.0
        %1007 = vmatpush1.xpose.msra.mxu0 0.0
        %1008 = vmatprep.subr.mxu0 0.0
        %1009 = vmatpush1.xpose.msra.mxu0 0.0
        %1010 = vmatprep.subr.mxu0 0.0
        %1011 = vmatpush1.xpose.msra.mxu0 0.0
        %1012 = vmatprep.subr.mxu0 0.0
        %1013 = vmatpush1.xpose.msra.mxu0 0.0
        %1014 = vmatprep.subr.mxu0 0.0
        %1015 = vmatpush1.xpose.msra.mxu0 0.0
        %1016 = vmatprep.subr.mxu0 0.0
        %1017 = vmatpush1.xpose.msra.mxu0 0.0
        %1018 = vmatprep.subr.mxu0 0.0
        %1019 = vmatpush1.xpose.msra.mxu0 0.0
        %1020 = vmatprep.subr.mxu0 0.0
        %1021 = vmatpush1.xpose.msra.mxu0 0.0
        %1022 = vmatprep.subr.mxu0 0.0
        %1023 = vmatpush1.xpose.msra.mxu0 0.0
        %1024 = vmatprep.subr.mxu0 0.0
        %1025 = vmatpush1.xpose.msra.mxu0 0.0
        %1026 = vmatprep.subr.mxu0 0.0
        %1027 = vmatpush1.xpose.msra.mxu0 0.0
        %1028 = vmatprep.subr.mxu0 0.0
        %1029 = vmatpush1.xpose.msra.mxu0 0.0
        %1030 = vmatprep.subr.mxu0 0.0
        %1031 = vmatpush1.xpose.msra.mxu0 0.0
        %1032 = vmatprep.subr.mxu0 0.0
        %1033 = vmatpush1.xpose.msra.mxu0 0.0
        %1034 = vmatprep.mubr.f32.mxu0 0.0
        %1035 = vmatmul.mubr.f32.gmra.mrb[0].mxu0 %v966
        %v1036 = vpop.f32.mrb[0].mxu0
        %v1037 = vadd.f32 0.0, %v1036
        %v1038 = vpop.f32.mrb[0].mxu0
        %1039 = vdwg.mxu0
        %v1040 = vmul.f32 %v1037, 0.03125
        %v1041 = vtanh.pop %v1040
        %s1042 = sld [smem:[#allocation2 + $0x2]]
        %v1043 = vstv %s1042
        %v1044 = vmul.f32 %v1041, %v1043
        %s1045 = scalar_lea.vmem %s12, 16
        %v1046 = vld [vmem:[%s1045] sm:$0xff]
        %v1047 = vadd.f32 %v1044, %v1046
        %v1049 = vsel %vm815, %v1047, 0
        %1051 = vmatprep.subr.mxu0 0.0
        %1052 = vmatpush1.msra.mxu0 %v639
        %1053 = vmatprep.subr.mxu0 0.0
        %1054 = vmatpush1.msra.mxu0 0.0
        %1055 = vmatprep.subr.mxu0 0.0
        %1056 = vmatpush1.msra.mxu0 0.0
        %1057 = vmatprep.subr.mxu0 0.0
        %1058 = vmatpush1.msra.mxu0 0.0
        %1059 = vmatprep.subr.mxu0 0.0
        %1060 = vmatpush1.msra.mxu0 0.0
        %1061 = vmatprep.subr.mxu0 0.0
        %1062 = vmatpush1.msra.mxu0 0.0
        %1063 = vmatprep.subr.mxu0 0.0
        %1064 = vmatpush1.msra.mxu0 0.0
        %1065 = vmatprep.subr.mxu0 0.0
        %1066 = vmatpush1.msra.mxu0 0.0
        %1067 = vmatprep.subr.mxu0 0.0
        %1068 = vmatpush1.msra.mxu0 0.0
        %1069 = vmatprep.subr.mxu0 0.0
        %1070 = vmatpush1.msra.mxu0 0.0
        %1071 = vmatprep.subr.mxu0 0.0
        %1072 = vmatpush1.msra.mxu0 0.0
        %1073 = vmatprep.subr.mxu0 0.0
        %1074 = vmatpush1.msra.mxu0 0.0
        %1075 = vmatprep.subr.mxu0 0.0
        %1076 = vmatpush1.msra.mxu0 0.0
        %1077 = vmatprep.subr.mxu0 0.0
        %1078 = vmatpush1.msra.mxu0 0.0
        %1079 = vmatprep.subr.mxu0 0.0
        %1080 = vmatpush1.msra.mxu0 0.0
        %1081 = vmatprep.subr.mxu0 0.0
        %1082 = vmatpush1.msra.mxu0 0.0
        %1083 = vmatprep.subr.mxu0 0.0
        %1084 = vmatpush1.msra.mxu0 0.0
        %1085 = vmatprep.subr.mxu0 0.0
        %1086 = vmatpush1.msra.mxu0 0.0
        %1087 = vmatprep.subr.mxu0 0.0
        %1088 = vmatpush1.msra.mxu0 0.0
        %1089 = vmatprep.subr.mxu0 0.0
        %1090 = vmatpush1.msra.mxu0 0.0
        %1091 = vmatprep.subr.mxu0 0.0
        %1092 = vmatpush1.msra.mxu0 0.0
        %1093 = vmatprep.subr.mxu0 0.0
        %1094 = vmatpush1.msra.mxu0 0.0
        %1095 = vmatprep.subr.mxu0 0.0
        %1096 = vmatpush1.msra.mxu0 0.0
        %1097 = vmatprep.subr.mxu0 0.0
        %1098 = vmatpush1.msra.mxu0 0.0
        %1099 = vmatprep.subr.mxu0 0.0
        %1100 = vmatpush1.msra.mxu0 0.0
        %1101 = vmatprep.subr.mxu0 0.0
        %1102 = vmatpush1.msra.mxu0 0.0
        %1103 = vmatprep.subr.mxu0 0.0
        %1104 = vmatpush1.msra.mxu0 0.0
        %1105 = vmatprep.subr.mxu0 0.0
        %1106 = vmatpush1.msra.mxu0 0.0
        %1107 = vmatprep.subr.mxu0 0.0
        %1108 = vmatpush1.msra.mxu0 0.0
        %1109 = vmatprep.subr.mxu0 0.0
        %1110 = vmatpush1.msra.mxu0 0.0
        %1111 = vmatprep.subr.mxu0 0.0
        %1112 = vmatpush1.msra.mxu0 0.0
        %1113 = vmatprep.subr.mxu0 0.0
        %1114 = vmatpush1.msra.mxu0 0.0
        %1115 = vmatprep.mubr.f32.mxu0 0.0
        %1116 = vmatmul.mubr.f32.gmra.mrb[0].mxu0 %v1049
        %v1117 = vpop.f32.mrb[0].mxu0
        %v1118 = vadd.f32 0.0, %v1117
        %v1119 = vpop.f32.mrb[0].mxu0
        %1120 = vdwg.mxu0
        %v1121 = vadd.f32 %v959, %v1118
        %v1122 = vld [vmem:[%s4] sm:$0x1]
        %v1124 = vlaneseq
        %v1125 = vshrl.u32 %v1124, 7
        %v1126 = vsub.s32 0, %v1125
        %v1127 = vrot.slane %v1122, %v1126
        %v1129 = vadd.f32 %v1121, %v1127
        %v1130 = vld [vmem:[%s5] sm:$0xff]
        %v1131 = vld [vmem:[%s5 + $0x8] sm:$0xff]
        %v1132 = vld [vmem:[%s5 + $0x10] sm:$0xff]
        %v1133 = vld [vmem:[%s5 + $0x18] sm:$0xff]
        %v1134 = vld [vmem:[%s5 + $0x20] sm:$0xff]
        %v1135 = vld [vmem:[%s5 + $0x28] sm:$0xff]
        %v1136 = vld [vmem:[%s5 + $0x30] sm:$0xff]
        %v1137 = vld [vmem:[%s5 + $0x38] sm:$0xff]
        %v1138 = vld [vmem:[%s6] sm:$0x1]
        %v1140 = vlaneseq
        %v1141 = vshrl.u32 %v1140, 7
        %v1142 = vsub.s32 0, %v1141
        %v1143 = vrot.slane %v1138, %v1142
        %1145 = vmatprep.subr.mxu0 0.0
        %1146 = vmatpush1.msra.mxu0 %v1130
        %1147 = vmatprep.subr.mxu0 0.0
        %1148 = vmatpush1.msra.mxu0 %v1131
        %1149 = vmatprep.subr.mxu0 0.0
        %1150 = vmatpush1.msra.mxu0 %v1132
        %1151 = vmatprep.subr.mxu0 0.0
        %1152 = vmatpush1.msra.mxu0 %v1133
        %1153 = vmatprep.subr.mxu0 0.0
        %1154 = vmatpush1.msra.mxu0 %v1134
        %1155 = vmatprep.subr.mxu0 0.0
        %1156 = vmatpush1.msra.mxu0 %v1135
        %1157 = vmatprep.subr.mxu0 0.0
        %1158 = vmatpush1.msra.mxu0 %v1136
        %1159 = vmatprep.subr.mxu0 0.0
        %1160 = vmatpush1.msra.mxu0 %v1137
        %1161 = vmatprep.subr.mxu0 0.0
        %1162 = vmatpush1.msra.mxu0 0.0
        %1163 = vmatprep.subr.mxu0 0.0
        %1164 = vmatpush1.msra.mxu0 0.0
        %1165 = vmatprep.subr.mxu0 0.0
        %1166 = vmatpush1.msra.mxu0 0.0
        %1167 = vmatprep.subr.mxu0 0.0
        %1168 = vmatpush1.msra.mxu0 0.0
        %1169 = vmatprep.subr.mxu0 0.0
        %1170 = vmatpush1.msra.mxu0 0.0
        %1171 = vmatprep.subr.mxu0 0.0
        %1172 = vmatpush1.msra.mxu0 0.0
        %1173 = vmatprep.subr.mxu0 0.0
        %1174 = vmatpush1.msra.mxu0 0.0
        %1175 = vmatprep.subr.mxu0 0.0
        %1176 = vmatpush1.msra.mxu0 0.0
        %1177 = vmatprep.subr.mxu0 0.0
        %1178 = vmatpush1.msra.mxu0 0.0
        %1179 = vmatprep.subr.mxu0 0.0
        %1180 = vmatpush1.msra.mxu0 0.0
        %1181 = vmatprep.subr.mxu0 0.0
        %1182 = vmatpush1.msra.mxu0 0.0
        %1183 = vmatprep.subr.mxu0 0.0
        %1184 = vmatpush1.msra.mxu0 0.0
        %1185 = vmatprep.subr.mxu0 0.0
        %1186 = vmatpush1.msra.mxu0 0.0
        %1187 = vmatprep.subr.mxu0 0.0
        %1188 = vmatpush1.msra.mxu0 0.0
        %1189 = vmatprep.subr.mxu0 0.0
        %1190 = vmatpush1.msra.mxu0 0.0
        %1191 = vmatprep.subr.mxu0 0.0
        %1192 = vmatpush1.msra.mxu0 0.0
        %1193 = vmatprep.subr.mxu0 0.0
        %1194 = vmatpush1.msra.mxu0 0.0
        %1195 = vmatprep.subr.mxu0 0.0
        %1196 = vmatpush1.msra.mxu0 0.0
        %1197 = vmatprep.subr.mxu0 0.0
        %1198 = vmatpush1.msra.mxu0 0.0
        %1199 = vmatprep.subr.mxu0 0.0
        %1200 = vmatpush1.msra.mxu0 0.0
        %1201 = vmatprep.subr.mxu0 0.0
        %1202 = vmatpush1.msra.mxu0 0.0
        %1203 = vmatprep.subr.mxu0 0.0
        %1204 = vmatpush1.msra.mxu0 0.0
        %1205 = vmatprep.subr.mxu0 0.0
        %1206 = vmatpush1.msra.mxu0 0.0
        %1207 = vmatprep.subr.mxu0 0.0
        %1208 = vmatpush1.msra.mxu0 0.0
        %1209 = vmatprep.mubr.f32.mxu0 0.0
        %1210 = vmatmul.mubr.f32.gmra.mrb[0].mxu0 %v481
        %v1211 = vpop.f32.mrb[0].mxu0
        %v1212 = vadd.f32 %v1143, %v1211
        %v1213 = vpop.f32.mrb[0].mxu0
        %1214 = vdwg.mxu0
        %v1215 = vadd.f32 %v1212, %v1129
        %vm1216 = vcmp.ge.f32.partialorder %v1215, 0.0
        %v1217 = vmul.f32 %v1215, 0.1
        %v1218 = vsel %vm1216, %v1215, %v1217
        %v1219 = vld [vmem:[%s7] sm:$0xff]
        %v1220 = vld [vmem:[%s7 + $0x8] sm:$0xff]
        %v1221 = vld [vmem:[%s7 + $0x10] sm:$0xff]
        %v1222 = vld [vmem:[%s7 + $0x18] sm:$0xff]
        %v1223 = vld [vmem:[%s7 + $0x20] sm:$0xff]
        %v1224 = vld [vmem:[%s7 + $0x28] sm:$0xff]
        %v1225 = vld [vmem:[%s7 + $0x30] sm:$0xff]
        %v1226 = vld [vmem:[%s7 + $0x38] sm:$0xff]
        %v1227 = vld [vmem:[%s8] sm:$0x1]
        %v1229 = vlaneseq
        %v1230 = vshrl.u32 %v1229, 7
        %v1231 = vsub.s32 0, %v1230
        %v1232 = vrot.slane %v1227, %v1231
        %v1235 = vsel %vm479, %v1218, 0
        %1237 = vmatprep.subr.mxu0 0.0
        %1238 = vmatpush1.msra.mxu0 %v1219
        %1239 = vmatprep.subr.mxu0 0.0
        %1240 = vmatpush1.msra.mxu0 %v1220
        %1241 = vmatprep.subr.mxu0 0.0
        %1242 = vmatpush1.msra.mxu0 %v1221
        %1243 = vmatprep.subr.mxu0 0.0
        %1244 = vmatpush1.msra.mxu0 %v1222
        %1245 = vmatprep.subr.mxu0 0.0
        %1246 = vmatpush1.msra.mxu0 %v1223
        %1247 = vmatprep.subr.mxu0 0.0
        %1248 = vmatpush1.msra.mxu0 %v1224
        %1249 = vmatprep.subr.mxu0 0.0
        %1250 = vmatpush1.msra.mxu0 %v1225
        %1251 = vmatprep.subr.mxu0 0.0
        %1252 = vmatpush1.msra.mxu0 %v1226
        %1253 = vmatprep.subr.mxu0 0.0
        %1254 = vmatpush1.msra.mxu0 0.0
        %1255 = vmatprep.subr.mxu0 0.0
        %1256 = vmatpush1.msra.mxu0 0.0
        %1257 = vmatprep.subr.mxu0 0.0
        %1258 = vmatpush1.msra.mxu0 0.0
        %1259 = vmatprep.subr.mxu0 0.0
        %1260 = vmatpush1.msra.mxu0 0.0
        %1261 = vmatprep.subr.mxu0 0.0
        %1262 = vmatpush1.msra.mxu0 0.0
        %1263 = vmatprep.subr.mxu0 0.0
        %1264 = vmatpush1.msra.mxu0 0.0
        %1265 = vmatprep.subr.mxu0 0.0
        %1266 = vmatpush1.msra.mxu0 0.0
        %1267 = vmatprep.subr.mxu0 0.0
        %1268 = vmatpush1.msra.mxu0 0.0
        %1269 = vmatprep.subr.mxu0 0.0
        %1270 = vmatpush1.msra.mxu0 0.0
        %1271 = vmatprep.subr.mxu0 0.0
        %1272 = vmatpush1.msra.mxu0 0.0
        %1273 = vmatprep.subr.mxu0 0.0
        %1274 = vmatpush1.msra.mxu0 0.0
        %1275 = vmatprep.subr.mxu0 0.0
        %1276 = vmatpush1.msra.mxu0 0.0
        %1277 = vmatprep.subr.mxu0 0.0
        %1278 = vmatpush1.msra.mxu0 0.0
        %1279 = vmatprep.subr.mxu0 0.0
        %1280 = vmatpush1.msra.mxu0 0.0
        %1281 = vmatprep.subr.mxu0 0.0
        %1282 = vmatpush1.msra.mxu0 0.0
        %1283 = vmatprep.subr.mxu0 0.0
        %1284 = vmatpush1.msra.mxu0 0.0
        %1285 = vmatprep.subr.mxu0 0.0
        %1286 = vmatpush1.msra.mxu0 0.0
        %1287 = vmatprep.subr.mxu0 0.0
        %1288 = vmatpush1.msra.mxu0 0.0
        %1289 = vmatprep.subr.mxu0 0.0
        %1290 = vmatpush1.msra.mxu0 0.0
        %1291 = vmatprep.subr.mxu0 0.0
        %1292 = vmatpush1.msra.mxu0 0.0
        %1293 = vmatprep.subr.mxu0 0.0
        %1294 = vmatpush1.msra.mxu0 0.0
        %1295 = vmatprep.subr.mxu0 0.0
        %1296 = vmatpush1.msra.mxu0 0.0
        %1297 = vmatprep.subr.mxu0 0.0
        %1298 = vmatpush1.msra.mxu0 0.0
        %1299 = vmatprep.subr.mxu0 0.0
        %1300 = vmatpush1.msra.mxu0 0.0
        %1301 = vmatprep.mubr.f32.mxu0 0.0
        %1302 = vmatmul.mubr.f32.gmra.mrb[0].mxu0 %v1235
        %v1303 = vpop.f32.mrb[0].mxu0
        %v1304 = vadd.f32 %v1232, %v1303
        %v1305 = vpop.f32.mrb[0].mxu0
        %1306 = vdwg.mxu0
        %v1307 = vld [vmem:[%s9] sm:$0xff]
        %v1308 = vld [vmem:[%s9 + $0x8] sm:$0xff]
        %v1309 = vld [vmem:[%s9 + $0x10] sm:$0xff]
        %v1310 = vld [vmem:[%s9 + $0x18] sm:$0xff]
        %v1311 = vld [vmem:[%s9 + $0x20] sm:$0xff]
        %v1312 = vld [vmem:[%s9 + $0x28] sm:$0xff]
        %v1313 = vld [vmem:[%s9 + $0x30] sm:$0xff]
        %v1314 = vld [vmem:[%s9 + $0x38] sm:$0xff]
        %v1315 = vld [vmem:[%s10] sm:$0x1]
        %v1317 = vlaneseq
        %v1318 = vshrl.u32 %v1317, 7
        %v1319 = vsub.s32 0, %v1318
        %v1320 = vrot.slane %v1315, %v1319
        %1322 = vmatprep.subr.mxu0 0.0
        %1323 = vmatpush1.msra.mxu0 %v1307
        %1324 = vmatprep.subr.mxu0 0.0
        %1325 = vmatpush1.msra.mxu0 %v1308
        %1326 = vmatprep.subr.mxu0 0.0
        %1327 = vmatpush1.msra.mxu0 %v1309
        %1328 = vmatprep.subr.mxu0 0.0
        %1329 = vmatpush1.msra.mxu0 %v1310
        %1330 = vmatprep.subr.mxu0 0.0
        %1331 = vmatpush1.msra.mxu0 %v1311
        %1332 = vmatprep.subr.mxu0 0.0
        %1333 = vmatpush1.msra.mxu0 %v1312
        %1334 = vmatprep.subr.mxu0 0.0
        %1335 = vmatpush1.msra.mxu0 %v1313
        %1336 = vmatprep.subr.mxu0 0.0
        %1337 = vmatpush1.msra.mxu0 %v1314
        %1338 = vmatprep.subr.mxu0 0.0
        %1339 = vmatpush1.msra.mxu0 0.0
        %1340 = vmatprep.subr.mxu0 0.0
        %1341 = vmatpush1.msra.mxu0 0.0
        %1342 = vmatprep.subr.mxu0 0.0
        %1343 = vmatpush1.msra.mxu0 0.0
        %1344 = vmatprep.subr.mxu0 0.0
        %1345 = vmatpush1.msra.mxu0 0.0
        %1346 = vmatprep.subr.mxu0 0.0
        %1347 = vmatpush1.msra.mxu0 0.0
        %1348 = vmatprep.subr.mxu0 0.0
        %1349 = vmatpush1.msra.mxu0 0.0
        %1350 = vmatprep.subr.mxu0 0.0
        %1351 = vmatpush1.msra.mxu0 0.0
        %1352 = vmatprep.subr.mxu0 0.0
        %1353 = vmatpush1.msra.mxu0 0.0
        %1354 = vmatprep.subr.mxu0 0.0
        %1355 = vmatpush1.msra.mxu0 0.0
        %1356 = vmatprep.subr.mxu0 0.0
        %1357 = vmatpush1.msra.mxu0 0.0
        %1358 = vmatprep.subr.mxu0 0.0
        %1359 = vmatpush1.msra.mxu0 0.0
        %1360 = vmatprep.subr.mxu0 0.0
        %1361 = vmatpush1.msra.mxu0 0.0
        %1362 = vmatprep.subr.mxu0 0.0
        %1363 = vmatpush1.msra.mxu0 0.0
        %1364 = vmatprep.subr.mxu0 0.0
        %1365 = vmatpush1.msra.mxu0 0.0
        %1366 = vmatprep.subr.mxu0 0.0
        %1367 = vmatpush1.msra.mxu0 0.0
        %1368 = vmatprep.subr.mxu0 0.0
        %1369 = vmatpush1.msra.mxu0 0.0
        %1370 = vmatprep.subr.mxu0 0.0
        %1371 = vmatpush1.msra.mxu0 0.0
        %1372 = vmatprep.subr.mxu0 0.0
        %1373 = vmatpush1.msra.mxu0 0.0
        %1374 = vmatprep.subr.mxu0 0.0
        %1375 = vmatpush1.msra.mxu0 0.0
        %1376 = vmatprep.subr.mxu0 0.0
        %1377 = vmatpush1.msra.mxu0 0.0
        %1378 = vmatprep.subr.mxu0 0.0
        %1379 = vmatpush1.msra.mxu0 0.0
        %1380 = vmatprep.subr.mxu0 0.0
        %1381 = vmatpush1.msra.mxu0 0.0
        %1382 = vmatprep.subr.mxu0 0.0
        %1383 = vmatpush1.msra.mxu0 0.0
        %1384 = vmatprep.subr.mxu0 0.0
        %1385 = vmatpush1.msra.mxu0 0.0
        %1386 = vmatprep.mubr.f32.mxu0 0.0
        %1387 = vmatmul.mubr.f32.gmra.mrb[0].mxu0 %v481
        %v1388 = vpop.f32.mrb[0].mxu0
        %v1389 = vadd.f32 %v1320, %v1388
        %v1390 = vpop.f32.mrb[0].mxu0
        %1391 = vdwg.mxu0
        %v1392 = vadd.f32 %v1389, %v1304
        %vm1393 = vcmp.ge.f32.partialorder %v1392, 0.0
        %v1394 = vmul.f32 %v1392, 0.1
        %v1395 = vsel %vm1393, %v1392, %v1394
        %1396 = vst.msk [vmem:[%s449] sm:$0xff] %vm479, %v1395
        %p1397 = scmp.lt.s32.totalorder %s25, 3
        %s1398 = scalar_select %p1397, %s25, 3
        %s1399 = smul.addr %s1398, 8
        %s1400 = scalar_lea.vmem %s13, %s1399
        // Predicated region
        $region77: #{fan_forward.7} parent=71 // pred_check
          %p1401 = pneg %p321
        $region78: #{fan_forward.7} parent=71 // pred_check_branch
          %1403 = sbr.rel (%p1401) target = $region80
        $region79: #{fan_forward.7} parent=71 // pred_region
          _
        $region80: #{fan_forward.7} parent=71 // pred_fallthru
          _
      $region72: #{fan_forward.7} parent=5 // pred_fallthru
        _
      %p1404 = scmp.le.s32.totalorder 2, %s20
      // Predicated region
      $region81: #{fan_forward.7} parent=5 // pred_check
        %p1405 = pneg %p1404
      $region82: #{fan_forward.7} parent=5 // pred_check_branch
        %1407 = sbr.rel (%p1405) target = $region84
      $region83: #{fan_forward.7} parent=5 // pred_region
        %s1408 = ssub.s32 %s20, 2
        // Predicated region
        $region85: #{fan_forward.7} parent=83 // pred_check
          %p1409 = pneg %p327
        $region86: #{fan_forward.7} parent=83 // pred_check_branch
          %1411 = sbr.rel (%p1409) target = $region88
        $region87: #{fan_forward.7} parent=83 // pred_region
          %p1412 = scmp.lt.s32.totalorder %s26, 3
          %s1413 = scalar_select %p1412, %s26, 3
          %s1414 = smul.addr %s1413, 8
          %s1415 = scalar_lea.vmem %s13, %s1414
        $region88: #{fan_forward.7} parent=83 // pred_fallthru
          _
      $region84: #{fan_forward.7} parent=5 // pred_fallthru
        _
    $region6: #{fan_forward.7} parent=1 // loop_footer
      %s24 = sadd.s32 1, %s20
    $region7: #{fan_forward.7} parent=1 // loop_footer_branch
      %19 = sbr.rel target = $region3
    $region8: #{fan_forward.7} parent=1 // loop_exit
      _
    %1416 = vsyncpa [#allocation3], 1
    %s1417 = scalar_lea.sflag [#allocation3], 1
    %1418 = vsyncpa %s1417, 1

// kernel: fan_forward.9
$region0: #{fan_forward.9}
  #allocation0 [shape = 'u32[]', space=smem, size = 0x4, offset = 0x4, fixed_abs, tag = 'smem constant byte address 0x4 - core index']
  #allocation1 [shape = 'u32[144,128]{1,0:T(1,128)}', space=vmem, size = 0x12000, scoped, tag = 'internal scratch']
  %s0 = inlined_call_operand.vmem [shape: f32[4,8,64], index: 0, kind: input, shape index: {}]
  %s1 = inlined_call_operand.vmem [shape: f32[64,192], index: 1, kind: input, shape index: {}]
  %s2 = inlined_call_operand.vmem [shape: f32[1,192], index: 2, kind: input, shape index: {}]
  %s3 = inlined_call_operand.vmem [shape: f32[64,384], index: 3, kind: input, shape index: {}]
  %s4 = inlined_call_operand.vmem [shape: f32[1,128], index: 4, kind: input, shape index: {}]
  %s5 = inlined_call_operand.vmem [shape: f32[64,128], index: 5, kind: input, shape index: {}]
  %s6 = inlined_call_operand.vmem [shape: f32[1,128], index: 6, kind: input, shape index: {}]
  %s7 = inlined_call_operand.vmem [shape: f32[128,128], index: 7, kind: input, shape index: {}]
  %s8 = inlined_call_operand.vmem [shape: f32[1,128], index: 8, kind: input, shape index: {}]
  %s9 = inlined_call_operand.vmem [shape: f32[64,128], index: 9, kind: input, shape index: {}]
  %s10 = inlined_call_operand.vmem [shape: f32[1,128], index: 10, kind: input, shape index: {}]
  %s11 = inlined_call_operand.vmem [shape: f32[3], index: 11, kind: input, shape index: {}]
  %s12 = inlined_call_operand.vmem [shape: f32[3,8,8], index: 12, kind: input, shape index: {}]
  %s13 = inlined_call_operand.vmem [shape: f32[4,8,128], index: 13, kind: output, shape index: {}]
  %s14 = sld [smem:[#allocation0]]
  $region89: #{fan_forward.9} parent=0
    _
  %s16 = ssub.s32 1, %s14
  %s17 = scalar_select 0, %s16, %s14
  $region1: #{fan_forward.9} parent=0
    #allocation2 [shape = 'u8[512]{0}', space=smem, size = 0x200, scoped, tag = 'input window, operand 11, single buffered']
    #allocation3 [shape = 's32[2]{0}', space=sflag, size = 0x8, scoped, tag = 'scoped memory for fan_forward.9']
    %18 = vsyncpa [#allocation3], 0
    loop: start=0, step=1, limit=6
    $region2: #{fan_forward.9} parent=1 // loop_pre_header
      _
    $region3: #{fan_forward.9} parent=1 // loop_header
      %s20 = sphi 0, %s24
      %p21 = scmp.ge.s32.totalorder %s20, 6
      %s30 = sphi 0, %s32
      %s33 = sphi 0, %s30
      %s34 = sphi 0, %s33
      %s50 = sphi 0, %s34
      %s54 = sphi 0, %s54
      %s56 = sphi 0, %s54
      %s57 = sphi 0, %s56
      %s71 = sphi 0, %s57
      %s75 = sphi 0, %s75
      %s77 = sphi 0, %s75
      %s78 = sphi 0, %s77
      %s92 = sphi 0, %s78
      %s96 = sphi 0, %s96
      %s98 = sphi 0, %s96
      %s99 = sphi 0, %s98
      %s113 = sphi 0, %s99
      %s117 = sphi 0, %s117
      %s119 = sphi 0, %s117
      %s120 = sphi 0, %s119
      %s134 = sphi 0, %s120
      %s138 = sphi 0, %s138
      %s140 = sphi 0, %s138
      %s141 = sphi 0, %s140
      %s155 = sphi 0, %s141
      %s159 = sphi 0, %s159
      %s161 = sphi 0, %s159
      %s162 = sphi 0, %s161
      %s176 = sphi 0, %s162
      %s180 = sphi 0, %s180
      %s182 = sphi 0, %s180
      %s183 = sphi 0, %s182
      %s197 = sphi 0, %s183
      %s201 = sphi 0, %s201
      %s203 = sphi 0, %s201
      %s204 = sphi 0, %s203
      %s218 = sphi 0, %s204
      %s222 = sphi 0, %s222
      %s224 = sphi 0, %s222
      %s225 = sphi 0, %s224
      %s239 = sphi 0, %s225
      %s243 = sphi 0, %s243
      %s245 = sphi 0, %s243
      %s246 = sphi 0, %s245
      %s260 = sphi 0, %s246
      %s264 = sphi 0, %s264
      %s266 = sphi 0, %s264
      %s267 = sphi 0, %s266
      %s281 = sphi 0, %s267
      %s285 = sphi 0, %s285
      %s287 = sphi 0, %s285
      %s288 = sphi 0, %s287
      %s302 = sphi 0, %s288
      %s308 = sphi 0, %s310
      %s311 = sphi 0, %s308
      %s312 = sphi 0, %s311
      %s328 = sphi 0, %s312
    $region4: #{fan_forward.9} parent=1 // loop_header_branch
      %23 = sbr.rel (%p21) target = $region8
    $region5: #{fan_forward.9} parent=1 // loop_body
      %s25 = ssub.s32 %s20, 1
      %s26 = ssub.s32 %s20, 2
      %s27 = sadd.s32 %s20, 1
      %s28 = ssub.s32 %s20, %s27
      %p29 = scmp.eq.s32.totalorder %s28, 0
      %s31 = sadd.s32 %s30, 1
      %s32 = scalar_select %p29, %s30, %s31
      %p35 = pneg %p29
      %p36 = scmp.eq.s32.totalorder %s20, 3
      %p37 = por %p35, %p36
      %p38 = scmp.ne.s32.totalorder %s30, %s33
      %p39 = scmp.eq.s32.totalorder %s20, 0
      %p40 = por %p38, %p39
      %p41 = scmp.ne.s32.totalorder %s30, %s33
      %p42 = scmp.eq.s32.totalorder %s25, 3
      %p43 = por %p41, %p42
      %p44 = scmp.ne.s32.totalorder %s33, %s34
      %p45 = scmp.eq.s32.totalorder %s25, 0
      %p46 = por %p44, %p45
      %p47 = scmp.ne.s32.totalorder %s33, %s34
      %p48 = scmp.eq.s32.totalorder %s26, 3
      %p49 = por %p47, %p48
      %p51 = scmp.ne.s32.totalorder %s34, %s50
      %p52 = scmp.eq.s32.totalorder %s26, 0
      %p53 = por %p51, %p52
      %s55 = sadd.s32 %s54, 1
      %p58 = scmp.eq.s32.totalorder %s20, 3
      %p59 = scmp.ne.s32.totalorder %s54, %s56
      %p60 = scmp.eq.s32.totalorder %s20, 0
      %p61 = por %p59, %p60
      %p62 = scmp.ne.s32.totalorder %s54, %s56
      %p63 = scmp.eq.s32.totalorder %s25, 3
      %p64 = por %p62, %p63
      %p65 = scmp.ne.s32.totalorder %s56, %s57
      %p66 = scmp.eq.s32.totalorder %s25, 0
      %p67 = por %p65, %p66
      %p68 = scmp.ne.s32.totalorder %s56, %s57
      %p69 = scmp.eq.s32.totalorder %s26, 3
      %p70 = por %p68, %p69
      %p72 = scmp.ne.s32.totalorder %s57, %s71
      %p73 = scmp.eq.s32.totalorder %s26, 0
      %p74 = por %p72, %p73
      %s76 = sadd.s32 %s75, 1
      %p79 = scmp.eq.s32.totalorder %s20, 3
      %p80 = scmp.ne.s32.totalorder %s75, %s77
      %p81 = scmp.eq.s32.totalorder %s20, 0
      %p82 = por %p80, %p81
      %p83 = scmp.ne.s32.totalorder %s75, %s77
      %p84 = scmp.eq.s32.totalorder %s25, 3
      %p85 = por %p83, %p84
      %p86 = scmp.ne.s32.totalorder %s77, %s78
      %p87 = scmp.eq.s32.totalorder %s25, 0
      %p88 = por %p86, %p87
      %p89 = scmp.ne.s32.totalorder %s77, %s78
      %p90 = scmp.eq.s32.totalorder %s26, 3
      %p91 = por %p89, %p90
      %p93 = scmp.ne.s32.totalorder %s78, %s92
      %p94 = scmp.eq.s32.totalorder %s26, 0
      %p95 = por %p93, %p94
      %s97 = sadd.s32 %s96, 1
      %p100 = scmp.eq.s32.totalorder %s20, 3
      %p101 = scmp.ne.s32.totalorder %s96, %s98
      %p102 = scmp.eq.s32.totalorder %s20, 0
      %p103 = por %p101, %p102
      %p104 = scmp.ne.s32.totalorder %s96, %s98
      %p105 = scmp.eq.s32.totalorder %s25, 3
      %p106 = por %p104, %p105
      %p107 = scmp.ne.s32.totalorder %s98, %s99
      %p108 = scmp.eq.s32.totalorder %s25, 0
      %p109 = por %p107, %p108
      %p110 = scmp.ne.s32.totalorder %s98, %s99
      %p111 = scmp.eq.s32.totalorder %s26, 3
      %p112 = por %p110, %p111
      %p114 = scmp.ne.s32.totalorder %s99, %s113
      %p115 = scmp.eq.s32.totalorder %s26, 0
      %p116 = por %p114, %p115
      %s118 = sadd.s32 %s117, 1
      %p121 = scmp.eq.s32.totalorder %s20, 3
      %p122 = scmp.ne.s32.totalorder %s117, %s119
      %p123 = scmp.eq.s32.totalorder %s20, 0
      %p124 = por %p122, %p123
      %p125 = scmp.ne.s32.totalorder %s117, %s119
      %p126 = scmp.eq.s32.totalorder %s25, 3
      %p127 = por %p125, %p126
      %p128 = scmp.ne.s32.totalorder %s119, %s120
      %p129 = scmp.eq.s32.totalorder %s25, 0
      %p130 = por %p128, %p129
      %p131 = scmp.ne.s32.totalorder %s119, %s120
      %p132 = scmp.eq.s32.totalorder %s26, 3
      %p133 = por %p131, %p132
      %p135 = scmp.ne.s32.totalorder %s120, %s134
      %p136 = scmp.eq.s32.totalorder %s26, 0
      %p137 = por %p135, %p136
      %s139 = sadd.s32 %s138, 1
      %p142 = scmp.eq.s32.totalorder %s20, 3
      %p143 = scmp.ne.s32.totalorder %s138, %s140
      %p144 = scmp.eq.s32.totalorder %s20, 0
      %p145 = por %p143, %p144
      %p146 = scmp.ne.s32.totalorder %s138, %s140
      %p147 = scmp.eq.s32.totalorder %s25, 3
      %p148 = por %p146, %p147
      %p149 = scmp.ne.s32.totalorder %s140, %s141
      %p150 = scmp.eq.s32.totalorder %s25, 0
      %p151 = por %p149, %p150
      %p152 = scmp.ne.s32.totalorder %s140, %s141
      %p153 = scmp.eq.s32.totalorder %s26, 3
      %p154 = por %p152, %p153
      %p156 = scmp.ne.s32.totalorder %s141, %s155
      %p157 = scmp.eq.s32.totalorder %s26, 0
      %p158 = por %p156, %p157
      %s160 = sadd.s32 %s159, 1
      %p163 = scmp.eq.s32.totalorder %s20, 3
      %p164 = scmp.ne.s32.totalorder %s159, %s161
      %p165 = scmp.eq.s32.totalorder %s20, 0
      %p166 = por %p164, %p165
      %p167 = scmp.ne.s32.totalorder %s159, %s161
      %p168 = scmp.eq.s32.totalorder %s25, 3
      %p169 = por %p167, %p168
      %p170 = scmp.ne.s32.totalorder %s161, %s162
      %p171 = scmp.eq.s32.totalorder %s25, 0
      %p172 = por %p170, %p171
      %p173 = scmp.ne.s32.totalorder %s161, %s162
      %p174 = scmp.eq.s32.totalorder %s26, 3
      %p175 = por %p173, %p174
      %p177 = scmp.ne.s32.totalorder %s162, %s176
      %p178 = scmp.eq.s32.totalorder %s26, 0
      %p179 = por %p177, %p178
      %s181 = sadd.s32 %s180, 1
      %p184 = scmp.eq.s32.totalorder %s20, 3
      %p185 = scmp.ne.s32.totalorder %s180, %s182
      %p186 = scmp.eq.s32.totalorder %s20, 0
      %p187 = por %p185, %p186
      %p188 = scmp.ne.s32.totalorder %s180, %s182
      %p189 = scmp.eq.s32.totalorder %s25, 3
      %p190 = por %p188, %p189
      %p191 = scmp.ne.s32.totalorder %s182, %s183
      %p192 = scmp.eq.s32.totalorder %s25, 0
      %p193 = por %p191, %p192
      %p194 = scmp.ne.s32.totalorder %s182, %s183
      %p195 = scmp.eq.s32.totalorder %s26, 3
      %p196 = por %p194, %p195
      %p198 = scmp.ne.s32.totalorder %s183, %s197
      %p199 = scmp.eq.s32.totalorder %s26, 0
      %p200 = por %p198, %p199
      %s202 = sadd.s32 %s201, 1
      %p205 = scmp.eq.s32.totalorder %s20, 3
      %p206 = scmp.ne.s32.totalorder %s201, %s203
      %p207 = scmp.eq.s32.totalorder %s20, 0
      %p208 = por %p206, %p207
      %p209 = scmp.ne.s32.totalorder %s201, %s203
      %p210 = scmp.eq.s32.totalorder %s25, 3
      %p211 = por %p209, %p210
      %p212 = scmp.ne.s32.totalorder %s203, %s204
      %p213 = scmp.eq.s32.totalorder %s25, 0
      %p214 = por %p212, %p213
      %p215 = scmp.ne.s32.totalorder %s203, %s204
      %p216 = scmp.eq.s32.totalorder %s26, 3
      %p217 = por %p215, %p216
      %p219 = scmp.ne.s32.totalorder %s204, %s218
      %p220 = scmp.eq.s32.totalorder %s26, 0
      %p221 = por %p219, %p220
      %s223 = sadd.s32 %s222, 1
      %p226 = scmp.eq.s32.totalorder %s20, 3
      %p227 = scmp.ne.s32.totalorder %s222, %s224
      %p228 = scmp.eq.s32.totalorder %s20, 0
      %p229 = por %p227, %p228
      %p230 = scmp.ne.s32.totalorder %s222, %s224
      %p231 = scmp.eq.s32.totalorder %s25, 3
      %p232 = por %p230, %p231
      %p233 = scmp.ne.s32.totalorder %s224, %s225
      %p234 = scmp.eq.s32.totalorder %s25, 0
      %p235 = por %p233, %p234
      %p236 = scmp.ne.s32.totalorder %s224, %s225
      %p237 = scmp.eq.s32.totalorder %s26, 3
      %p238 = por %p236, %p237
      %p240 = scmp.ne.s32.totalorder %s225, %s239
      %p241 = scmp.eq.s32.totalorder %s26, 0
      %p242 = por %p240, %p241
      %s244 = sadd.s32 %s243, 1
      %p247 = scmp.eq.s32.totalorder %s20, 3
      %p248 = scmp.ne.s32.totalorder %s243, %s245
      %p249 = scmp.eq.s32.totalorder %s20, 0
      %p250 = por %p248, %p249
      %p251 = scmp.ne.s32.totalorder %s243, %s245
      %p252 = scmp.eq.s32.totalorder %s25, 3
      %p253 = por %p251, %p252
      %p254 = scmp.ne.s32.totalorder %s245, %s246
      %p255 = scmp.eq.s32.totalorder %s25, 0
      %p256 = por %p254, %p255
      %p257 = scmp.ne.s32.totalorder %s245, %s246
      %p258 = scmp.eq.s32.totalorder %s26, 3
      %p259 = por %p257, %p258
      %p261 = scmp.ne.s32.totalorder %s246, %s260
      %p262 = scmp.eq.s32.totalorder %s26, 0
      %p263 = por %p261, %p262
      %s265 = sadd.s32 %s264, 1
      %p268 = scmp.eq.s32.totalorder %s20, 3
      %p269 = scmp.ne.s32.totalorder %s264, %s266
      %p270 = scmp.eq.s32.totalorder %s20, 0
      %p271 = por %p269, %p270
      %p272 = scmp.ne.s32.totalorder %s264, %s266
      %p273 = scmp.eq.s32.totalorder %s25, 3
      %p274 = por %p272, %p273
      %p275 = scmp.ne.s32.totalorder %s266, %s267
      %p276 = scmp.eq.s32.totalorder %s25, 0
      %p277 = por %p275, %p276
      %p278 = scmp.ne.s32.totalorder %s266, %s267
      %p279 = scmp.eq.s32.totalorder %s26, 3
      %p280 = por %p278, %p279
      %p282 = scmp.ne.s32.totalorder %s267, %s281
      %p283 = scmp.eq.s32.totalorder %s26, 0
      %p284 = por %p282, %p283
      %s286 = sadd.s32 %s285, 1
      %p289 = scmp.eq.s32.totalorder %s20, 3
      %p290 = scmp.ne.s32.totalorder %s285, %s287
      %p291 = scmp.eq.s32.totalorder %s20, 0
      %p292 = por %p290, %p291
      %p293 = scmp.ne.s32.totalorder %s285, %s287
      %p294 = scmp.eq.s32.totalorder %s25, 3
      %p295 = por %p293, %p294
      %p296 = scmp.ne.s32.totalorder %s287, %s288
      %p297 = scmp.eq.s32.totalorder %s25, 0
      %p298 = por %p296, %p297
      %p299 = scmp.ne.s32.totalorder %s287, %s288
      %p300 = scmp.eq.s32.totalorder %s26, 3
      %p301 = por %p299, %p300
      %p303 = scmp.ne.s32.totalorder %s288, %s302
      %p304 = scmp.eq.s32.totalorder %s26, 0
      %p305 = por %p303, %p304
      %s306 = ssub.s32 %s20, %s27
      %p307 = scmp.eq.s32.totalorder %s306, 0
      %s309 = sadd.s32 %s308, 1
      %s310 = scalar_select %p307, %s308, %s309
      %p313 = pneg %p307
      %p314 = scmp.eq.s32.totalorder %s20, 3
      %p315 = por %p313, %p314
      %p316 = scmp.ne.s32.totalorder %s308, %s311
      %p317 = scmp.eq.s32.totalorder %s20, 0
      %p318 = por %p316, %p317
      %p319 = scmp.ne.s32.totalorder %s308, %s311
      %p320 = scmp.eq.s32.totalorder %s25, 3
      %p321 = por %p319, %p320
      %p322 = scmp.ne.s32.totalorder %s311, %s312
      %p323 = scmp.eq.s32.totalorder %s25, 0
      %p324 = por %p322, %p323
      %p325 = scmp.ne.s32.totalorder %s311, %s312
      %p326 = scmp.eq.s32.totalorder %s26, 3
      %p327 = por %p325, %p326
      %p329 = scmp.ne.s32.totalorder %s312, %s328
      %p330 = scmp.eq.s32.totalorder %s26, 0
      %p331 = por %p329, %p330
      %p332 = scmp.le.s32.totalorder 1, %s20
      %p333 = scmp.lt.s32.totalorder %s20, 5
      %p334 = pnand %p332, %p333
      %p335 = pneg %p334
      // Predicated region
      $region9: #{fan_forward.9} parent=5 // pred_check
        _
      $region10: #{fan_forward.9} parent=5 // pred_check_branch
        %337 = sbr.rel (%p334) target = $region12
      $region11: #{fan_forward.9} parent=5 // pred_region
        %s338 = ssub.s32 %s20, 1
        // Predicated region
        $region13: #{fan_forward.9} parent=11 // pred_check
          %p339 = pneg %p67
        $region14: #{fan_forward.9} parent=11 // pred_check_branch
          %341 = sbr.rel (%p339) target = $region16
        $region15: #{fan_forward.9} parent=11 // pred_region
          _
        $region16: #{fan_forward.9} parent=11 // pred_fallthru
          _
        // Predicated region
        $region17: #{fan_forward.9} parent=11 // pred_check
          %p342 = pneg %p88
        $region18: #{fan_forward.9} parent=11 // pred_check_branch
          %344 = sbr.rel (%p342) target = $region20
        $region19: #{fan_forward.9} parent=11 // pred_region
          _
        $region20: #{fan_forward.9} parent=11 // pred_fallthru
          _
        // Predicated region
        $region21: #{fan_forward.9} parent=11 // pred_check
          %p345 = pneg %p109
        $region22: #{fan_forward.9} parent=11 // pred_check_branch
          %347 = sbr.rel (%p345) target = $region24
        $region23: #{fan_forward.9} parent=11 // pred_region
          _
        $region24: #{fan_forward.9} parent=11 // pred_fallthru
          _
        // Predicated region
        $region25: #{fan_forward.9} parent=11 // pred_check
          %p348 = pneg %p130
        $region26: #{fan_forward.9} parent=11 // pred_check_branch
          %350 = sbr.rel (%p348) target = $region28
        $region27: #{fan_forward.9} parent=11 // pred_region
          _
        $region28: #{fan_forward.9} parent=11 // pred_fallthru
          _
        // Predicated region
        $region29: #{fan_forward.9} parent=11 // pred_check
          %p351 = pneg %p151
        $region30: #{fan_forward.9} parent=11 // pred_check_branch
          %353 = sbr.rel (%p351) target = $region32
        $region31: #{fan_forward.9} parent=11 // pred_region
          _
        $region32: #{fan_forward.9} parent=11 // pred_fallthru
          _
        // Predicated region
        $region33: #{fan_forward.9} parent=11 // pred_check
          %p354 = pneg %p172
        $region34: #{fan_forward.9} parent=11 // pred_check_branch
          %356 = sbr.rel (%p354) target = $region36
        $region35: #{fan_forward.9} parent=11 // pred_region
          _
        $region36: #{fan_forward.9} parent=11 // pred_fallthru
          _
        // Predicated region
        $region37: #{fan_forward.9} parent=11 // pred_check
          %p357 = pneg %p193
        $region38: #{fan_forward.9} parent=11 // pred_check_branch
          %359 = sbr.rel (%p357) target = $region40
        $region39: #{fan_forward.9} parent=11 // pred_region
          _
        $region40: #{fan_forward.9} parent=11 // pred_fallthru
          _
        // Predicated region
        $region41: #{fan_forward.9} parent=11 // pred_check
          %p360 = pneg %p214
        $region42: #{fan_forward.9} parent=11 // pred_check_branch
          %362 = sbr.rel (%p360) target = $region44
        $region43: #{fan_forward.9} parent=11 // pred_region
          _
        $region44: #{fan_forward.9} parent=11 // pred_fallthru
          _
        // Predicated region
        $region45: #{fan_forward.9} parent=11 // pred_check
          %p363 = pneg %p235
        $region46: #{fan_forward.9} parent=11 // pred_check_branch
          %365 = sbr.rel (%p363) target = $region48
        $region47: #{fan_forward.9} parent=11 // pred_region
          _
        $region48: #{fan_forward.9} parent=11 // pred_fallthru
          _
        // Predicated region
        $region49: #{fan_forward.9} parent=11 // pred_check
          %p366 = pneg %p256
        $region50: #{fan_forward.9} parent=11 // pred_check_branch
          %368 = sbr.rel (%p366) target = $region52
        $region51: #{fan_forward.9} parent=11 // pred_region
          _
        $region52: #{fan_forward.9} parent=11 // pred_fallthru
          _
        // Predicated region
        $region53: #{fan_forward.9} parent=11 // pred_check
          %p369 = pneg %p277
        $region54: #{fan_forward.9} parent=11 // pred_check_branch
          %371 = sbr.rel (%p369) target = $region56
        $region55: #{fan_forward.9} parent=11 // pred_region
          %s373 = ssub.s32 16, 16
          %374 = vsyncadd [#allocation3], %s373
          %s376 = sshll.u32 %s11, 4
          %s377 = int_to_ptr.vmem [resolvable:$true] %s376
          %379 = dma.vmem_to_smem %s377, 16, [#allocation2], [#allocation3]
        $region56: #{fan_forward.9} parent=11 // pred_fallthru
          _
        // Predicated region
        $region57: #{fan_forward.9} parent=11 // pred_check
          %p380 = pneg %p298
        $region58: #{fan_forward.9} parent=11 // pred_check_branch
          %382 = sbr.rel (%p380) target = $region60
        $region59: #{fan_forward.9} parent=11 // pred_region
          _
        $region60: #{fan_forward.9} parent=11 // pred_fallthru
          _
      $region12: #{fan_forward.9} parent=5 // pred_fallthru
        _
      %p383 = scmp.lt.s32.totalorder %s20, 4
      // Predicated region
      $region61: #{fan_forward.9} parent=5 // pred_check
        %p384 = pneg %p383
      $region62: #{fan_forward.9} parent=5 // pred_check_branch
        %386 = sbr.rel (%p384) target = $region64
      $region63: #{fan_forward.9} parent=5 // pred_region
        // Predicated region
        $region65: #{fan_forward.9} parent=63 // pred_check
          %p387 = pneg %p40
        $region66: #{fan_forward.9} parent=63 // pred_check_branch
          %389 = sbr.rel (%p387) target = $region68
        $region67: #{fan_forward.9} parent=63 // pred_region
          %p390 = scmp.lt.s32.totalorder %s20, 3
          %s391 = scalar_select %p390, %s20, 3
          %s392 = smul.addr %s391, 8
          %s393 = scalar_lea.vmem %s0, %s392
        $region68: #{fan_forward.9} parent=63 // pred_fallthru
          _
      $region64: #{fan_forward.9} parent=5 // pred_fallthru
        _
      %p394 = scmp.le.s32.totalorder 1, %s20
      %p395 = scmp.lt.s32.totalorder %s20, 5
      %p396 = pnand %p394, %p395
      %p397 = pneg %p396
      // Predicated region
      $region69: #{fan_forward.9} parent=5 // pred_check
        _
      $region70: #{fan_forward.9} parent=5 // pred_check_branch
        %399 = sbr.rel (%p396) target = $region72
      $region71: #{fan_forward.9} parent=5 // pred_region
        %s400 = ssub.s32 %s20, 1
        // Predicated region
        $region73: #{fan_forward.9} parent=71 // pred_check
          %p401 = pneg %p277
        $region74: #{fan_forward.9} parent=71 // pred_check_branch
          %403 = sbr.rel (%p401) target = $region76
        $region75: #{fan_forward.9} parent=71 // pred_region
          %404 = dma.done [#allocation3], 16
        $region76: #{fan_forward.9} parent=71 // pred_fallthru
          _
        %405 = sfence
        %p406 = scmp.lt.s32.totalorder %s25, 3
        %s407 = scalar_select %p406, %s25, 3
        %s408 = smul.addr %s407, 8
        %s409 = scalar_lea.vmem %s0, %s408
        %p410 = pneg %p46
        %p411 = pneg %p43
        %p412 = pneg %p67
        %p413 = pneg %p64
        %p414 = pneg %p88
        %p415 = pneg %p85
        %p416 = pneg %p109
        %p417 = pneg %p106
        %p418 = pneg %p130
        %p419 = pneg %p127
        %p420 = pneg %p151
        %p421 = pneg %p148
        %p422 = pneg %p172
        %p423 = pneg %p169
        %p424 = pneg %p193
        %p425 = pneg %p190
        %p426 = pneg %p214
        %p427 = pneg %p211
        %p428 = pneg %p235
        %p429 = pneg %p232
        %p430 = pneg %p256
        %p431 = pneg %p253
        %p432 = pneg %p277
        %p433 = pneg %p274
        %p434 = pneg %p298
        %p435 = pneg %p295
        %p436 = pneg %p324
        %p437 = pneg %p321
        %p438 = scmp.lt.s32.totalorder %s25, 3
        %s439 = scalar_select %p438, %s25, 3
        %s440 = smul.addr %s439, 8
        %s441 = scalar_lea.vmem %s13, %s440
        %p442 = scmp.lt.s32.totalorder %s25, 3
        %s443 = scalar_select %p442, %s25, 3
        %s444 = smul.addr %s443, 8
        %s445 = scalar_lea.vmem %s0, %s444
        %p446 = scmp.lt.s32.totalorder %s25, 3
        %s447 = scalar_select %p446, %s25, 3
        %s448 = smul.addr %s447, 8
        %s449 = scalar_lea.vmem %s13, %s448
        %v450 = vld [vmem:[%s445] sm:$0xff]
        %v451 = vld [vmem:[%s1] sm:$0xff]
        %v452 = vld [vmem:[%s1 + $0x8] sm:$0xff]
        %v453 = vld [vmem:[%s1 + $0x10] sm:$0xff]
        %v454 = vld [vmem:[%s1 + $0x18] sm:$0xff]
        %v455 = vld [vmem:[%s1 + $0x20] sm:$0xff]
        %v456 = vld [vmem:[%s1 + $0x28] sm:$0xff]
        %v457 = vld [vmem:[%s1 + $0x30] sm:$0xff]
        %v458 = vld [vmem:[%s1 + $0x38] sm:$0xff]
        %v459 = vld [vmem:[%s1 + $0x40] sm:$0xff]
        %v460 = vld [vmem:[%s1 + $0x48] sm:$0xff]
        %v461 = vld [vmem:[%s1 + $0x50] sm:$0xff]
        %v462 = vld [vmem:[%s1 + $0x58] sm:$0xff]
        %v463 = vld [vmem:[%s1 + $0x60] sm:$0xff]
        %v464 = vld [vmem:[%s1 + $0x68] sm:$0xff]
        %v465 = vld [vmem:[%s1 + $0x70] sm:$0xff]
        %v466 = vld [vmem:[%s1 + $0x78] sm:$0xff]
        %v467 = vld [vmem:[%s2] sm:$0x3]
        %v469 = vlaneseq
        %v470 = vshrl.u32 %v469, 7
        %v471 = vsub.s32 0, %v470
        %v472 = vrot.slane %v467, %v471
        %v473 = vlaneseq
        %v474 = vshrl.u32 %v473, 7
        %v475 = vsub.s32 1, %v474
        %v476 = vrot.slane %v467, %v475
        %vm479 = vcmask 523264
        %v481 = vsel %vm479, %v450, 0
        %483 = vmatprep.subr.mxu0 %v452
        %484 = vmatpush1.msra.mxu0 %v451
        %485 = vmatprep.subr.mxu0 %v454
        %486 = vmatpush1.msra.mxu0 %v453
        %487 = vmatprep.subr.mxu0 %v456
        %488 = vmatpush1.msra.mxu0 %v455
        %489 = vmatprep.subr.mxu0 %v458
        %490 = vmatpush1.msra.mxu0 %v457
        %491 = vmatprep.subr.mxu0 %v460
        %492 = vmatpush1.msra.mxu0 %v459
        %493 = vmatprep.subr.mxu0 %v462
        %494 = vmatpush1.msra.mxu0 %v461
        %495 = vmatprep.subr.mxu0 %v464
        %496 = vmatpush1.msra.mxu0 %v463
        %497 = vmatprep.subr.mxu0 %v466
        %498 = vmatpush1.msra.mxu0 %v465
        %499 = vmatprep.subr.mxu0 0.0
        %500 = vmatpush1.msra.mxu0 0.0
        %501 = vmatprep.subr.mxu0 0.0
        %502 = vmatpush1.msra.mxu0 0.0
        %503 = vmatprep.subr.mxu0 0.0
        %504 = vmatpush1.msra.mxu0 0.0
        %505 = vmatprep.subr.mxu0 0.0
        %506 = vmatpush1.msra.mxu0 0.0
        %507 = vmatprep.subr.mxu0 0.0
        %508 = vmatpush1.msra.mxu0 0.0
        %509 = vmatprep.subr.mxu0 0.0
        %510 = vmatpush1.msra.mxu0 0.0
        %511 = vmatprep.subr.mxu0 0.0
        %512 = vmatpush1.msra.mxu0 0.0
        %513 = vmatprep.subr.mxu0 0.0
        %514 = vmatpush1.msra.mxu0 0.0
        %515 = vmatprep.subr.mxu0 0.0
        %516 = vmatpush1.msra.mxu0 0.0
        %517 = vmatprep.subr.mxu0 0.0
        %518 = vmatpush1.msra.mxu0 0.0
        %519 = vmatprep.subr.mxu0 0.0
        %520 = vmatpush1.msra.mxu0 0.0
        %521 = vmatprep.subr.mxu0 0.0
        %522 = vmatpush1.msra.mxu0 0.0
        %523 = vmatprep.subr.mxu0 0.0
        %524 = vmatpush1.msra.mxu0 0.0
        %525 = vmatprep.subr.mxu0 0.0
        %526 = vmatpush1.msra.mxu0 0.0
        %527 = vmatprep.subr.mxu0 0.0
        %528 = vmatpush1.msra.mxu0 0.0
        %529 = vmatprep.subr.mxu0 0.0
        %530 = vmatpush1.msra.mxu0 0.0
        %531 = vmatprep.subr.mxu0 0.0
        %532 = vmatpush1.msra.mxu0 0.0
        %533 = vmatprep.subr.mxu0 0.0
        %534 = vmatpush1.msra.mxu0 0.0
        %535 = vmatprep.subr.mxu0 0.0
        %536 = vmatpush1.msra.mxu0 0.0
        %537 = vmatprep.subr.mxu0 0.0
        %538 = vmatpush1.msra.mxu0 0.0
        %539 = vmatprep.subr.mxu0 0.0
        %540 = vmatpush1.msra.mxu0 0.0
        %541 = vmatprep.subr.mxu0 0.0
        %542 = vmatpush1.msra.mxu0 0.0
        %543 = vmatprep.subr.mxu0 0.0
        %544 = vmatpush1.msra.mxu0 0.0
        %545 = vmatprep.subr.mxu0 0.0
        %546 = vmatpush1.msra.mxu0 0.0
        %547 = vmatprep.mubr.f32.mxu0 0.0
        %548 = vmatmul.mubr.f32.gmra.mrb[0].mxu0 %v481
        %v549 = vpop.f32.mrb[0].mxu0
        %v550 = vadd.f32 %v472, %v549
        %v551 = vpop.f32.mrb[0].mxu0
        %v552 = vadd.f32 %v476, %v551
        %553 = vdwg.mxu0
        %v554 = vld [vmem:[%s3] sm:$0xff]
        %v555 = vld [vmem:[%s3 + $0x8] sm:$0xff]
        %v556 = vld [vmem:[%s3 + $0x10] sm:$0xff]
        %v557 = vld [vmem:[%s3 + $0x18] sm:$0xff]
        %v558 = vld [vmem:[%s3 + $0x20] sm:$0xff]
        %v559 = vld [vmem:[%s3 + $0x28] sm:$0xff]
        %v560 = vld [vmem:[%s3 + $0x30] sm:$0xff]
        %v561 = vld [vmem:[%s3 + $0x38] sm:$0xff]
        %v562 = vld [vmem:[%s3 + $0x40] sm:$0xff]
        %v563 = vld [vmem:[%s3 + $0x48] sm:$0xff]
        %v564 = vld [vmem:[%s3 + $0x50] sm:$0xff]
        %v565 = vld [vmem:[%s3 + $0x58] sm:$0xff]
        %v566 = vld [vmem:[%s3 + $0x60] sm:$0xff]
        %v567 = vld [vmem:[%s3 + $0x68] sm:$0xff]
        %v568 = vld [vmem:[%s3 + $0x70] sm:$0xff]
        %v569 = vld [vmem:[%s3 + $0x78] sm:$0xff]
        %v570 = vld [vmem:[%s3 + $0x80] sm:$0xff]
        %v571 = vld [vmem:[%s3 + $0x88] sm:$0xff]
        %v572 = vld [vmem:[%s3 + $0x90] sm:$0xff]
        %v573 = vld [vmem:[%s3 + $0x98] sm:$0xff]
        %v574 = vld [vmem:[%s3 + $0xa0] sm:$0xff]
        %v575 = vld [vmem:[%s3 + $0xa8] sm:$0xff]
        %v576 = vld [vmem:[%s3 + $0xb0] sm:$0xff]
        %v577 = vld [vmem:[%s3 + $0xb8] sm:$0xff]
        %578 = vmatprep.subr.mxu0 %v555
        %579 = vmatpush1.msra.mxu0 %v554
        %580 = vmatprep.subr.mxu0 %v558
        %581 = vmatpush1.msra.mxu0 %v557
        %582 = vmatprep.subr.mxu0 %v561
        %583 = vmatpush1.msra.mxu0 %v560
        %584 = vmatprep.subr.mxu0 %v564
        %585 = vmatpush1.msra.mxu0 %v563
        %586 = vmatprep.subr.mxu0 %v567
        %587 = vmatpush1.msra.mxu0 %v566
        %588 = vmatprep.subr.mxu0 %v570
        %589 = vmatpush1.msra.mxu0 %v569
        %590 = vmatprep.subr.mxu0 %v573
        %591 = vmatpush1.msra.mxu0 %v572
        %592 = vmatprep.subr.mxu0 %v576
        %593 = vmatpush1.msra.mxu0 %v575
        %594 = vmatprep.subr.mxu0 0.0
        %595 = vmatpush1.msra.mxu0 0.0
        %596 = vmatprep.subr.mxu0 0.0
        %597 = vmatpush1.msra.mxu0 0.0
        %598 = vmatprep.subr.mxu0 0.0
        %599 = vmatpush1.msra.mxu0 0.0
        %600 = vmatprep.subr.mxu0 0.0
        %601 = vmatpush1.msra.mxu0 0.0
        %602 = vmatprep.subr.mxu0 0.0
        %603 = vmatpush1.msra.mxu0 0.0
        %604 = vmatprep.subr.mxu0 0.0
        %605 = vmatpush1.msra.mxu0 0.0
        %606 = vmatprep.subr.mxu0 0.0
        %607 = vmatpush1.msra.mxu0 0.0
        %608 = vmatprep.subr.mxu0 0.0
        %609 = vmatpush1.msra.mxu0 0.0
        %610 = vmatprep.subr.mxu0 0.0
        %611 = vmatpush1.msra.mxu0 0.0
        %612 = vmatprep.subr.mxu0 0.0
        %613 = vmatpush1.msra.mxu0 0.0
        %614 = vmatprep.subr.mxu0 0.0
        %615 = vmatpush1.msra.mxu0 0.0
        %616 = vmatprep.subr.mxu0 0.0
        %617 = vmatpush1.msra.mxu0 0.0
        %618 = vmatprep.subr.mxu0 0.0
        %619 = vmatpush1.msra.mxu0 0.0
        %620 = vmatprep.subr.mxu0 0.0
        %621 = vmatpush1.msra.mxu0 0.0
        %622 = vmatprep.subr.mxu0 0.0
        %623 = vmatpush1.msra.mxu0 0.0
        %624 = vmatprep.subr.mxu0 0.0
        %625 = vmatpush1.msra.mxu0 0.0
        %626 = vmatprep.subr.mxu0 0.0
        %627 = vmatpush1.msra.mxu0 0.0
        %628 = vmatprep.subr.mxu0 0.0
        %629 = vmatpush1.msra.mxu0 0.0
        %630 = vmatprep.subr.mxu0 0.0
        %631 = vmatpush1.msra.mxu0 0.0
        %632 = vmatprep.subr.mxu0 0.0
        %633 = vmatpush1.msra.mxu0 0.0
        %634 = vmatprep.subr.mxu0 0.0
        %635 = vmatpush1.msra.mxu0 0.0
        %636 = vmatprep.subr.mxu0 0.0
        %637 = vmatpush1.msra.mxu0 0.0
        %638 = vmatprep.subr.mxu0 0.0
        %639 = vmatpush1.msra.mxu0 0.0
        %640 = vmatprep.subr.mxu0 0.0
        %641 = vmatpush1.msra.mxu0 0.0
        %642 = vmatprep.mubr.f32.mxu0 0.0
        %643 = vmatmul.mubr.f32.gmra.mrb[0].mxu0 %v481
        %v644 = vpop.f32.mrb[0].mxu0
        %v645 = vadd.f32 0.0, %v644
        %v646 = vpop.f32.mrb[0].mxu0
        %v647 = vadd.f32 0.0, %v646
        %648 = vdwg.mxu0
        %649 = vmatprep.subr.mxu0 0.0
        %650 = vmatpush1.msra.mxu0 %v556
        %651 = vmatprep.subr.mxu0 0.0
        %652 = vmatpush1.msra.mxu0 %v559
        %653 = vmatprep.subr.mxu0 0.0
        %654 = vmatpush1.msra.mxu0 %v562
        %655 = vmatprep.subr.mxu0 0.0
        %656 = vmatpush1.msra.mxu0 %v565
        %657 = vmatprep.subr.mxu0 0.0
        %658 = vmatpush1.msra.mxu0 %v568
        %659 = vmatprep.subr.mxu0 0.0
        %660 = vmatpush1.msra.mxu0 %v571
        %661 = vmatprep.subr.mxu0 0.0
        %662 = vmatpush1.msra.mxu0 %v574
        %663 = vmatprep.subr.mxu0 0.0
        %664 = vmatpush1.msra.mxu0 %v577
        %665 = vmatprep.subr.mxu0 0.0
        %666 = vmatpush1.msra.mxu0 0.0
        %667 = vmatprep.subr.mxu0 0.0
        %668 = vmatpush1.msra.mxu0 0.0
        %669 = vmatprep.subr.mxu0 0.0
        %670 = vmatpush1.msra.mxu0 0.0
        %671 = vmatprep.subr.mxu0 0.0
        %672 = vmatpush1.msra.mxu0 0.0
        %673 = vmatprep.subr.mxu0 0.0
        %674 = vmatpush1.msra.mxu0 0.0
        %675 = vmatprep.subr.mxu0 0.0
        %676 = vmatpush1.msra.mxu0 0.0
        %677 = vmatprep.subr.mxu0 0.0
        %678 = vmatpush1.msra.mxu0 0.0
        %679 = vmatprep.subr.mxu0 0.0
        %680 = vmatpush1.msra.mxu0 0.0
        %681 = vmatprep.subr.mxu0 0.0
        %682 = vmatpush1.msra.mxu0 0.0
        %683 = vmatprep.subr.mxu0 0.0
        %684 = vmatpush1.msra.mxu0 0.0
        %685 = vmatprep.subr.mxu0 0.0
        %686 = vmatpush1.msra.mxu0 0.0
        %687 = vmatprep.subr.mxu0 0.0
        %688 = vmatpush1.msra.mxu0 0.0
        %689 = vmatprep.subr.mxu0 0.0
        %690 = vmatpush1.msra.mxu0 0.0
        %691 = vmatprep.subr.mxu0 0.0
        %692 = vmatpush1.msra.mxu0 0.0
        %693 = vmatprep.subr.mxu0 0.0
        %694 = vmatpush1.msra.mxu0 0.0
        %695 = vmatprep.subr.mxu0 0.0
        %696 = vmatpush1.msra.mxu0 0.0
        %697 = vmatprep.subr.mxu0 0.0
        %698 = vmatpush1.msra.mxu0 0.0
        %699 = vmatprep.subr.mxu0 0.0
        %700 = vmatpush1.msra.mxu0 0.0
        %701 = vmatprep.subr.mxu0 0.0
        %702 = vmatpush1.msra.mxu0 0.0
        %703 = vmatprep.subr.mxu0 0.0
        %704 = vmatpush1.msra.mxu0 0.0
        %705 = vmatprep.subr.mxu0 0.0
        %706 = vmatpush1.msra.mxu0 0.0
        %707 = vmatprep.subr.mxu0 0.0
        %708 = vmatpush1.msra.mxu0 0.0
        %709 = vmatprep.subr.mxu0 0.0
        %710 = vmatpush1.msra.mxu0 0.0
        %711 = vmatprep.subr.mxu0 0.0
        %712 = vmatpush1.msra.mxu0 0.0
        %713 = vmatprep.mubr.f32.mxu0 0.0
        %714 = vmatmul.mubr.f32.gmra.mrb[0].mxu0 %v481
        %v715 = vpop.f32.mrb[0].mxu0
        %v716 = vadd.f32 0.0, %v715
        %v717 = vpop.f32.mrb[0].mxu0
        %718 = vdwg.mxu0
        %720 = vrot.lane.b32.xlu0 %v550, 32
        %v721 = vpop.permute.xlu0 %720
        %vm722 = vcmask 261120
        %v723 = vsel %vm722, %v721, 0
        %v725 = vsel %vm722, %v550, 0
        %727 = vmatprep.subr.mxu0 0.0
        %728 = vmatpush1.xpose.msra.mxu0 %v725
        %729 = vmatprep.subr.mxu0 0.0
        %730 = vmatpush1.xpose.msra.mxu0 0.0
        %731 = vmatprep.subr.mxu0 0.0
        %732 = vmatpush1.xpose.msra.mxu0 0.0
        %733 = vmatprep.subr.mxu0 0.0
        %734 = vmatpush1.xpose.msra.mxu0 0.0
        %735 = vmatprep.subr.mxu0 0.0
        %736 = vmatpush1.xpose.msra.mxu0 0.0
        %737 = vmatprep.subr.mxu0 0.0
        %738 = vmatpush1.xpose.msra.mxu0 0.0
        %739 = vmatprep.subr.mxu0 0.0
        %740 = vmatpush1.xpose.msra.mxu0 0.0
        %741 = vmatprep.subr.mxu0 0.0
        %742 = vmatpush1.xpose.msra.mxu0 0.0
        %743 = vmatprep.subr.mxu0 0.0
        %744 = vmatpush1.xpose.msra.mxu0 0.0
        %745 = vmatprep.subr.mxu0 0.0
        %746 = vmatpush1.xpose.msra.mxu0 0.0
        %747 = vmatprep.subr.mxu0 0.0
        %748 = vmatpush1.xpose.msra.mxu0 0.0
        %749 = vmatprep.subr.mxu0 0.0
        %750 = vmatpush1.xpose.msra.mxu0 0.0
        %751 = vmatprep.subr.mxu0 0.0
        %752 = vmatpush1.xpose.msra.mxu0 0.0
        %753 = vmatprep.subr.mxu0 0.0
        %754 = vmatpush1.xpose.msra.mxu0 0.0
        %755 = vmatprep.subr.mxu0 0.0
        %756 = vmatpush1.xpose.msra.mxu0 0.0
        %757 = vmatprep.subr.mxu0 0.0
        %758 = vmatpush1.xpose.msra.mxu0 0.0
        %759 = vmatprep.subr.mxu0 0.0
        %760 = vmatpush1.xpose.msra.mxu0 0.0
        %761 = vmatprep.subr.mxu0 0.0
        %762 = vmatpush1.xpose.msra.mxu0 0.0
        %763 = vmatprep.subr.mxu0 0.0
        %764 = vmatpush1.xpose.msra.mxu0 0.0
        %765 = vmatprep.subr.mxu0 0.0
        %766 = vmatpush1.xpose.msra.mxu0 0.0
        %767 = vmatprep.subr.mxu0 0.0
        %768 = vmatpush1.xpose.msra.mxu0 0.0
        %769 = vmatprep.subr.mxu0 0.0
        %770 = vmatpush1.xpose.msra.mxu0 0.0
        %771 = vmatprep.subr.mxu0 0.0
        %772 = vmatpush1.xpose.msra.mxu0 0.0
        %773 = vmatprep.subr.mxu0 0.0
        %774 = vmatpush1.xpose.msra.mxu0 0.0
        %775 = vmatprep.subr.mxu0 0.0
        %776 = vmatpush1.xpose.msra.mxu0 0.0
        %777 = vmatprep.subr.mxu0 0.0
        %778 = vmatpush1.xpose.msra.mxu0 0.0
        %779 = vmatprep.subr.mxu0 0.0
        %780 = vmatpush1.xpose.msra.mxu0 0.0
        %781 = vmatprep.subr.mxu0 0.0
        %782 = vmatpush1.xpose.msra.mxu0 0.0
        %783 = vmatprep.subr.mxu0 0.0
        %784 = vmatpush1.xpose.msra.mxu0 0.0
        %785 = vmatprep.subr.mxu0 0.0
        %786 = vmatpush1.xpose.msra.mxu0 0.0
        %787 = vmatprep.subr.mxu0 0.0
        %788 = vmatpush1.xpose.msra.mxu0 0.0
        %789 = vmatprep.subr.mxu0 0.0
        %790 = vmatpush1.xpose.msra.mxu0 0.0
        %791 = vmatprep.mubr.f32.mxu0 0.0
        %792 = vmatmul.mubr.f32.gmra.mrb[0].mxu0 %v723
        %v793 = vpop.f32.mrb[0].mxu0
        %v794 = vadd.f32 0.0, %v793
        %v795 = vpop.f32.mrb[0].mxu0
        %796 = vdwg.mxu0
        %v797 = vmul.f32 %v794, 0.03125
        %v798 = vtanh.pop %v797
        %s799 = sld [smem:[#allocation2]]
        %v800 = vstv %s799
        %v801 = vmul.f32 %v798, %v800
        %v802 = vld [vmem:[%s12] sm:$0xff]
        %v803 = vadd.f32 %v801, %v802
        %804 = vrot.lane.b32.xlu0 %v550, 96
        %v805 = vpop.permute.xlu0 %804
        %v807 = vsel %vm722, %v552, 0
        %v809 = vsel %vm722, %v805, 0
        %811 = vmatprep.subr.mxu0 0.0
        %812 = vmatpush1.xpose.msra.mxu0 %v809
        %813 = vmatprep.subr.mxu0 0.0
        %814 = vmatpush1.xpose.msra.mxu0 0.0
        %815 = vmatprep.subr.mxu0 0.0
        %816 = vmatpush1.xpose.msra.mxu0 0.0
        %817 = vmatprep.subr.mxu0 0.0
        %818 = vmatpush1.xpose.msra.mxu0 0.0
        %819 = vmatprep.subr.mxu0 0.0
        %820 = vmatpush1.xpose.msra.mxu0 0.0
        %821 = vmatprep.subr.mxu0 0.0
        %822 = vmatpush1.xpose.msra.mxu0 0.0
        %823 = vmatprep.subr.mxu0 0.0
        %824 = vmatpush1.xpose.msra.mxu0 0.0
        %825 = vmatprep.subr.mxu0 0.0
        %826 = vmatpush1.xpose.msra.mxu0 0.0
        %827 = vmatprep.subr.mxu0 0.0
        %828 = vmatpush1.xpose.msra.mxu0 0.0
        %829 = vmatprep.subr.mxu0 0.0
        %830 = vmatpush1.xpose.msra.mxu0 0.0
        %831 = vmatprep.subr.mxu0 0.0
        %832 = vmatpush1.xpose.msra.mxu0 0.0
        %833 = vmatprep.subr.mxu0 0.0
        %834 = vmatpush1.xpose.msra.mxu0 0.0
        %835 = vmatprep.subr.mxu0 0.0
        %836 = vmatpush1.xpose.msra.mxu0 0.0
        %837 = vmatprep.subr.mxu0 0.0
        %838 = vmatpush1.xpose.msra.mxu0 0.0
        %839 = vmatprep.subr.mxu0 0.0
        %840 = vmatpush1.xpose.msra.mxu0 0.0
        %841 = vmatprep.subr.mxu0 0.0
        %842 = vmatpush1.xpose.msra.mxu0 0.0
        %843 = vmatprep.subr.mxu0 0.0
        %844 = vmatpush1.xpose.msra.mxu0 0.0
        %845 = vmatprep.subr.mxu0 0.0
        %846 = vmatpush1.xpose.msra.mxu0 0.0
        %847 = vmatprep.subr.mxu0 0.0
        %848 = vmatpush1.xpose.msra.mxu0 0.0
        %849 = vmatprep.subr.mxu0 0.0
        %850 = vmatpush1.xpose.msra.mxu0 0.0
        %851 = vmatprep.subr.mxu0 0.0
        %852 = vmatpush1.xpose.msra.mxu0 0.0
        %853 = vmatprep.subr.mxu0 0.0
        %854 = vmatpush1.xpose.msra.mxu0 0.0
        %855 = vmatprep.subr.mxu0 0.0
        %856 = vmatpush1.xpose.msra.mxu0 0.0
        %857 = vmatprep.subr.mxu0 0.0
        %858 = vmatpush1.xpose.msra.mxu0 0.0
        %859 = vmatprep.subr.mxu0 0.0
        %860 = vmatpush1.xpose.msra.mxu0 0.0
        %861 = vmatprep.subr.mxu0 0.0
        %862 = vmatpush1.xpose.msra.mxu0 0.0
        %863 = vmatprep.subr.mxu0 0.0
        %864 = vmatpush1.xpose.msra.mxu0 0.0
        %865 = vmatprep.subr.mxu0 0.0
        %866 = vmatpush1.xpose.msra.mxu0 0.0
        %867 = vmatprep.subr.mxu0 0.0
        %868 = vmatpush1.xpose.msra.mxu0 0.0
        %869 = vmatprep.subr.mxu0 0.0
        %870 = vmatpush1.xpose.msra.mxu0 0.0
        %871 = vmatprep.subr.mxu0 0.0
        %872 = vmatpush1.xpose.msra.mxu0 0.0
        %873 = vmatprep.subr.mxu0 0.0
        %874 = vmatpush1.xpose.msra.mxu0 0.0
        %875 = vmatprep.mubr.f32.mxu0 0.0
        %876 = vmatmul.mubr.f32.gmra.mrb[0].mxu0 %v807
        %v877 = vpop.f32.mrb[0].mxu0
        %v878 = vadd.f32 0.0, %v877
        %v879 = vpop.f32.mrb[0].mxu0
        %880 = vdwg.mxu0
        %v881 = vmul.f32 %v878, 0.03125
        %v882 = vtanh.pop %v881
        %s883 = sld [smem:[#allocation2 + $0x1]]
        %v884 = vstv %s883
        %v885 = vmul.f32 %v882, %v884
        %s886 = scalar_lea.vmem %s12, 8
        %v887 = vld [vmem:[%s886] sm:$0xff]
        %v888 = vadd.f32 %v885, %v887
        %vm889 = vcmask 64512
        %v891 = vsel %vm889, %v888, 0
        %893 = vmatprep.subr.mxu0 0.0
        %894 = vmatpush1.msra.mxu0 %v647
        %895 = vmatprep.subr.mxu0 0.0
        %896 = vmatpush1.msra.mxu0 0.0
        %897 = vmatprep.subr.mxu0 0.0
        %898 = vmatpush1.msra.mxu0 0.0
        %899 = vmatprep.subr.mxu0 0.0
        %900 = vmatpush1.msra.mxu0 0.0
        %901 = vmatprep.subr.mxu0 0.0
        %902 = vmatpush1.msra.mxu0 0.0
        %903 = vmatprep.subr.mxu0 0.0
        %904 = vmatpush1.msra.mxu0 0.0
        %905 = vmatprep.subr.mxu0 0.0
        %906 = vmatpush1.msra.mxu0 0.0
        %907 = vmatprep.subr.mxu0 0.0
        %908 = vmatpush1.msra.mxu0 0.0
        %909 = vmatprep.subr.mxu0 0.0
        %910 = vmatpush1.msra.mxu0 0.0
        %911 = vmatprep.subr.mxu0 0.0
        %912 = vmatpush1.msra.mxu0 0.0
        %913 = vmatprep.subr.mxu0 0.0
        %914 = vmatpush1.msra.mxu0 0.0
        %915 = vmatprep.subr.mxu0 0.0
        %916 = vmatpush1.msra.mxu0 0.0
        %917 = vmatprep.subr.mxu0 0.0
        %918 = vmatpush1.msra.mxu0 0.0
        %919 = vmatprep.subr.mxu0 0.0
        %920 = vmatpush1.msra.mxu0 0.0
        %921 = vmatprep.subr.mxu0 0.0
        %922 = vmatpush1.msra.mxu0 0.0
        %923 = vmatprep.subr.mxu0 0.0
        %924 = vmatpush1.msra.mxu0 0.0
        %925 = vmatprep.subr.mxu0 0.0
        %926 = vmatpush1.msra.mxu0 0.0
        %927 = vmatprep.subr.mxu0 0.0
        %928 = vmatpush1.msra.mxu0 0.0
        %929 = vmatprep.subr.mxu0 0.0
        %930 = vmatpush1.msra.mxu0 0.0
        %931 = vmatprep.subr.mxu0 0.0
        %932 = vmatpush1.msra.mxu0 0.0
        %933 = vmatprep.subr.mxu0 0.0
        %934 = vmatpush1.msra.mxu0 0.0
        %935 = vmatprep.subr.mxu0 0.0
        %936 = vmatpush1.msra.mxu0 0.0
        %937 = vmatprep.subr.mxu0 0.0
        %938 = vmatpush1.msra.mxu0 0.0
        %939 = vmatprep.subr.mxu0 0.0
        %940 = vmatpush1.msra.mxu0 0.0
        %941 = vmatprep.subr.mxu0 0.0
        %942 = vmatpush1.msra.mxu0 0.0
        %943 = vmatprep.subr.mxu0 0.0
        %944 = vmatpush1.msra.mxu0 0.0
        %945 = vmatprep.subr.mxu0 0.0
        %946 = vmatpush1.msra.mxu0 0.0
        %947 = vmatprep.subr.mxu0 0.0
        %948 = vmatpush1.msra.mxu0 0.0
        %949 = vmatprep.subr.mxu0 0.0
        %950 = vmatpush1.msra.mxu0 0.0
        %951 = vmatprep.subr.mxu0 0.0
        %952 = vmatpush1.msra.mxu0 0.0
        %953 = vmatprep.subr.mxu0 0.0
        %954 = vmatpush1.msra.mxu0 0.0
        %955 = vmatprep.subr.mxu0 0.0
        %956 = vmatpush1.msra.mxu0 0.0
        %957 = vmatprep.mubr.f32.mxu0 0.0
        %958 = vmatmul.mubr.f32.gmra.mrb[0].mxu0 %v891
        %v959 = vpop.f32.mrb[0].mxu0
        %v960 = vadd.f32 0.0, %v959
        %v961 = vpop.f32.mrb[0].mxu0
        %962 = vdwg.mxu0
        %v964 = vsel %vm889, %v803, 0
        %966 = vmatprep.subr.mxu0 0.0
        %967 = vmatpush1.msra.mxu0 %v645
        %968 = vmatprep.subr.mxu0 0.0
        %969 = vmatpush1.msra.mxu0 0.0
        %970 = vmatprep.subr.mxu0 0.0
        %971 = vmatpush1.msra.mxu0 0.0
        %972 = vmatprep.subr.mxu0 0.0
        %973 = vmatpush1.msra.mxu0 0.0
        %974 = vmatprep.subr.mxu0 0.0
        %975 = vmatpush1.msra.mxu0 0.0
        %976 = vmatprep.subr.mxu0 0.0
        %977 = vmatpush1.msra.mxu0 0.0
        %978 = vmatprep.subr.mxu0 0.0
        %979 = vmatpush1.msra.mxu0 0.0
        %980 = vmatprep.subr.mxu0 0.0
        %981 = vmatpush1.msra.mxu0 0.0
        %982 = vmatprep.subr.mxu0 0.0
        %983 = vmatpush1.msra.mxu0 0.0
        %984 = vmatprep.subr.mxu0 0.0
        %985 = vmatpush1.msra.mxu0 0.0
        %986 = vmatprep.subr.mxu0 0.0
        %987 = vmatpush1.msra.mxu0 0.0
        %988 = vmatprep.subr.mxu0 0.0
        %989 = vmatpush1.msra.mxu0 0.0
        %990 = vmatprep.subr.mxu0 0.0
        %991 = vmatpush1.msra.mxu0 0.0
        %992 = vmatprep.subr.mxu0 0.0
        %993 = vmatpush1.msra.mxu0 0.0
        %994 = vmatprep.subr.mxu0 0.0
        %995 = vmatpush1.msra.mxu0 0.0
        %996 = vmatprep.subr.mxu0 0.0
        %997 = vmatpush1.msra.mxu0 0.0
        %998 = vmatprep.subr.mxu0 0.0
        %999 = vmatpush1.msra.mxu0 0.0
        %1000 = vmatprep.subr.mxu0 0.0
        %1001 = vmatpush1.msra.mxu0 0.0
        %1002 = vmatprep.subr.mxu0 0.0
        %1003 = vmatpush1.msra.mxu0 0.0
        %1004 = vmatprep.subr.mxu0 0.0
        %1005 = vmatpush1.msra.mxu0 0.0
        %1006 = vmatprep.subr.mxu0 0.0
        %1007 = vmatpush1.msra.mxu0 0.0
        %1008 = vmatprep.subr.mxu0 0.0
        %1009 = vmatpush1.msra.mxu0 0.0
        %1010 = vmatprep.subr.mxu0 0.0
        %1011 = vmatpush1.msra.mxu0 0.0
        %1012 = vmatprep.subr.mxu0 0.0
        %1013 = vmatpush1.msra.mxu0 0.0
        %1014 = vmatprep.subr.mxu0 0.0
        %1015 = vmatpush1.msra.mxu0 0.0
        %1016 = vmatprep.subr.mxu0 0.0
        %1017 = vmatpush1.msra.mxu0 0.0
        %1018 = vmatprep.subr.mxu0 0.0
        %1019 = vmatpush1.msra.mxu0 0.0
        %1020 = vmatprep.subr.mxu0 0.0
        %1021 = vmatpush1.msra.mxu0 0.0
        %1022 = vmatprep.subr.mxu0 0.0
        %1023 = vmatpush1.msra.mxu0 0.0
        %1024 = vmatprep.subr.mxu0 0.0
        %1025 = vmatpush1.msra.mxu0 0.0
        %1026 = vmatprep.subr.mxu0 0.0
        %1027 = vmatpush1.msra.mxu0 0.0
        %1028 = vmatprep.subr.mxu0 0.0
        %1029 = vmatpush1.msra.mxu0 0.0
        %1030 = vmatprep.mubr.f32.mxu0 0.0
        %1031 = vmatmul.mubr.f32.gmra.mrb[0].mxu0 %v964
        %v1032 = vpop.f32.mrb[0].mxu0
        %v1033 = vadd.f32 %v960, %v1032
        %v1034 = vpop.f32.mrb[0].mxu0
        %1035 = vdwg.mxu0
        %1036 = vrot.lane.b32.xlu0 %v552, 96
        %v1037 = vpop.permute.xlu0 %1036
        %1038 = vrot.lane.b32.xlu0 %v550, 64
        %v1039 = vpop.permute.xlu0 %1038
        %v1040 = vsel %vm722, %v1037, 0
        %v1042 = vsel %vm722, %v1039, 0
        %1044 = vmatprep.subr.mxu0 0.0
        %1045 = vmatpush1.xpose.msra.mxu0 %v1042
        %1046 = vmatprep.subr.mxu0 0.0
        %1047 = vmatpush1.xpose.msra.mxu0 0.0
        %1048 = vmatprep.subr.mxu0 0.0
        %1049 = vmatpush1.xpose.msra.mxu0 0.0
        %1050 = vmatprep.subr.mxu0 0.0
        %1051 = vmatpush1.xpose.msra.mxu0 0.0
        %1052 = vmatprep.subr.mxu0 0.0
        %1053 = vmatpush1.xpose.msra.mxu0 0.0
        %1054 = vmatprep.subr.mxu0 0.0
        %1055 = vmatpush1.xpose.msra.mxu0 0.0
        %1056 = vmatprep.subr.mxu0 0.0
        %1057 = vmatpush1.xpose.msra.mxu0 0.0
        %1058 = vmatprep.subr.mxu0 0.0
        %1059 = vmatpush1.xpose.msra.mxu0 0.0
        %1060 = vmatprep.subr.mxu0 0.0
        %1061 = vmatpush1.xpose.msra.mxu0 0.0
        %1062 = vmatprep.subr.mxu0 0.0
        %1063 = vmatpush1.xpose.msra.mxu0 0.0
        %1064 = vmatprep.subr.mxu0 0.0
        %1065 = vmatpush1.xpose.msra.mxu0 0.0
        %1066 = vmatprep.subr.mxu0 0.0
        %1067 = vmatpush1.xpose.msra.mxu0 0.0
        %1068 = vmatprep.subr.mxu0 0.0
        %1069 = vmatpush1.xpose.msra.mxu0 0.0
        %1070 = vmatprep.subr.mxu0 0.0
        %1071 = vmatpush1.xpose.msra.mxu0 0.0
        %1072 = vmatprep.subr.mxu0 0.0
        %1073 = vmatpush1.xpose.msra.mxu0 0.0
        %1074 = vmatprep.subr.mxu0 0.0
        %1075 = vmatpush1.xpose.msra.mxu0 0.0
        %1076 = vmatprep.subr.mxu0 0.0
        %1077 = vmatpush1.xpose.msra.mxu0 0.0
        %1078 = vmatprep.subr.mxu0 0.0
        %1079 = vmatpush1.xpose.msra.mxu0 0.0
        %1080 = vmatprep.subr.mxu0 0.0
        %1081 = vmatpush1.xpose.msra.mxu0 0.0
        %1082 = vmatprep.subr.mxu0 0.0
        %1083 = vmatpush1.xpose.msra.mxu0 0.0
        %1084 = vmatprep.subr.mxu0 0.0
        %1085 = vmatpush1.xpose.msra.mxu0 0.0
        %1086 = vmatprep.subr.mxu0 0.0
        %1087 = vmatpush1.xpose.msra.mxu0 0.0
        %1088 = vmatprep.subr.mxu0 0.0
        %1089 = vmatpush1.xpose.msra.mxu0 0.0
        %1090 = vmatprep.subr.mxu0 0.0
        %1091 = vmatpush1.xpose.msra.mxu0 0.0
        %1092 = vmatprep.subr.mxu0 0.0
        %1093 = vmatpush1.xpose.msra.mxu0 0.0
        %1094 = vmatprep.subr.mxu0 0.0
        %1095 = vmatpush1.xpose.msra.mxu0 0.0
        %1096 = vmatprep.subr.mxu0 0.0
        %1097 = vmatpush1.xpose.msra.mxu0 0.0
        %1098 = vmatprep.subr.mxu0 0.0
        %1099 = vmatpush1.xpose.msra.mxu0 0.0
        %1100 = vmatprep.subr.mxu0 0.0
        %1101 = vmatpush1.xpose.msra.mxu0 0.0
        %1102 = vmatprep.subr.mxu0 0.0
        %1103 = vmatpush1.xpose.msra.mxu0 0.0
        %1104 = vmatprep.subr.mxu0 0.0
        %1105 = vmatpush1.xpose.msra.mxu0 0.0
        %1106 = vmatprep.subr.mxu0 0.0
        %1107 = vmatpush1.xpose.msra.mxu0 0.0
        %1108 = vmatprep.mubr.f32.mxu0 0.0
        %1109 = vmatmul.mubr.f32.gmra.mrb[0].mxu0 %v1040
        %v1110 = vpop.f32.mrb[0].mxu0
        %v1111 = vadd.f32 0.0, %v1110
        %v1112 = vpop.f32.mrb[0].mxu0
        %1113 = vdwg.mxu0
        %v1114 = vmul.f32 %v1111, 0.03125
        %v1115 = vtanh.pop %v1114
        %s1116 = sld [smem:[#allocation2 + $0x2]]
        %v1117 = vstv %s1116
        %v1118 = vmul.f32 %v1115, %v1117
        %s1119 = scalar_lea.vmem %s12, 16
        %v1120 = vld [vmem:[%s1119] sm:$0xff]
        %v1121 = vadd.f32 %v1118, %v1120
        %v1123 = vsel %vm889, %v1121, 0
        %1125 = vmatprep.subr.mxu0 0.0
        %1126 = vmatpush1.msra.mxu0 %v716
        %1127 = vmatprep.subr.mxu0 0.0
        %1128 = vmatpush1.msra.mxu0 0.0
        %1129 = vmatprep.subr.mxu0 0.0
        %1130 = vmatpush1.msra.mxu0 0.0
        %1131 = vmatprep.subr.mxu0 0.0
        %1132 = vmatpush1.msra.mxu0 0.0
        %1133 = vmatprep.subr.mxu0 0.0
        %1134 = vmatpush1.msra.mxu0 0.0
        %1135 = vmatprep.subr.mxu0 0.0
        %1136 = vmatpush1.msra.mxu0 0.0
        %1137 = vmatprep.subr.mxu0 0.0
        %1138 = vmatpush1.msra.mxu0 0.0
        %1139 = vmatprep.subr.mxu0 0.0
        %1140 = vmatpush1.msra.mxu0 0.0
        %1141 = vmatprep.subr.mxu0 0.0
        %1142 = vmatpush1.msra.mxu0 0.0
        %1143 = vmatprep.subr.mxu0 0.0
        %1144 = vmatpush1.msra.mxu0 0.0
        %1145 = vmatprep.subr.mxu0 0.0
        %1146 = vmatpush1.msra.mxu0 0.0
        %1147 = vmatprep.subr.mxu0 0.0
        %1148 = vmatpush1.msra.mxu0 0.0
        %1149 = vmatprep.subr.mxu0 0.0
        %1150 = vmatpush1.msra.mxu0 0.0
        %1151 = vmatprep.subr.mxu0 0.0
        %1152 = vmatpush1.msra.mxu0 0.0
        %1153 = vmatprep.subr.mxu0 0.0
        %1154 = vmatpush1.msra.mxu0 0.0
        %1155 = vmatprep.subr.mxu0 0.0
        %1156 = vmatpush1.msra.mxu0 0.0
        %1157 = vmatprep.subr.mxu0 0.0
        %1158 = vmatpush1.msra.mxu0 0.0
        %1159 = vmatprep.subr.mxu0 0.0
        %1160 = vmatpush1.msra.mxu0 0.0
        %1161 = vmatprep.subr.mxu0 0.0
        %1162 = vmatpush1.msra.mxu0 0.0
        %1163 = vmatprep.subr.mxu0 0.0
        %1164 = vmatpush1.msra.mxu0 0.0
        %1165 = vmatprep.subr.mxu0 0.0
        %1166 = vmatpush1.msra.mxu0 0.0
        %1167 = vmatprep.subr.mxu0 0.0
        %1168 = vmatpush1.msra.mxu0 0.0
        %1169 = vmatprep.subr.mxu0 0.0
        %1170 = vmatpush1.msra.mxu0 0.0
        %1171 = vmatprep.subr.mxu0 0.0
        %1172 = vmatpush1.msra.mxu0 0.0
        %1173 = vmatprep.subr.mxu0 0.0
        %1174 = vmatpush1.msra.mxu0 0.0
        %1175 = vmatprep.subr.mxu0 0.0
        %1176 = vmatpush1.msra.mxu0 0.0
        %1177 = vmatprep.subr.mxu0 0.0
        %1178 = vmatpush1.msra.mxu0 0.0
        %1179 = vmatprep.subr.mxu0 0.0
        %1180 = vmatpush1.msra.mxu0 0.0
        %1181 = vmatprep.subr.mxu0 0.0
        %1182 = vmatpush1.msra.mxu0 0.0
        %1183 = vmatprep.subr.mxu0 0.0
        %1184 = vmatpush1.msra.mxu0 0.0
        %1185 = vmatprep.subr.mxu0 0.0
        %1186 = vmatpush1.msra.mxu0 0.0
        %1187 = vmatprep.subr.mxu0 0.0
        %1188 = vmatpush1.msra.mxu0 0.0
        %1189 = vmatprep.mubr.f32.mxu0 0.0
        %1190 = vmatmul.mubr.f32.gmra.mrb[0].mxu0 %v1123
        %v1191 = vpop.f32.mrb[0].mxu0
        %v1192 = vadd.f32 0.0, %v1191
        %v1193 = vpop.f32.mrb[0].mxu0
        %1194 = vdwg.mxu0
        %v1195 = vadd.f32 %v1033, %v1192
        %v1196 = vld [vmem:[%s4] sm:$0x1]
        %v1198 = vlaneseq
        %v1199 = vshrl.u32 %v1198, 7
        %v1200 = vsub.s32 0, %v1199
        %v1201 = vrot.slane %v1196, %v1200
        %v1203 = vadd.f32 %v1195, %v1201
        %v1204 = vld [vmem:[%s5] sm:$0xff]
        %v1205 = vld [vmem:[%s5 + $0x8] sm:$0xff]
        %v1206 = vld [vmem:[%s5 + $0x10] sm:$0xff]
        %v1207 = vld [vmem:[%s5 + $0x18] sm:$0xff]
        %v1208 = vld [vmem:[%s5 + $0x20] sm:$0xff]
        %v1209 = vld [vmem:[%s5 + $0x28] sm:$0xff]
        %v1210 = vld [vmem:[%s5 + $0x30] sm:$0xff]
        %v1211 = vld [vmem:[%s5 + $0x38] sm:$0xff]
        %v1212 = vld [vmem:[%s6] sm:$0x1]
        %v1214 = vlaneseq
        %v1215 = vshrl.u32 %v1214, 7
        %v1216 = vsub.s32 0, %v1215
        %v1217 = vrot.slane %v1212, %v1216
        %1219 = vmatprep.subr.mxu0 0.0
        %1220 = vmatpush1.msra.mxu0 %v1204
        %1221 = vmatprep.subr.mxu0 0.0
        %1222 = vmatpush1.msra.mxu0 %v1205
        %1223 = vmatprep.subr.mxu0 0.0
        %1224 = vmatpush1.msra.mxu0 %v1206
        %1225 = vmatprep.subr.mxu0 0.0
        %1226 = vmatpush1.msra.mxu0 %v1207
        %1227 = vmatprep.subr.mxu0 0.0
        %1228 = vmatpush1.msra.mxu0 %v1208
        %1229 = vmatprep.subr.mxu0 0.0
        %1230 = vmatpush1.msra.mxu0 %v1209
        %1231 = vmatprep.subr.mxu0 0.0
        %1232 = vmatpush1.msra.mxu0 %v1210
        %1233 = vmatprep.subr.mxu0 0.0
        %1234 = vmatpush1.msra.mxu0 %v1211
        %1235 = vmatprep.subr.mxu0 0.0
        %1236 = vmatpush1.msra.mxu0 0.0
        %1237 = vmatprep.subr.mxu0 0.0
        %1238 = vmatpush1.msra.mxu0 0.0
        %1239 = vmatprep.subr.mxu0 0.0
        %1240 = vmatpush1.msra.mxu0 0.0
        %1241 = vmatprep.subr.mxu0 0.0
        %1242 = vmatpush1.msra.mxu0 0.0
        %1243 = vmatprep.subr.mxu0 0.0
        %1244 = vmatpush1.msra.mxu0 0.0
        %1245 = vmatprep.subr.mxu0 0.0
        %1246 = vmatpush1.msra.mxu0 0.0
        %1247 = vmatprep.subr.mxu0 0.0
        %1248 = vmatpush1.msra.mxu0 0.0
        %1249 = vmatprep.subr.mxu0 0.0
        %1250 = vmatpush1.msra.mxu0 0.0
        %1251 = vmatprep.subr.mxu0 0.0
        %1252 = vmatpush1.msra.mxu0 0.0
        %1253 = vmatprep.subr.mxu0 0.0
        %1254 = vmatpush1.msra.mxu0 0.0
        %1255 = vmatprep.subr.mxu0 0.0
        %1256 = vmatpush1.msra.mxu0 0.0
        %1257 = vmatprep.subr.mxu0 0.0
        %1258 = vmatpush1.msra.mxu0 0.0
        %1259 = vmatprep.subr.mxu0 0.0
        %1260 = vmatpush1.msra.mxu0 0.0
        %1261 = vmatprep.subr.mxu0 0.0
        %1262 = vmatpush1.msra.mxu0 0.0
        %1263 = vmatprep.subr.mxu0 0.0
        %1264 = vmatpush1.msra.mxu0 0.0
        %1265 = vmatprep.subr.mxu0 0.0
        %1266 = vmatpush1.msra.mxu0 0.0
        %1267 = vmatprep.subr.mxu0 0.0
        %1268 = vmatpush1.msra.mxu0 0.0
        %1269 = vmatprep.subr.mxu0 0.0
        %1270 = vmatpush1.msra.mxu0 0.0
        %1271 = vmatprep.subr.mxu0 0.0
        %1272 = vmatpush1.msra.mxu0 0.0
        %1273 = vmatprep.subr.mxu0 0.0
        %1274 = vmatpush1.msra.mxu0 0.0
        %1275 = vmatprep.subr.mxu0 0.0
        %1276 = vmatpush1.msra.mxu0 0.0
        %1277 = vmatprep.subr.mxu0 0.0
        %1278 = vmatpush1.msra.mxu0 0.0
        %1279 = vmatprep.subr.mxu0 0.0
        %1280 = vmatpush1.msra.mxu0 0.0
        %1281 = vmatprep.subr.mxu0 0.0
        %1282 = vmatpush1.msra.mxu0 0.0
        %1283 = vmatprep.mubr.f32.mxu0 0.0
        %1284 = vmatmul.mubr.f32.gmra.mrb[0].mxu0 %v481
        %v1285 = vpop.f32.mrb[0].mxu0
        %v1286 = vadd.f32 %v1217, %v1285
        %v1287 = vpop.f32.mrb[0].mxu0
        %1288 = vdwg.mxu0
        %v1289 = vadd.f32 %v1286, %v1203
        %vm1290 = vcmp.ge.f32.partialorder %v1289, 0.0
        %v1291 = vmul.f32 %v1289, 0.1
        %v1292 = vsel %vm1290, %v1289, %v1291
        %v1293 = vld [vmem:[%s7] sm:$0xff]
        %v1294 = vld [vmem:[%s7 + $0x8] sm:$0xff]
        %v1295 = vld [vmem:[%s7 + $0x10] sm:$0xff]
        %v1296 = vld [vmem:[%s7 + $0x18] sm:$0xff]
        %v1297 = vld [vmem:[%s7 + $0x20] sm:$0xff]
        %v1298 = vld [vmem:[%s7 + $0x28] sm:$0xff]
        %v1299 = vld [vmem:[%s7 + $0x30] sm:$0xff]
        %v1300 = vld [vmem:[%s7 + $0x38] sm:$0xff]
        %v1301 = vld [vmem:[%s7 + $0x40] sm:$0xff]
        %v1302 = vld [vmem:[%s7 + $0x48] sm:$0xff]
        %v1303 = vld [vmem:[%s7 + $0x50] sm:$0xff]
        %v1304 = vld [vmem:[%s7 + $0x58] sm:$0xff]
        %v1305 = vld [vmem:[%s7 + $0x60] sm:$0xff]
        %v1306 = vld [vmem:[%s7 + $0x68] sm:$0xff]
        %v1307 = vld [vmem:[%s7 + $0x70] sm:$0xff]
        %v1308 = vld [vmem:[%s7 + $0x78] sm:$0xff]
        %v1309 = vld [vmem:[%s8] sm:$0x1]
        %v1311 = vlaneseq
        %v1312 = vshrl.u32 %v1311, 7
        %v1313 = vsub.s32 0, %v1312
        %v1314 = vrot.slane %v1309, %v1313
        %1316 = vmatprep.subr.mxu0 0.0
        %1317 = vmatpush1.msra.mxu0 %v1293
        %1318 = vmatprep.subr.mxu0 0.0
        %1319 = vmatpush1.msra.mxu0 %v1294
        %1320 = vmatprep.subr.mxu0 0.0
        %1321 = vmatpush1.msra.mxu0 %v1295
        %1322 = vmatprep.subr.mxu0 0.0
        %1323 = vmatpush1.msra.mxu0 %v1296
        %1324 = vmatprep.subr.mxu0 0.0
        %1325 = vmatpush1.msra.mxu0 %v1297
        %1326 = vmatprep.subr.mxu0 0.0
        %1327 = vmatpush1.msra.mxu0 %v1298
        %1328 = vmatprep.subr.mxu0 0.0
        %1329 = vmatpush1.msra.mxu0 %v1299
        %1330 = vmatprep.subr.mxu0 0.0
        %1331 = vmatpush1.msra.mxu0 %v1300
        %1332 = vmatprep.subr.mxu0 0.0
        %1333 = vmatpush1.msra.mxu0 %v1301
        %1334 = vmatprep.subr.mxu0 0.0
        %1335 = vmatpush1.msra.mxu0 %v1302
        %1336 = vmatprep.subr.mxu0 0.0
        %1337 = vmatpush1.msra.mxu0 %v1303
        %1338 = vmatprep.subr.mxu0 0.0
        %1339 = vmatpush1.msra.mxu0 %v1304
        %1340 = vmatprep.subr.mxu0 0.0
        %1341 = vmatpush1.msra.mxu0 %v1305
        %1342 = vmatprep.subr.mxu0 0.0
        %1343 = vmatpush1.msra.mxu0 %v1306
        %1344 = vmatprep.subr.mxu0 0.0
        %1345 = vmatpush1.msra.mxu0 %v1307
        %1346 = vmatprep.subr.mxu0 0.0
        %1347 = vmatpush1.msra.mxu0 %v1308
        %1348 = vmatprep.subr.mxu0 0.0
        %1349 = vmatpush1.msra.mxu0 0.0
        %1350 = vmatprep.subr.mxu0 0.0
        %1351 = vmatpush1.msra.mxu0 0.0
        %1352 = vmatprep.subr.mxu0 0.0
        %1353 = vmatpush1.msra.mxu0 0.0
        %1354 = vmatprep.subr.mxu0 0.0
        %1355 = vmatpush1.msra.mxu0 0.0
        %1356 = vmatprep.subr.mxu0 0.0
        %1357 = vmatpush1.msra.mxu0 0.0
        %1358 = vmatprep.subr.mxu0 0.0
        %1359 = vmatpush1.msra.mxu0 0.0
        %1360 = vmatprep.subr.mxu0 0.0
        %1361 = vmatpush1.msra.mxu0 0.0
        %1362 = vmatprep.subr.mxu0 0.0
        %1363 = vmatpush1.msra.mxu0 0.0
        %1364 = vmatprep.subr.mxu0 0.0
        %1365 = vmatpush1.msra.mxu0 0.0
        %1366 = vmatprep.subr.mxu0 0.0
        %1367 = vmatpush1.msra.mxu0 0.0
        %1368 = vmatprep.subr.mxu0 0.0
        %1369 = vmatpush1.msra.mxu0 0.0
        %1370 = vmatprep.subr.mxu0 0.0
        %1371 = vmatpush1.msra.mxu0 0.0
        %1372 = vmatprep.subr.mxu0 0.0
        %1373 = vmatpush1.msra.mxu0 0.0
        %1374 = vmatprep.subr.mxu0 0.0
        %1375 = vmatpush1.msra.mxu0 0.0
        %1376 = vmatprep.subr.mxu0 0.0
        %1377 = vmatpush1.msra.mxu0 0.0
        %1378 = vmatprep.subr.mxu0 0.0
        %1379 = vmatpush1.msra.mxu0 0.0
        %1380 = vmatprep.mubr.f32.mxu0 0.0
        %1381 = vmatmul.mubr.f32.gmra.mrb[0].mxu0 %v1292
        %v1382 = vpop.f32.mrb[0].mxu0
        %v1383 = vadd.f32 %v1314, %v1382
        %v1384 = vpop.f32.mrb[0].mxu0
        %1385 = vdwg.mxu0
        %v1386 = vld [vmem:[%s9] sm:$0xff]
        %v1387 = vld [vmem:[%s9 + $0x8] sm:$0xff]
        %v1388 = vld [vmem:[%s9 + $0x10] sm:$0xff]
        %v1389 = vld [vmem:[%s9 + $0x18] sm:$0xff]
        %v1390 = vld [vmem:[%s9 + $0x20] sm:$0xff]
        %v1391 = vld [vmem:[%s9 + $0x28] sm:$0xff]
        %v1392 = vld [vmem:[%s9 + $0x30] sm:$0xff]
        %v1393 = vld [vmem:[%s9 + $0x38] sm:$0xff]
        %v1394 = vld [vmem:[%s10] sm:$0x1]
        %v1396 = vlaneseq
        %v1397 = vshrl.u32 %v1396, 7
        %v1398 = vsub.s32 0, %v1397
        %v1399 = vrot.slane %v1394, %v1398
        %1401 = vmatprep.subr.mxu0 0.0
        %1402 = vmatpush1.msra.mxu0 %v1386
        %1403 = vmatprep.subr.mxu0 0.0
        %1404 = vmatpush1.msra.mxu0 %v1387
        %1405 = vmatprep.subr.mxu0 0.0
        %1406 = vmatpush1.msra.mxu0 %v1388
        %1407 = vmatprep.subr.mxu0 0.0
        %1408 = vmatpush1.msra.mxu0 %v1389
        %1409 = vmatprep.subr.mxu0 0.0
        %1410 = vmatpush1.msra.mxu0 %v1390
        %1411 = vmatprep.subr.mxu0 0.0
        %1412 = vmatpush1.msra.mxu0 %v1391
        %1413 = vmatprep.subr.mxu0 0.0
        %1414 = vmatpush1.msra.mxu0 %v1392
        %1415 = vmatprep.subr.mxu0 0.0
        %1416 = vmatpush1.msra.mxu0 %v1393
        %1417 = vmatprep.subr.mxu0 0.0
        %1418 = vmatpush1.msra.mxu0 0.0
        %1419 = vmatprep.subr.mxu0 0.0
        %1420 = vmatpush1.msra.mxu0 0.0
        %1421 = vmatprep.subr.mxu0 0.0
        %1422 = vmatpush1.msra.mxu0 0.0
        %1423 = vmatprep.subr.mxu0 0.0
        %1424 = vmatpush1.msra.mxu0 0.0
        %1425 = vmatprep.subr.mxu0 0.0
        %1426 = vmatpush1.msra.mxu0 0.0
        %1427 = vmatprep.subr.mxu0 0.0
        %1428 = vmatpush1.msra.mxu0 0.0
        %1429 = vmatprep.subr.mxu0 0.0
        %1430 = vmatpush1.msra.mxu0 0.0
        %1431 = vmatprep.subr.mxu0 0.0
        %1432 = vmatpush1.msra.mxu0 0.0
        %1433 = vmatprep.subr.mxu0 0.0
        %1434 = vmatpush1.msra.mxu0 0.0
        %1435 = vmatprep.subr.mxu0 0.0
        %1436 = vmatpush1.msra.mxu0 0.0
        %1437 = vmatprep.subr.mxu0 0.0
        %1438 = vmatpush1.msra.mxu0 0.0
        %1439 = vmatprep.subr.mxu0 0.0
        %1440 = vmatpush1.msra.mxu0 0.0
        %1441 = vmatprep.subr.mxu0 0.0
        %1442 = vmatpush1.msra.mxu0 0.0
        %1443 = vmatprep.subr.mxu0 0.0
        %1444 = vmatpush1.msra.mxu0 0.0
        %1445 = vmatprep.subr.mxu0 0.0
        %1446 = vmatpush1.msra.mxu0 0.0
        %1447 = vmatprep.subr.mxu0 0.0
        %1448 = vmatpush1.msra.mxu0 0.0
        %1449 = vmatprep.subr.mxu0 0.0
        %1450 = vmatpush1.msra.mxu0 0.0
        %1451 = vmatprep.subr.mxu0 0.0
        %1452 = vmatpush1.msra.mxu0 0.0
        %1453 = vmatprep.subr.mxu0 0.0
        %1454 = vmatpush1.msra.mxu0 0.0
        %1455 = vmatprep.subr.mxu0 0.0
        %1456 = vmatpush1.msra.mxu0 0.0
        %1457 = vmatprep.subr.mxu0 0.0
        %1458 = vmatpush1.msra.mxu0 0.0
        %1459 = vmatprep.subr.mxu0 0.0
        %1460 = vmatpush1.msra.mxu0 0.0
        %1461 = vmatprep.subr.mxu0 0.0
        %1462 = vmatpush1.msra.mxu0 0.0
        %1463 = vmatprep.subr.mxu0 0.0
        %1464 = vmatpush1.msra.mxu0 0.0
        %1465 = vmatprep.mubr.f32.mxu0 0.0
        %1466 = vmatmul.mubr.f32.gmra.mrb[0].mxu0 %v481
        %v1467 = vpop.f32.mrb[0].mxu0
        %v1468 = vadd.f32 %v1399, %v1467
        %v1469 = vpop.f32.mrb[0].mxu0
        %1470 = vdwg.mxu0
        %v1471 = vadd.f32 %v1468, %v1383
        %vm1472 = vcmp.ge.f32.partialorder %v1471, 0.0
        %v1473 = vmul.f32 %v1471, 0.1
        %v1474 = vsel %vm1472, %v1471, %v1473
        %1475 = vst [vmem:[%s449] sm:$0xff] %v1474
        %p1476 = scmp.lt.s32.totalorder %s25, 3
        %s1477 = scalar_select %p1476, %s25, 3
        %s1478 = smul.addr %s1477, 8
        %s1479 = scalar_lea.vmem %s13, %s1478
        // Predicated region
        $region77: #{fan_forward.9} parent=71 // pred_check
          %p1480 = pneg %p321
        $region78: #{fan_forward.9} parent=71 // pred_check_branch
          %1482 = sbr.rel (%p1480) target = $region80
        $region79: #{fan_forward.9} parent=71 // pred_region
          _
        $region80: #{fan_forward.9} parent=71 // pred_fallthru
          _
      $region72: #{fan_forward.9} parent=5 // pred_fallthru
        _
      %p1483 = scmp.le.s32.totalorder 2, %s20
      // Predicated region
      $region81: #{fan_forward.9} parent=5 // pred_check
        %p1484 = pneg %p1483
      $region82: #{fan_forward.9} parent=5 // pred_check_branch
        %1486 = sbr.rel (%p1484) target = $region84
      $region83: #{fan_forward.9} parent=5 // pred_region
        %s1487 = ssub.s32 %s20, 2
        // Predicated region
        $region85: #{fan_forward.9} parent=83 // pred_check
          %p1488 = pneg %p327
        $region86: #{fan_forward.9} parent=83 // pred_check_branch
          %1490 = sbr.rel (%p1488) target = $region88
        $region87: #{fan_forward.9} parent=83 // pred_region
          %p1491 = scmp.lt.s32.totalorder %s26, 3
          %s1492 = scalar_select %p1491, %s26, 3
          %s1493 = smul.addr %s1492, 8
          %s1494 = scalar_lea.vmem %s13, %s1493
        $region88: #{fan_forward.9} parent=83 // pred_fallthru
          _
      $region84: #{fan_forward.9} parent=5 // pred_fallthru
        _
    $region6: #{fan_forward.9} parent=1 // loop_footer
      %s24 = sadd.s32 1, %s20
    $region7: #{fan_forward.9} parent=1 // loop_footer_branch
      %19 = sbr.rel target = $region3
    $region8: #{fan_forward.9} parent=1 // loop_exit
      _
    %1495 = vsyncpa [#allocation3], 1
    %s1496 = scalar_lea.sflag [#allocation3], 1
    %1497 = vsyncpa %s1496, 1

// kernel: fan_forward.11
$region0: #{fan_forward.11}
  #allocation0 [shape = 'u32[]', space=smem, size = 0x4, offset = 0x4, fixed_abs, tag = 'smem constant byte address 0x4 - core index']
  #allocation1 [shape = 'u32[144,128]{1,0:T(1,128)}', space=vmem, size = 0x12000, scoped, tag = 'internal scratch']
  %s0 = inlined_call_operand.vmem [shape: f32[2,32], index: 0, kind: input, shape index: {}]
  %s1 = inlined_call_operand.vmem [shape: f32[32,128], index: 1, kind: input, shape index: {}]
  %s2 = inlined_call_operand.vmem [shape: f32[128,10], index: 2, kind: input, shape index: {}]
  %s3 = inlined_call_operand.vmem [shape: f32[1,10], index: 3, kind: input, shape index: {}]
  %s4 = inlined_call_operand.hbm [shape: f32[2,10], index: 4, kind: output, shape index: {}]
  %s5 = sld [smem:[#allocation0]]
  $region26: #{fan_forward.11} parent=0
    _
  %s7 = ssub.s32 1, %s5
  %s8 = scalar_select 0, %s7, %s5
  $region1: #{fan_forward.11} parent=0
    #allocation2 [shape = 'u8[1024]{0}', space=vmem, size = 0x400, scoped, tag = 'output window, operand 0, single buffered']
    #allocation3 [shape = 's32[1]{0}', space=sflag, size = 0x4, scoped, tag = 'scoped memory for fan_forward.11']
    %9 = vsyncpa [#allocation3], 0
    // Predicated region
    $region2: #{fan_forward.11} parent=1 // pred_check
      _
    $region3: #{fan_forward.11} parent=1 // pred_check_branch
      %11 = sbr.rel (0) target = $region5
    $region4: #{fan_forward.11} parent=1 // pred_region
      _
    $region5: #{fan_forward.11} parent=1 // pred_fallthru
      _
    // Predicated region
    $region6: #{fan_forward.11} parent=1 // pred_check
      _
    $region7: #{fan_forward.11} parent=1 // pred_check_branch
      %13 = sbr.rel (0) target = $region9
    $region8: #{fan_forward.11} parent=1 // pred_region
      _
    $region9: #{fan_forward.11} parent=1 // pred_fallthru
      _
    // Predicated region
    $region10: #{fan_forward.11} parent=1 // pred_check
      _
    $region11: #{fan_forward.11} parent=1 // pred_check_branch
      %15 = sbr.rel (0) target = $region13
    $region12: #{fan_forward.11} parent=1 // pred_region
      _
    $region13: #{fan_forward.11} parent=1 // pred_fallthru
      _
    // Predicated region
    $region14: #{fan_forward.11} parent=1 // pred_check
      _
    $region15: #{fan_forward.11} parent=1 // pred_check_branch
      %17 = sbr.rel (0) target = $region17
    $region16: #{fan_forward.11} parent=1 // pred_region
      _
    $region17: #{fan_forward.11} parent=1 // pred_fallthru
      _
    %v18 = vld [vmem:[%s0] sm:$0x3]
    %v19 = vld [vmem:[%s1] sm:$0xff]
    %v20 = vld [vmem:[%s1 + $0x8] sm:$0xff]
    %v21 = vld [vmem:[%s1 + $0x10] sm:$0xff]
    %v22 = vld [vmem:[%s1 + $0x18] sm:$0xff]
    %vm23 = vcmask 261120
    %v25 = vsel %vm23, %v18, 0
    %27 = vmatprep.subr.mxu0 0.0
    %28 = vmatpush1.msra.mxu0 %v19
    %29 = vmatprep.subr.mxu0 0.0
    %30 = vmatpush1.msra.mxu0 %v20
    %31 = vmatprep.subr.mxu0 0.0
    %32 = vmatpush1.msra.mxu0 %v21
    %33 = vmatprep.subr.mxu0 0.0
    %34 = vmatpush1.msra.mxu0 %v22
    %35 = vmatprep.subr.mxu0 0.0
    %36 = vmatpush1.msra.mxu0 0.0
    %37 = vmatprep.subr.mxu0 0.0
    %38 = vmatpush1.msra.mxu0 0.0
    %39 = vmatprep.subr.mxu0 0.0
    %40 = vmatpush1.msra.mxu0 0.0
    %41 = vmatprep.subr.mxu0 0.0
    %42 = vmatpush1.msra.mxu0 0.0
    %43 = vmatprep.subr.mxu0 0.0
    %44 = vmatpush1.msra.mxu0 0.0
    %45 = vmatprep.subr.mxu0 0.0
    %46 = vmatpush1.msra.mxu0 0.0
    %47 = vmatprep.subr.mxu0 0.0
    %48 = vmatpush1.msra.mxu0 0.0
    %49 = vmatprep.subr.mxu0 0.0
    %50 = vmatpush1.msra.mxu0 0.0
    %51 = vmatprep.subr.mxu0 0.0
    %52 = vmatpush1.msra.mxu0 0.0
    %53 = vmatprep.subr.mxu0 0.0
    %54 = vmatpush1.msra.mxu0 0.0
    %55 = vmatprep.subr.mxu0 0.0
    %56 = vmatpush1.msra.mxu0 0.0
    %57 = vmatprep.subr.mxu0 0.0
    %58 = vmatpush1.msra.mxu0 0.0
    %59 = vmatprep.subr.mxu0 0.0
    %60 = vmatpush1.msra.mxu0 0.0
    %61 = vmatprep.subr.mxu0 0.0
    %62 = vmatpush1.msra.mxu0 0.0
    %63 = vmatprep.subr.mxu0 0.0
    %64 = vmatpush1.msra.mxu0 0.0
    %65 = vmatprep.subr.mxu0 0.0
    %66 = vmatpush1.msra.mxu0 0.0
    %67 = vmatprep.subr.mxu0 0.0
    %68 = vmatpush1.msra.mxu0 0.0
    %69 = vmatprep.subr.mxu0 0.0
    %70 = vmatpush1.msra.mxu0 0.0
    %71 = vmatprep.subr.mxu0 0.0
    %72 = vmatpush1.msra.mxu0 0.0
    %73 = vmatprep.subr.mxu0 0.0
    %74 = vmatpush1.msra.mxu0 0.0
    %75 = vmatprep.subr.mxu0 0.0
    %76 = vmatpush1.msra.mxu0 0.0
    %77 = vmatprep.subr.mxu0 0.0
    %78 = vmatpush1.msra.mxu0 0.0
    %79 = vmatprep.subr.mxu0 0.0
    %80 = vmatpush1.msra.mxu0 0.0
    %81 = vmatprep.subr.mxu0 0.0
    %82 = vmatpush1.msra.mxu0 0.0
    %83 = vmatprep.subr.mxu0 0.0
    %84 = vmatpush1.msra.mxu0 0.0
    %85 = vmatprep.subr.mxu0 0.0
    %86 = vmatpush1.msra.mxu0 0.0
    %87 = vmatprep.subr.mxu0 0.0
    %88 = vmatpush1.msra.mxu0 0.0
    %89 = vmatprep.subr.mxu0 0.0
    %90 = vmatpush1.msra.mxu0 0.0
    %91 = vmatprep.mubr.f32.mxu0 0.0
    %92 = vmatmul.mubr.f32.gmra.mrb[0].mxu0 %v25
    %v93 = vpop.f32.mrb[0].mxu0
    %v94 = vadd.f32 0.0, %v93
    %v95 = vpop.f32.mrb[0].mxu0
    %96 = vdwg.mxu0
    %v97 = vld [vmem:[%s2] sm:$0xff]
    %v98 = vld [vmem:[%s2 + $0x8] sm:$0xff]
    %v99 = vld [vmem:[%s2 + $0x10] sm:$0xff]
    %v100 = vld [vmem:[%s2 + $0x18] sm:$0xff]
    %v101 = vld [vmem:[%s2 + $0x20] sm:$0xff]
    %v102 = vld [vmem:[%s2 + $0x28] sm:$0xff]
    %v103 = vld [vmem:[%s2 + $0x30] sm:$0xff]
    %v104 = vld [vmem:[%s2 + $0x38] sm:$0xff]
    %v105 = vld [vmem:[%s2 + $0x40] sm:$0xff]
    %v106 = vld [vmem:[%s2 + $0x48] sm:$0xff]
    %v107 = vld [vmem:[%s2 + $0x50] sm:$0xff]
    %v108 = vld [vmem:[%s2 + $0x58] sm:$0xff]
    %v109 = vld [vmem:[%s2 + $0x60] sm:$0xff]
    %v110 = vld [vmem:[%s2 + $0x68] sm:$0xff]
    %v111 = vld [vmem:[%s2 + $0x70] sm:$0xff]
    %v112 = vld [vmem:[%s2 + $0x78] sm:$0xff]
    %v113 = vld [vmem:[%s3] sm:$0x1]
    %v115 = vlaneseq
    %v116 = vshrl.u32 %v115, 7
    %v117 = vsub.s32 0, %v116
    %v118 = vrot.slane %v113, %v117
    %120 = vmatprep.subr.mxu0 0.0
    %121 = vmatpush1.msra.mxu0 %v97
    %122 = vmatprep.subr.mxu0 0.0
    %123 = vmatpush1.msra.mxu0 %v98
    %124 = vmatprep.subr.mxu0 0.0
    %125 = vmatpush1.msra.mxu0 %v99
    %126 = vmatprep.subr.mxu0 0.0
    %127 = vmatpush1.msra.mxu0 %v100
    %128 = vmatprep.subr.mxu0 0.0
    %129 = vmatpush1.msra.mxu0 %v101
    %130 = vmatprep.subr.mxu0 0.0
    %131 = vmatpush1.msra.mxu0 %v102
    %132 = vmatprep.subr.mxu0 0.0
    %133 = vmatpush1.msra.mxu0 %v103
    %134 = vmatprep.subr.mxu0 0.0
    %135 = vmatpush1.msra.mxu0 %v104
    %136 = vmatprep.subr.mxu0 0.0
    %137 = vmatpush1.msra.mxu0 %v105
    %138 = vmatprep.subr.mxu0 0.0
    %139 = vmatpush1.msra.mxu0 %v106
    %140 = vmatprep.subr.mxu0 0.0
    %141 = vmatpush1.msra.mxu0 %v107
    %142 = vmatprep.subr.mxu0 0.0
    %143 = vmatpush1.msra.mxu0 %v108
    %144 = vmatprep.subr.mxu0 0.0
    %145 = vmatpush1.msra.mxu0 %v109
    %146 = vmatprep.subr.mxu0 0.0
    %147 = vmatpush1.msra.mxu0 %v110
    %148 = vmatprep.subr.mxu0 0.0
    %149 = vmatpush1.msra.mxu0 %v111
    %150 = vmatprep.subr.mxu0 0.0
    %151 = vmatpush1.msra.mxu0 %v112
    %152 = vmatprep.subr.mxu0 0.0
    %153 = vmatpush1.msra.mxu0 0.0
    %154 = vmatprep.subr.mxu0 0.0
    %155 = vmatpush1.msra.mxu0 0.0
    %156 = vmatprep.subr.mxu0 0.0
    %157 = vmatpush1.msra.mxu0 0.0
    %158 = vmatprep.subr.mxu0 0.0
    %159 = vmatpush1.msra.mxu0 0.0
    %160 = vmatprep.subr.mxu0 0.0
    %161 = vmatpush1.msra.mxu0 0.0
    %162 = vmatprep.subr.mxu0 0.0
    %163 = vmatpush1.msra.mxu0 0.0
    %164 = vmatprep.subr.mxu0 0.0
    %165 = vmatpush1.msra.mxu0 0.0
    %166 = vmatprep.subr.mxu0 0.0
    %167 = vmatpush1.msra.mxu0 0.0
    %168 = vmatprep.subr.mxu0 0.0
    %169 = vmatpush1.msra.mxu0 0.0
    %170 = vmatprep.subr.mxu0 0.0
    %171 = vmatpush1.msra.mxu0 0.0
    %172 = vmatprep.subr.mxu0 0.0
    %173 = vmatpush1.msra.mxu0 0.0
    %174 = vmatprep.subr.mxu0 0.0
    %175 = vmatpush1.msra.mxu0 0.0
    %176 = vmatprep.subr.mxu0 0.0
    %177 = vmatpush1.msra.mxu0 0.0
    %178 = vmatprep.subr.mxu0 0.0
    %179 = vmatpush1.msra.mxu0 0.0
    %180 = vmatprep.subr.mxu0 0.0
    %181 = vmatpush1.msra.mxu0 0.0
    %182 = vmatprep.subr.mxu0 0.0
    %183 = vmatpush1.msra.mxu0 0.0
    %184 = vmatprep.mubr.f32.mxu0 0.0
    %185 = vmatmul.mubr.f32.gmra.mrb[0].mxu0 %v94
    %v186 = vpop.f32.mrb[0].mxu0
    %v187 = vadd.f32 %v118, %v186
    %v188 = vpop.f32.mrb[0].mxu0
    %189 = vdwg.mxu0
    %vm190 = vcmask 74752
    %191 = vst.msk [vmem:[#allocation2] sm:$0x3] %vm190, %v187
    // Predicated region
    $region18: #{fan_forward.11} parent=1 // pred_check
      _
    $region19: #{fan_forward.11} parent=1 // pred_check_branch
      %193 = sbr.rel (0) target = $region21
    $region20: #{fan_forward.11} parent=1 // pred_region
      %s195 = ssub.s32 32, 32
      %196 = vsyncadd [#allocation3], %s195
      %s198 = sshll.u32 [#allocation2], 4
      %s199 = int_to_ptr.vmem [resolvable:$true] %s198
      %201 = dma.vmem_to_hbm [thread:$0]  %s199, 32, %s4, [#allocation3]
    $region21: #{fan_forward.11} parent=1 // pred_fallthru
      _
    // Predicated region
    $region22: #{fan_forward.11} parent=1 // pred_check
      _
    $region23: #{fan_forward.11} parent=1 // pred_check_branch
      %203 = sbr.rel (0) target = $region25
    $region24: #{fan_forward.11} parent=1 // pred_region
      %204 = dma.done [#allocation3], 32
    $region25: #{fan_forward.11} parent=1 // pred_fallthru
      _
    %205 = vsyncpa [#allocation3], 1

// kernel: fan_forward.10
$region0: #{fan_forward.10}
  #allocation0 [shape = 'u32[]', space=smem, size = 0x4, offset = 0x4, fixed_abs, tag = 'smem constant byte address 0x4 - core index']
  #allocation1 [shape = 'u32[144,128]{1,0:T(1,128)}', space=vmem, size = 0x12000, scoped, tag = 'internal scratch']
  %s0 = inlined_call_operand.vmem [shape: f32[4,8,128], index: 0, kind: input, shape index: {}]
  %s1 = inlined_call_operand.vmem [shape: f32[128,192], index: 1, kind: input, shape index: {}]
  %s2 = inlined_call_operand.vmem [shape: f32[1,192], index: 2, kind: input, shape index: {}]
  %s3 = inlined_call_operand.vmem [shape: f32[128,384], index: 3, kind: input, shape index: {}]
  %s4 = inlined_call_operand.vmem [shape: f32[1,128], index: 4, kind: input, shape index: {}]
  %s5 = inlined_call_operand.vmem [shape: f32[128,128], index: 5, kind: input, shape index: {}]
  %s6 = inlined_call_operand.vmem [shape: f32[1,128], index: 6, kind: input, shape index: {}]
  %s7 = inlined_call_operand.vmem [shape: f32[128,128], index: 7, kind: input, shape index: {}]
  %s8 = inlined_call_operand.vmem [shape: f32[1,128], index: 8, kind: input, shape index: {}]
  %s9 = inlined_call_operand.vmem [shape: f32[128,128], index: 9, kind: input, shape index: {}]
  %s10 = inlined_call_operand.vmem [shape: f32[1,128], index: 10, kind: input, shape index: {}]
  %s11 = inlined_call_operand.vmem [shape: f32[3], index: 11, kind: input, shape index: {}]
  %s12 = inlined_call_operand.vmem [shape: f32[3,8,8], index: 12, kind: input, shape index: {}]
  %s13 = inlined_call_operand.vmem [shape: f32[4,8,128], index: 13, kind: output, shape index: {}]
  %s14 = sld [smem:[#allocation0]]
  $region89: #{fan_forward.10} parent=0
    _
  %s16 = ssub.s32 1, %s14
  %s17 = scalar_select 0, %s16, %s14
  $region1: #{fan_forward.10} parent=0
    #allocation2 [shape = 'u8[512]{0}', space=smem, size = 0x200, scoped, tag = 'input window, operand 11, single buffered']
    #allocation3 [shape = 's32[2]{0}', space=sflag, size = 0x8, scoped, tag = 'scoped memory for fan_forward.10']
    %18 = vsyncpa [#allocation3], 0
    loop: start=0, step=1, limit=6
    $region2: #{fan_forward.10} parent=1 // loop_pre_header
      _
    $region3: #{fan_forward.10} parent=1 // loop_header
      %s20 = sphi 0, %s24
      %p21 = scmp.ge.s32.totalorder %s20, 6
      %s30 = sphi 0, %s32
      %s33 = sphi 0, %s30
      %s34 = sphi 0, %s33
      %s50 = sphi 0, %s34
      %s54 = sphi 0, %s54
      %s56 = sphi 0, %s54
      %s57 = sphi 0, %s56
      %s71 = sphi 0, %s57
      %s75 = sphi 0, %s75
      %s77 = sphi 0, %s75
      %s78 = sphi 0, %s77
      %s92 = sphi 0, %s78
      %s96 = sphi 0, %s96
      %s98 = sphi 0, %s96
      %s99 = sphi 0, %s98
      %s113 = sphi 0, %s99
      %s117 = sphi 0, %s117
      %s119 = sphi 0, %s117
      %s120 = sphi 0, %s119
      %s134 = sphi 0, %s120
      %s138 = sphi 0, %s138
      %s140 = sphi 0, %s138
      %s141 = sphi 0, %s140
      %s155 = sphi 0, %s141
      %s159 = sphi 0, %s159
      %s161 = sphi 0, %s159
      %s162 = sphi 0, %s161
      %s176 = sphi 0, %s162
      %s180 = sphi 0, %s180
      %s182 = sphi 0, %s180
      %s183 = sphi 0, %s182
      %s197 = sphi 0, %s183
      %s201 = sphi 0, %s201
      %s203 = sphi 0, %s201
      %s204 = sphi 0, %s203
      %s218 = sphi 0, %s204
      %s222 = sphi 0, %s222
      %s224 = sphi 0, %s222
      %s225 = sphi 0, %s224
      %s239 = sphi 0, %s225
      %s243 = sphi 0, %s243
      %s245 = sphi 0, %s243
      %s246 = sphi 0, %s245
      %s260 = sphi 0, %s246
      %s264 = sphi 0, %s264
      %s266 = sphi 0, %s264
      %s267 = sphi 0, %s266
      %s281 = sphi 0, %s267
      %s285 = sphi 0, %s285
      %s287 = sphi 0, %s285
      %s288 = sphi 0, %s287
      %s302 = sphi 0, %s288
      %s308 = sphi 0, %s310
      %s311 = sphi 0, %s308
      %s312 = sphi 0, %s311
      %s328 = sphi 0, %s312
    $region4: #{fan_forward.10} parent=1 // loop_header_branch
      %23 = sbr.rel (%p21) target = $region8
    $region5: #{fan_forward.10} parent=1 // loop_body
      %s25 = ssub.s32 %s20, 1
      %s26 = ssub.s32 %s20, 2
      %s27 = sadd.s32 %s20, 1
      %s28 = ssub.s32 %s20, %s27
      %p29 = scmp.eq.s32.totalorder %s28, 0
      %s31 = sadd.s32 %s30, 1
      %s32 = scalar_select %p29, %s30, %s31
      %p35 = pneg %p29
      %p36 = scmp.eq.s32.totalorder %s20, 3
      %p37 = por %p35, %p36
      %p38 = scmp.ne.s32.totalorder %s30, %s33
      %p39 = scmp.eq.s32.totalorder %s20, 0
      %p40 = por %p38, %p39
      %p41 = scmp.ne.s32.totalorder %s30, %s33
      %p42 = scmp.eq.s32.totalorder %s25, 3
      %p43 = por %p41, %p42
      %p44 = scmp.ne.s32.totalorder %s33, %s34
      %p45 = scmp.eq.s32.totalorder %s25, 0
      %p46 = por %p44, %p45
      %p47 = scmp.ne.s32.totalorder %s33, %s34
      %p48 = scmp.eq.s32.totalorder %s26, 3
      %p49 = por %p47, %p48
      %p51 = scmp.ne.s32.totalorder %s34, %s50
      %p52 = scmp.eq.s32.totalorder %s26, 0
      %p53 = por %p51, %p52
      %s55 = sadd.s32 %s54, 1
      %p58 = scmp.eq.s32.totalorder %s20, 3
      %p59 = scmp.ne.s32.totalorder %s54, %s56
      %p60 = scmp.eq.s32.totalorder %s20, 0
      %p61 = por %p59, %p60
      %p62 = scmp.ne.s32.totalorder %s54, %s56
      %p63 = scmp.eq.s32.totalorder %s25, 3
      %p64 = por %p62, %p63
      %p65 = scmp.ne.s32.totalorder %s56, %s57
      %p66 = scmp.eq.s32.totalorder %s25, 0
      %p67 = por %p65, %p66
      %p68 = scmp.ne.s32.totalorder %s56, %s57
      %p69 = scmp.eq.s32.totalorder %s26, 3
      %p70 = por %p68, %p69
      %p72 = scmp.ne.s32.totalorder %s57, %s71
      %p73 = scmp.eq.s32.totalorder %s26, 0
      %p74 = por %p72, %p73
      %s76 = sadd.s32 %s75, 1
      %p79 = scmp.eq.s32.totalorder %s20, 3
      %p80 = scmp.ne.s32.totalorder %s75, %s77
      %p81 = scmp.eq.s32.totalorder %s20, 0
      %p82 = por %p80, %p81
      %p83 = scmp.ne.s32.totalorder %s75, %s77
      %p84 = scmp.eq.s32.totalorder %s25, 3
      %p85 = por %p83, %p84
      %p86 = scmp.ne.s32.totalorder %s77, %s78
      %p87 = scmp.eq.s32.totalorder %s25, 0
      %p88 = por %p86, %p87
      %p89 = scmp.ne.s32.totalorder %s77, %s78
      %p90 = scmp.eq.s32.totalorder %s26, 3
      %p91 = por %p89, %p90
      %p93 = scmp.ne.s32.totalorder %s78, %s92
      %p94 = scmp.eq.s32.totalorder %s26, 0
      %p95 = por %p93, %p94
      %s97 = sadd.s32 %s96, 1
      %p100 = scmp.eq.s32.totalorder %s20, 3
      %p101 = scmp.ne.s32.totalorder %s96, %s98
      %p102 = scmp.eq.s32.totalorder %s20, 0
      %p103 = por %p101, %p102
      %p104 = scmp.ne.s32.totalorder %s96, %s98
      %p105 = scmp.eq.s32.totalorder %s25, 3
      %p106 = por %p104, %p105
      %p107 = scmp.ne.s32.totalorder %s98, %s99
      %p108 = scmp.eq.s32.totalorder %s25, 0
      %p109 = por %p107, %p108
      %p110 = scmp.ne.s32.totalorder %s98, %s99
      %p111 = scmp.eq.s32.totalorder %s26, 3
      %p112 = por %p110, %p111
      %p114 = scmp.ne.s32.totalorder %s99, %s113
      %p115 = scmp.eq.s32.totalorder %s26, 0
      %p116 = por %p114, %p115
      %s118 = sadd.s32 %s117, 1
      %p121 = scmp.eq.s32.totalorder %s20, 3
      %p122 = scmp.ne.s32.totalorder %s117, %s119
      %p123 = scmp.eq.s32.totalorder %s20, 0
      %p124 = por %p122, %p123
      %p125 = scmp.ne.s32.totalorder %s117, %s119
      %p126 = scmp.eq.s32.totalorder %s25, 3
      %p127 = por %p125, %p126
      %p128 = scmp.ne.s32.totalorder %s119, %s120
      %p129 = scmp.eq.s32.totalorder %s25, 0
      %p130 = por %p128, %p129
      %p131 = scmp.ne.s32.totalorder %s119, %s120
      %p132 = scmp.eq.s32.totalorder %s26, 3
      %p133 = por %p131, %p132
      %p135 = scmp.ne.s32.totalorder %s120, %s134
      %p136 = scmp.eq.s32.totalorder %s26, 0
      %p137 = por %p135, %p136
      %s139 = sadd.s32 %s138, 1
      %p142 = scmp.eq.s32.totalorder %s20, 3
      %p143 = scmp.ne.s32.totalorder %s138, %s140
      %p144 = scmp.eq.s32.totalorder %s20, 0
      %p145 = por %p143, %p144
      %p146 = scmp.ne.s32.totalorder %s138, %s140
      %p147 = scmp.eq.s32.totalorder %s25, 3
      %p148 = por %p146, %p147
      %p149 = scmp.ne.s32.totalorder %s140, %s141
      %p150 = scmp.eq.s32.totalorder %s25, 0
      %p151 = por %p149, %p150
      %p152 = scmp.ne.s32.totalorder %s140, %s141
      %p153 = scmp.eq.s32.totalorder %s26, 3
      %p154 = por %p152, %p153
      %p156 = scmp.ne.s32.totalorder %s141, %s155
      %p157 = scmp.eq.s32.totalorder %s26, 0
      %p158 = por %p156, %p157
      %s160 = sadd.s32 %s159, 1
      %p163 = scmp.eq.s32.totalorder %s20, 3
      %p164 = scmp.ne.s32.totalorder %s159, %s161
      %p165 = scmp.eq.s32.totalorder %s20, 0
      %p166 = por %p164, %p165
      %p167 = scmp.ne.s32.totalorder %s159, %s161
      %p168 = scmp.eq.s32.totalorder %s25, 3
      %p169 = por %p167, %p168
      %p170 = scmp.ne.s32.totalorder %s161, %s162
      %p171 = scmp.eq.s32.totalorder %s25, 0
      %p172 = por %p170, %p171
      %p173 = scmp.ne.s32.totalorder %s161, %s162
      %p174 = scmp.eq.s32.totalorder %s26, 3
      %p175 = por %p173, %p174
      %p177 = scmp.ne.s32.totalorder %s162, %s176
      %p178 = scmp.eq.s32.totalorder %s26, 0
      %p179 = por %p177, %p178
      %s181 = sadd.s32 %s180, 1
      %p184 = scmp.eq.s32.totalorder %s20, 3
      %p185 = scmp.ne.s32.totalorder %s180, %s182
      %p186 = scmp.eq.s32.totalorder %s20, 0
      %p187 = por %p185, %p186
      %p188 = scmp.ne.s32.totalorder %s180, %s182
      %p189 = scmp.eq.s32.totalorder %s25, 3
      %p190 = por %p188, %p189
      %p191 = scmp.ne.s32.totalorder %s182, %s183
      %p192 = scmp.eq.s32.totalorder %s25, 0
      %p193 = por %p191, %p192
      %p194 = scmp.ne.s32.totalorder %s182, %s183
      %p195 = scmp.eq.s32.totalorder %s26, 3
      %p196 = por %p194, %p195
      %p198 = scmp.ne.s32.totalorder %s183, %s197
      %p199 = scmp.eq.s32.totalorder %s26, 0
      %p200 = por %p198, %p199
      %s202 = sadd.s32 %s201, 1
      %p205 = scmp.eq.s32.totalorder %s20, 3
      %p206 = scmp.ne.s32.totalorder %s201, %s203
      %p207 = scmp.eq.s32.totalorder %s20, 0
      %p208 = por %p206, %p207
      %p209 = scmp.ne.s32.totalorder %s201, %s203
      %p210 = scmp.eq.s32.totalorder %s25, 3
      %p211 = por %p209, %p210
      %p212 = scmp.ne.s32.totalorder %s203, %s204
      %p213 = scmp.eq.s32.totalorder %s25, 0
      %p214 = por %p212, %p213
      %p215 = scmp.ne.s32.totalorder %s203, %s204
      %p216 = scmp.eq.s32.totalorder %s26, 3
      %p217 = por %p215, %p216
      %p219 = scmp.ne.s32.totalorder %s204, %s218
      %p220 = scmp.eq.s32.totalorder %s26, 0
      %p221 = por %p219, %p220
      %s223 = sadd.s32 %s222, 1
      %p226 = scmp.eq.s32.totalorder %s20, 3
      %p227 = scmp.ne.s32.totalorder %s222, %s224
      %p228 = scmp.eq.s32.totalorder %s20, 0
      %p229 = por %p227, %p228
      %p230 = scmp.ne.s32.totalorder %s222, %s224
      %p231 = scmp.eq.s32.totalorder %s25, 3
      %p232 = por %p230, %p231
      %p233 = scmp.ne.s32.totalorder %s224, %s225
      %p234 = scmp.eq.s32.totalorder %s25, 0
      %p235 = por %p233, %p234
      %p236 = scmp.ne.s32.totalorder %s224, %s225
      %p237 = scmp.eq.s32.totalorder %s26, 3
      %p238 = por %p236, %p237
      %p240 = scmp.ne.s32.totalorder %s225, %s239
      %p241 = scmp.eq.s32.totalorder %s26, 0
      %p242 = por %p240, %p241
      %s244 = sadd.s32 %s243, 1
      %p247 = scmp.eq.s32.totalorder %s20, 3
      %p248 = scmp.ne.s32.totalorder %s243, %s245
      %p249 = scmp.eq.s32.totalorder %s20, 0
      %p250 = por %p248, %p249
      %p251 = scmp.ne.s32.totalorder %s243, %s245
      %p252 = scmp.eq.s32.totalorder %s25, 3
      %p253 = por %p251, %p252
      %p254 = scmp.ne.s32.totalorder %s245, %s246
      %p255 = scmp.eq.s32.totalorder %s25, 0
      %p256 = por %p254, %p255
      %p257 = scmp.ne.s32.totalorder %s245, %s246
      %p258 = scmp.eq.s32.totalorder %s26, 3
      %p259 = por %p257, %p258
      %p261 = scmp.ne.s32.totalorder %s246, %s260
      %p262 = scmp.eq.s32.totalorder %s26, 0
      %p263 = por %p261, %p262
      %s265 = sadd.s32 %s264, 1
      %p268 = scmp.eq.s32.totalorder %s20, 3
      %p269 = scmp.ne.s32.totalorder %s264, %s266
      %p270 = scmp.eq.s32.totalorder %s20, 0
      %p271 = por %p269, %p270
      %p272 = scmp.ne.s32.totalorder %s264, %s266
      %p273 = scmp.eq.s32.totalorder %s25, 3
      %p274 = por %p272, %p273
      %p275 = scmp.ne.s32.totalorder %s266, %s267
      %p276 = scmp.eq.s32.totalorder %s25, 0
      %p277 = por %p275, %p276
      %p278 = scmp.ne.s32.totalorder %s266, %s267
      %p279 = scmp.eq.s32.totalorder %s26, 3
      %p280 = por %p278, %p279
      %p282 = scmp.ne.s32.totalorder %s267, %s281
      %p283 = scmp.eq.s32.totalorder %s26, 0
      %p284 = por %p282, %p283
      %s286 = sadd.s32 %s285, 1
      %p289 = scmp.eq.s32.totalorder %s20, 3
      %p290 = scmp.ne.s32.totalorder %s285, %s287
      %p291 = scmp.eq.s32.totalorder %s20, 0
      %p292 = por %p290, %p291
      %p293 = scmp.ne.s32.totalorder %s285, %s287
      %p294 = scmp.eq.s32.totalorder %s25, 3
      %p295 = por %p293, %p294
      %p296 = scmp.ne.s32.totalorder %s287, %s288
      %p297 = scmp.eq.s32.totalorder %s25, 0
      %p298 = por %p296, %p297
      %p299 = scmp.ne.s32.totalorder %s287, %s288
      %p300 = scmp.eq.s32.totalorder %s26, 3
      %p301 = por %p299, %p300
      %p303 = scmp.ne.s32.totalorder %s288, %s302
      %p304 = scmp.eq.s32.totalorder %s26, 0
      %p305 = por %p303, %p304
      %s306 = ssub.s32 %s20, %s27
      %p307 = scmp.eq.s32.totalorder %s306, 0
      %s309 = sadd.s32 %s308, 1
      %s310 = scalar_select %p307, %s308, %s309
      %p313 = pneg %p307
      %p314 = scmp.eq.s32.totalorder %s20, 3
      %p315 = por %p313, %p314
      %p316 = scmp.ne.s32.totalorder %s308, %s311
      %p317 = scmp.eq.s32.totalorder %s20, 0
      %p318 = por %p316, %p317
      %p319 = scmp.ne.s32.totalorder %s308, %s311
      %p320 = scmp.eq.s32.totalorder %s25, 3
      %p321 = por %p319, %p320
      %p322 = scmp.ne.s32.totalorder %s311, %s312
      %p323 = scmp.eq.s32.totalorder %s25, 0
      %p324 = por %p322, %p323
      %p325 = scmp.ne.s32.totalorder %s311, %s312
      %p326 = scmp.eq.s32.totalorder %s26, 3
      %p327 = por %p325, %p326
      %p329 = scmp.ne.s32.totalorder %s312, %s328
      %p330 = scmp.eq.s32.totalorder %s26, 0
      %p331 = por %p329, %p330
      %p332 = scmp.le.s32.totalorder 1, %s20
      %p333 = scmp.lt.s32.totalorder %s20, 5
      %p334 = pnand %p332, %p333
      %p335 = pneg %p334
      // Predicated region
      $region9: #{fan_forward.10} parent=5 // pred_check
        _
      $region10: #{fan_forward.10} parent=5 // pred_check_branch
        %337 = sbr.rel (%p334) target = $region12
      $region11: #{fan_forward.10} parent=5 // pred_region
        %s338 = ssub.s32 %s20, 1
        // Predicated region
        $region13: #{fan_forward.10} parent=11 // pred_check
          %p339 = pneg %p67
        $region14: #{fan_forward.10} parent=11 // pred_check_branch
          %341 = sbr.rel (%p339) target = $region16
        $region15: #{fan_forward.10} parent=11 // pred_region
          _
        $region16: #{fan_forward.10} parent=11 // pred_fallthru
          _
        // Predicated region
        $region17: #{fan_forward.10} parent=11 // pred_check
          %p342 = pneg %p88
        $region18: #{fan_forward.10} parent=11 // pred_check_branch
          %344 = sbr.rel (%p342) target = $region20
        $region19: #{fan_forward.10} parent=11 // pred_region
          _
        $region20: #{fan_forward.10} parent=11 // pred_fallthru
          _
        // Predicated region
        $region21: #{fan_forward.10} parent=11 // pred_check
          %p345 = pneg %p109
        $region22: #{fan_forward.10} parent=11 // pred_check_branch
          %347 = sbr.rel (%p345) target = $region24
        $region23: #{fan_forward.10} parent=11 // pred_region
          _
        $region24: #{fan_forward.10} parent=11 // pred_fallthru
          _
        // Predicated region
        $region25: #{fan_forward.10} parent=11 // pred_check
          %p348 = pneg %p130
        $region26: #{fan_forward.10} parent=11 // pred_check_branch
          %350 = sbr.rel (%p348) target = $region28
        $region27: #{fan_forward.10} parent=11 // pred_region
          _
        $region28: #{fan_forward.10} parent=11 // pred_fallthru
          _
        // Predicated region
        $region29: #{fan_forward.10} parent=11 // pred_check
          %p351 = pneg %p151
        $region30: #{fan_forward.10} parent=11 // pred_check_branch
          %353 = sbr.rel (%p351) target = $region32
        $region31: #{fan_forward.10} parent=11 // pred_region
          _
        $region32: #{fan_forward.10} parent=11 // pred_fallthru
          _
        // Predicated region
        $region33: #{fan_forward.10} parent=11 // pred_check
          %p354 = pneg %p172
        $region34: #{fan_forward.10} parent=11 // pred_check_branch
          %356 = sbr.rel (%p354) target = $region36
        $region35: #{fan_forward.10} parent=11 // pred_region
          _
        $region36: #{fan_forward.10} parent=11 // pred_fallthru
          _
        // Predicated region
        $region37: #{fan_forward.10} parent=11 // pred_check
          %p357 = pneg %p193
        $region38: #{fan_forward.10} parent=11 // pred_check_branch
          %359 = sbr.rel (%p357) target = $region40
        $region39: #{fan_forward.10} parent=11 // pred_region
          _
        $region40: #{fan_forward.10} parent=11 // pred_fallthru
          _
        // Predicated region
        $region41: #{fan_forward.10} parent=11 // pred_check
          %p360 = pneg %p214
        $region42: #{fan_forward.10} parent=11 // pred_check_branch
          %362 = sbr.rel (%p360) target = $region44
        $region43: #{fan_forward.10} parent=11 // pred_region
          _
        $region44: #{fan_forward.10} parent=11 // pred_fallthru
          _
        // Predicated region
        $region45: #{fan_forward.10} parent=11 // pred_check
          %p363 = pneg %p235
        $region46: #{fan_forward.10} parent=11 // pred_check_branch
          %365 = sbr.rel (%p363) target = $region48
        $region47: #{fan_forward.10} parent=11 // pred_region
          _
        $region48: #{fan_forward.10} parent=11 // pred_fallthru
          _
        // Predicated region
        $region49: #{fan_forward.10} parent=11 // pred_check
          %p366 = pneg %p256
        $region50: #{fan_forward.10} parent=11 // pred_check_branch
          %368 = sbr.rel (%p366) target = $region52
        $region51: #{fan_forward.10} parent=11 // pred_region
          _
        $region52: #{fan_forward.10} parent=11 // pred_fallthru
          _
        // Predicated region
        $region53: #{fan_forward.10} parent=11 // pred_check
          %p369 = pneg %p277
        $region54: #{fan_forward.10} parent=11 // pred_check_branch
          %371 = sbr.rel (%p369) target = $region56
        $region55: #{fan_forward.10} parent=11 // pred_region
          %s373 = ssub.s32 16, 16
          %374 = vsyncadd [#allocation3], %s373
          %s376 = sshll.u32 %s11, 4
          %s377 = int_to_ptr.vmem [resolvable:$true] %s376
          %379 = dma.vmem_to_smem %s377, 16, [#allocation2], [#allocation3]
        $region56: #{fan_forward.10} parent=11 // pred_fallthru
          _
        // Predicated region
        $region57: #{fan_forward.10} parent=11 // pred_check
          %p380 = pneg %p298
        $region58: #{fan_forward.10} parent=11 // pred_check_branch
          %382 = sbr.rel (%p380) target = $region60
        $region59: #{fan_forward.10} parent=11 // pred_region
          _
        $region60: #{fan_forward.10} parent=11 // pred_fallthru
          _
      $region12: #{fan_forward.10} parent=5 // pred_fallthru
        _
      %p383 = scmp.lt.s32.totalorder %s20, 4
      // Predicated region
      $region61: #{fan_forward.10} parent=5 // pred_check
        %p384 = pneg %p383
      $region62: #{fan_forward.10} parent=5 // pred_check_branch
        %386 = sbr.rel (%p384) target = $region64
      $region63: #{fan_forward.10} parent=5 // pred_region
        // Predicated region
        $region65: #{fan_forward.10} parent=63 // pred_check
          %p387 = pneg %p40
        $region66: #{fan_forward.10} parent=63 // pred_check_branch
          %389 = sbr.rel (%p387) target = $region68
        $region67: #{fan_forward.10} parent=63 // pred_region
          %p390 = scmp.lt.s32.totalorder %s20, 3
          %s391 = scalar_select %p390, %s20, 3
          %s392 = smul.addr %s391, 8
          %s393 = scalar_lea.vmem %s0, %s392
        $region68: #{fan_forward.10} parent=63 // pred_fallthru
          _
      $region64: #{fan_forward.10} parent=5 // pred_fallthru
        _
      %p394 = scmp.le.s32.totalorder 1, %s20
      %p395 = scmp.lt.s32.totalorder %s20, 5
      %p396 = pnand %p394, %p395
      %p397 = pneg %p396
      // Predicated region
      $region69: #{fan_forward.10} parent=5 // pred_check
        _
      $region70: #{fan_forward.10} parent=5 // pred_check_branch
        %399 = sbr.rel (%p396) target = $region72
      $region71: #{fan_forward.10} parent=5 // pred_region
        %s400 = ssub.s32 %s20, 1
        // Predicated region
        $region73: #{fan_forward.10} parent=71 // pred_check
          %p401 = pneg %p277
        $region74: #{fan_forward.10} parent=71 // pred_check_branch
          %403 = sbr.rel (%p401) target = $region76
        $region75: #{fan_forward.10} parent=71 // pred_region
          %404 = dma.done [#allocation3], 16
        $region76: #{fan_forward.10} parent=71 // pred_fallthru
          _
        %405 = sfence
        %p406 = scmp.lt.s32.totalorder %s25, 3
        %s407 = scalar_select %p406, %s25, 3
        %s408 = smul.addr %s407, 8
        %s409 = scalar_lea.vmem %s0, %s408
        %p410 = pneg %p46
        %p411 = pneg %p43
        %p412 = pneg %p67
        %p413 = pneg %p64
        %p414 = pneg %p88
        %p415 = pneg %p85
        %p416 = pneg %p109
        %p417 = pneg %p106
        %p418 = pneg %p130
        %p419 = pneg %p127
        %p420 = pneg %p151
        %p421 = pneg %p148
        %p422 = pneg %p172
        %p423 = pneg %p169
        %p424 = pneg %p193
        %p425 = pneg %p190
        %p426 = pneg %p214
        %p427 = pneg %p211
        %p428 = pneg %p235
        %p429 = pneg %p232
        %p430 = pneg %p256
        %p431 = pneg %p253
        %p432 = pneg %p277
        %p433 = pneg %p274
        %p434 = pneg %p298
        %p435 = pneg %p295
        %p436 = pneg %p324
        %p437 = pneg %p321
        %p438 = scmp.lt.s32.totalorder %s25, 3
        %s439 = scalar_select %p438, %s25, 3
        %s440 = smul.addr %s439, 8
        %s441 = scalar_lea.vmem %s13, %s440
        %p442 = scmp.lt.s32.totalorder %s25, 3
        %s443 = scalar_select %p442, %s25, 3
        %s444 = smul.addr %s443, 8
        %s445 = scalar_lea.vmem %s0, %s444
        %p446 = scmp.lt.s32.totalorder %s25, 3
        %s447 = scalar_select %p446, %s25, 3
        %s448 = smul.addr %s447, 8
        %s449 = scalar_lea.vmem %s13, %s448
        %v450 = vld [vmem:[%s445] sm:$0xff]
        %v451 = vld [vmem:[%s1] sm:$0xff]
        %v452 = vld [vmem:[%s1 + $0x8] sm:$0xff]
        %v453 = vld [vmem:[%s1 + $0x10] sm:$0xff]
        %v454 = vld [vmem:[%s1 + $0x18] sm:$0xff]
        %v455 = vld [vmem:[%s1 + $0x20] sm:$0xff]
        %v456 = vld [vmem:[%s1 + $0x28] sm:$0xff]
        %v457 = vld [vmem:[%s1 + $0x30] sm:$0xff]
        %v458 = vld [vmem:[%s1 + $0x38] sm:$0xff]
        %v459 = vld [vmem:[%s1 + $0x40] sm:$0xff]
        %v460 = vld [vmem:[%s1 + $0x48] sm:$0xff]
        %v461 = vld [vmem:[%s1 + $0x50] sm:$0xff]
        %v462 = vld [vmem:[%s1 + $0x58] sm:$0xff]
        %v463 = vld [vmem:[%s1 + $0x60] sm:$0xff]
        %v464 = vld [vmem:[%s1 + $0x68] sm:$0xff]
        %v465 = vld [vmem:[%s1 + $0x70] sm:$0xff]
        %v466 = vld [vmem:[%s1 + $0x78] sm:$0xff]
        %v467 = vld [vmem:[%s1 + $0x80] sm:$0xff]
        %v468 = vld [vmem:[%s1 + $0x88] sm:$0xff]
        %v469 = vld [vmem:[%s1 + $0x90] sm:$0xff]
        %v470 = vld [vmem:[%s1 + $0x98] sm:$0xff]
        %v471 = vld [vmem:[%s1 + $0xa0] sm:$0xff]
        %v472 = vld [vmem:[%s1 + $0xa8] sm:$0xff]
        %v473 = vld [vmem:[%s1 + $0xb0] sm:$0xff]
        %v474 = vld [vmem:[%s1 + $0xb8] sm:$0xff]
        %v475 = vld [vmem:[%s1 + $0xc0] sm:$0xff]
        %v476 = vld [vmem:[%s1 + $0xc8] sm:$0xff]
        %v477 = vld [vmem:[%s1 + $0xd0] sm:$0xff]
        %v478 = vld [vmem:[%s1 + $0xd8] sm:$0xff]
        %v479 = vld [vmem:[%s1 + $0xe0] sm:$0xff]
        %v480 = vld [vmem:[%s1 + $0xe8] sm:$0xff]
        %v481 = vld [vmem:[%s1 + $0xf0] sm:$0xff]
        %v482 = vld [vmem:[%s1 + $0xf8] sm:$0xff]
        %v483 = vld [vmem:[%s2] sm:$0x3]
        %v485 = vlaneseq
        %v486 = vshrl.u32 %v485, 7
        %v487 = vsub.s32 0, %v486
        %v488 = vrot.slane %v483, %v487
        %v489 = vlaneseq
        %v490 = vshrl.u32 %v489, 7
        %v491 = vsub.s32 1, %v490
        %v492 = vrot.slane %v483, %v491
        %495 = vmatprep.subr.mxu0 %v452
        %496 = vmatpush1.msra.mxu0 %v451
        %497 = vmatprep.subr.mxu0 %v454
        %498 = vmatpush1.msra.mxu0 %v453
        %499 = vmatprep.subr.mxu0 %v456
        %500 = vmatpush1.msra.mxu0 %v455
        %501 = vmatprep.subr.mxu0 %v458
        %502 = vmatpush1.msra.mxu0 %v457
        %503 = vmatprep.subr.mxu0 %v460
        %504 = vmatpush1.msra.mxu0 %v459
        %505 = vmatprep.subr.mxu0 %v462
        %506 = vmatpush1.msra.mxu0 %v461
        %507 = vmatprep.subr.mxu0 %v464
        %508 = vmatpush1.msra.mxu0 %v463
        %509 = vmatprep.subr.mxu0 %v466
        %510 = vmatpush1.msra.mxu0 %v465
        %511 = vmatprep.subr.mxu0 %v468
        %512 = vmatpush1.msra.mxu0 %v467
        %513 = vmatprep.subr.mxu0 %v470
        %514 = vmatpush1.msra.mxu0 %v469
        %515 = vmatprep.subr.mxu0 %v472
        %516 = vmatpush1.msra.mxu0 %v471
        %517 = vmatprep.subr.mxu0 %v474
        %518 = vmatpush1.msra.mxu0 %v473
        %519 = vmatprep.subr.mxu0 %v476
        %520 = vmatpush1.msra.mxu0 %v475
        %521 = vmatprep.subr.mxu0 %v478
        %522 = vmatpush1.msra.mxu0 %v477
        %523 = vmatprep.subr.mxu0 %v480
        %524 = vmatpush1.msra.mxu0 %v479
        %525 = vmatprep.subr.mxu0 %v482
        %526 = vmatpush1.msra.mxu0 %v481
        %527 = vmatprep.subr.mxu0 0.0
        %528 = vmatpush1.msra.mxu0 0.0
        %529 = vmatprep.subr.mxu0 0.0
        %530 = vmatpush1.msra.mxu0 0.0
        %531 = vmatprep.subr.mxu0 0.0
        %532 = vmatpush1.msra.mxu0 0.0
        %533 = vmatprep.subr.mxu0 0.0
        %534 = vmatpush1.msra.mxu0 0.0
        %535 = vmatprep.subr.mxu0 0.0
        %536 = vmatpush1.msra.mxu0 0.0
        %537 = vmatprep.subr.mxu0 0.0
        %538 = vmatpush1.msra.mxu0 0.0
        %539 = vmatprep.subr.mxu0 0.0
        %540 = vmatpush1.msra.mxu0 0.0
        %541 = vmatprep.subr.mxu0 0.0
        %542 = vmatpush1.msra.mxu0 0.0
        %543 = vmatprep.subr.mxu0 0.0
        %544 = vmatpush1.msra.mxu0 0.0
        %545 = vmatprep.subr.mxu0 0.0
        %546 = vmatpush1.msra.mxu0 0.0
        %547 = vmatprep.subr.mxu0 0.0
        %548 = vmatpush1.msra.mxu0 0.0
        %549 = vmatprep.subr.mxu0 0.0
        %550 = vmatpush1.msra.mxu0 0.0
        %551 = vmatprep.subr.mxu0 0.0
        %552 = vmatpush1.msra.mxu0 0.0
        %553 = vmatprep.subr.mxu0 0.0
        %554 = vmatpush1.msra.mxu0 0.0
        %555 = vmatprep.subr.mxu0 0.0
        %556 = vmatpush1.msra.mxu0 0.0
        %557 = vmatprep.subr.mxu0 0.0
        %558 = vmatpush1.msra.mxu0 0.0
        %559 = vmatprep.mubr.f32.mxu0 0.0
        %560 = vmatmul.mubr.f32.gmra.mrb[0].mxu0 %v450
        %v561 = vpop.f32.mrb[0].mxu0
        %v562 = vadd.f32 %v488, %v561
        %v563 = vpop.f32.mrb[0].mxu0
        %v564 = vadd.f32 %v492, %v563
        %565 = vdwg.mxu0
        %v566 = vld [vmem:[%s3] sm:$0xff]
        %v567 = vld [vmem:[%s3 + $0x8] sm:$0xff]
        %v568 = vld [vmem:[%s3 + $0x10] sm:$0xff]
        %v569 = vld [vmem:[%s3 + $0x18] sm:$0xff]
        %v570 = vld [vmem:[%s3 + $0x20] sm:$0xff]
        %v571 = vld [vmem:[%s3 + $0x28] sm:$0xff]
        %v572 = vld [vmem:[%s3 + $0x30] sm:$0xff]
        %v573 = vld [vmem:[%s3 + $0x38] sm:$0xff]
        %v574 = vld [vmem:[%s3 + $0x40] sm:$0xff]
        %v575 = vld [vmem:[%s3 + $0x48] sm:$0xff]
        %v576 = vld [vmem:[%s3 + $0x50] sm:$0xff]
        %v577 = vld [vmem:[%s3 + $0x58] sm:$0xff]
        %v578 = vld [vmem:[%s3 + $0x60] sm:$0xff]
        %v579 = vld [vmem:[%s3 + $0x68] sm:$0xff]
        %v580 = vld [vmem:[%s3 + $0x70] sm:$0xff]
        %v581 = vld [vmem:[%s3 + $0x78] sm:$0xff]
        %v582 = vld [vmem:[%s3 + $0x80] sm:$0xff]
        %v583 = vld [vmem:[%s3 + $0x88] sm:$0xff]
        %v584 = vld [vmem:[%s3 + $0x90] sm:$0xff]
        %v585 = vld [vmem:[%s3 + $0x98] sm:$0xff]
        %v586 = vld [vmem:[%s3 + $0xa0] sm:$0xff]
        %v587 = vld [vmem:[%s3 + $0xa8] sm:$0xff]
        %v588 = vld [vmem:[%s3 + $0xb0] sm:$0xff]
        %v589 = vld [vmem:[%s3 + $0xb8] sm:$0xff]
        %v590 = vld [vmem:[%s3 + $0xc0] sm:$0xff]
        %v591 = vld [vmem:[%s3 + $0xc8] sm:$0xff]
        %v592 = vld [vmem:[%s3 + $0xd0] sm:$0xff]
        %v593 = vld [vmem:[%s3 + $0xd8] sm:$0xff]
        %v594 = vld [vmem:[%s3 + $0xe0] sm:$0xff]
        %v595 = vld [vmem:[%s3 + $0xe8] sm:$0xff]
        %v596 = vld [vmem:[%s3 + $0xf0] sm:$0xff]
        %v597 = vld [vmem:[%s3 + $0xf8] sm:$0xff]
        %v598 = vld [vmem:[%s3 + $0x100] sm:$0xff]
        %v599 = vld [vmem:[%s3 + $0x108] sm:$0xff]
        %v600 = vld [vmem:[%s3 + $0x110] sm:$0xff]
        %v601 = vld [vmem:[%s3 + $0x118] sm:$0xff]
        %v602 = vld [vmem:[%s3 + $0x120] sm:$0xff]
        %v603 = vld [vmem:[%s3 + $0x128] sm:$0xff]
        %v604 = vld [vmem:[%s3 + $0x130] sm:$0xff]
        %v605 = vld [vmem:[%s3 + $0x138] sm:$0xff]
        %v606 = vld [vmem:[%s3 + $0x140] sm:$0xff]
        %v607 = vld [vmem:[%s3 + $0x148] sm:$0xff]
        %v608 = vld [vmem:[%s3 + $0x150] sm:$0xff]
        %v609 = vld [vmem:[%s3 + $0x158] sm:$0xff]
        %v610 = vld [vmem:[%s3 + $0x160] sm:$0xff]
        %v611 = vld [vmem:[%s3 + $0x168] sm:$0xff]
        %v612 = vld [vmem:[%s3 + $0x170] sm:$0xff]
        %v613 = vld [vmem:[%s3 + $0x178] sm:$0xff]
        %614 = vmatprep.subr.mxu0 %v567
        %615 = vmatpush1.msra.mxu0 %v566
        %616 = vmatprep.subr.mxu0 %v570
        %617 = vmatpush1.msra.mxu0 %v569
        %618 = vmatprep.subr.mxu0 %v573
        %619 = vmatpush1.msra.mxu0 %v572
        %620 = vmatprep.subr.mxu0 %v576
        %621 = vmatpush1.msra.mxu0 %v575
        %622 = vmatprep.subr.mxu0 %v579
        %623 = vmatpush1.msra.mxu0 %v578
        %624 = vmatprep.subr.mxu0 %v582
        %625 = vmatpush1.msra.mxu0 %v581
        %626 = vmatprep.subr.mxu0 %v585
        %627 = vmatpush1.msra.mxu0 %v584
        %628 = vmatprep.subr.mxu0 %v588
        %629 = vmatpush1.msra.mxu0 %v587
        %630 = vmatprep.subr.mxu0 %v591
        %631 = vmatpush1.msra.mxu0 %v590
        %632 = vmatprep.subr.mxu0 %v594
        %633 = vmatpush1.msra.mxu0 %v593
        %634 = vmatprep.subr.mxu0 %v597
        %635 = vmatpush1.msra.mxu0 %v596
        %636 = vmatprep.subr.mxu0 %v600
        %637 = vmatpush1.msra.mxu0 %v599
        %638 = vmatprep.subr.mxu0 %v603
        %639 = vmatpush1.msra.mxu0 %v602
        %640 = vmatprep.subr.mxu0 %v606
        %641 = vmatpush1.msra.mxu0 %v605
        %642 = vmatprep.subr.mxu0 %v609
        %643 = vmatpush1.msra.mxu0 %v608
        %644 = vmatprep.subr.mxu0 %v612
        %645 = vmatpush1.msra.mxu0 %v611
        %646 = vmatprep.subr.mxu0 0.0
        %647 = vmatpush1.msra.mxu0 0.0
        %648 = vmatprep.subr.mxu0 0.0
        %649 = vmatpush1.msra.mxu0 0.0
        %650 = vmatprep.subr.mxu0 0.0
        %651 = vmatpush1.msra.mxu0 0.0
        %652 = vmatprep.subr.mxu0 0.0
        %653 = vmatpush1.msra.mxu0 0.0
        %654 = vmatprep.subr.mxu0 0.0
        %655 = vmatpush1.msra.mxu0 0.0
        %656 = vmatprep.subr.mxu0 0.0
        %657 = vmatpush1.msra.mxu0 0.0
        %658 = vmatprep.subr.mxu0 0.0
        %659 = vmatpush1.msra.mxu0 0.0
        %660 = vmatprep.subr.mxu0 0.0
        %661 = vmatpush1.msra.mxu0 0.0
        %662 = vmatprep.subr.mxu0 0.0
        %663 = vmatpush1.msra.mxu0 0.0
        %664 = vmatprep.subr.mxu0 0.0
        %665 = vmatpush1.msra.mxu0 0.0
        %666 = vmatprep.subr.mxu0 0.0
        %667 = vmatpush1.msra.mxu0 0.0
        %668 = vmatprep.subr.mxu0 0.0
        %669 = vmatpush1.msra.mxu0 0.0
        %670 = vmatprep.subr.mxu0 0.0
        %671 = vmatpush1.msra.mxu0 0.0
        %672 = vmatprep.subr.mxu0 0.0
        %673 = vmatpush1.msra.mxu0 0.0
        %674 = vmatprep.subr.mxu0 0.0
        %675 = vmatpush1.msra.mxu0 0.0
        %676 = vmatprep.subr.mxu0 0.0
        %677 = vmatpush1.msra.mxu0 0.0
        %678 = vmatprep.mubr.f32.mxu0 0.0
        %679 = vmatmul.mubr.f32.gmra.mrb[0].mxu0 %v450
        %v680 = vpop.f32.mrb[0].mxu0
        %v681 = vadd.f32 0.0, %v680
        %v682 = vpop.f32.mrb[0].mxu0
        %v683 = vadd.f32 0.0, %v682
        %684 = vdwg.mxu0
        %685 = vmatprep.subr.mxu0 0.0
        %686 = vmatpush1.msra.mxu0 %v568
        %687 = vmatprep.subr.mxu0 0.0
        %688 = vmatpush1.msra.mxu0 %v571
        %689 = vmatprep.subr.mxu0 0.0
        %690 = vmatpush1.msra.mxu0 %v574
        %691 = vmatprep.subr.mxu0 0.0
        %692 = vmatpush1.msra.mxu0 %v577
        %693 = vmatprep.subr.mxu0 0.0
        %694 = vmatpush1.msra.mxu0 %v580
        %695 = vmatprep.subr.mxu0 0.0
        %696 = vmatpush1.msra.mxu0 %v583
        %697 = vmatprep.subr.mxu0 0.0
        %698 = vmatpush1.msra.mxu0 %v586
        %699 = vmatprep.subr.mxu0 0.0
        %700 = vmatpush1.msra.mxu0 %v589
        %701 = vmatprep.subr.mxu0 0.0
        %702 = vmatpush1.msra.mxu0 %v592
        %703 = vmatprep.subr.mxu0 0.0
        %704 = vmatpush1.msra.mxu0 %v595
        %705 = vmatprep.subr.mxu0 0.0
        %706 = vmatpush1.msra.mxu0 %v598
        %707 = vmatprep.subr.mxu0 0.0
        %708 = vmatpush1.msra.mxu0 %v601
        %709 = vmatprep.subr.mxu0 0.0
        %710 = vmatpush1.msra.mxu0 %v604
        %711 = vmatprep.subr.mxu0 0.0
        %712 = vmatpush1.msra.mxu0 %v607
        %713 = vmatprep.subr.mxu0 0.0
        %714 = vmatpush1.msra.mxu0 %v610
        %715 = vmatprep.subr.mxu0 0.0
        %716 = vmatpush1.msra.mxu0 %v613
        %717 = vmatprep.subr.mxu0 0.0
        %718 = vmatpush1.msra.mxu0 0.0
        %719 = vmatprep.subr.mxu0 0.0
        %720 = vmatpush1.msra.mxu0 0.0
        %721 = vmatprep.subr.mxu0 0.0
        %722 = vmatpush1.msra.mxu0 0.0
        %723 = vmatprep.subr.mxu0 0.0
        %724 = vmatpush1.msra.mxu0 0.0
        %725 = vmatprep.subr.mxu0 0.0
        %726 = vmatpush1.msra.mxu0 0.0
        %727 = vmatprep.subr.mxu0 0.0
        %728 = vmatpush1.msra.mxu0 0.0
        %729 = vmatprep.subr.mxu0 0.0
        %730 = vmatpush1.msra.mxu0 0.0
        %731 = vmatprep.subr.mxu0 0.0
        %732 = vmatpush1.msra.mxu0 0.0
        %733 = vmatprep.subr.mxu0 0.0
        %734 = vmatpush1.msra.mxu0 0.0
        %735 = vmatprep.subr.mxu0 0.0
        %736 = vmatpush1.msra.mxu0 0.0
        %737 = vmatprep.subr.mxu0 0.0
        %738 = vmatpush1.msra.mxu0 0.0
        %739 = vmatprep.subr.mxu0 0.0
        %740 = vmatpush1.msra.mxu0 0.0
        %741 = vmatprep.subr.mxu0 0.0
        %742 = vmatpush1.msra.mxu0 0.0
        %743 = vmatprep.subr.mxu0 0.0
        %744 = vmatpush1.msra.mxu0 0.0
        %745 = vmatprep.subr.mxu0 0.0
        %746 = vmatpush1.msra.mxu0 0.0
        %747 = vmatprep.subr.mxu0 0.0
        %748 = vmatpush1.msra.mxu0 0.0
        %749 = vmatprep.mubr.f32.mxu0 0.0
        %750 = vmatmul.mubr.f32.gmra.mrb[0].mxu0 %v450
        %v751 = vpop.f32.mrb[0].mxu0
        %v752 = vadd.f32 0.0, %v751
        %v753 = vpop.f32.mrb[0].mxu0
        %754 = vdwg.mxu0
        %756 = vrot.lane.b32.xlu0 %v562, 32
        %v757 = vpop.permute.xlu0 %756
        %vm758 = vcmask 261120
        %v759 = vsel %vm758, %v757, 0
        %v761 = vsel %vm758, %v562, 0
        %763 = vmatprep.subr.mxu0 0.0
        %764 = vmatpush1.xpose.msra.mxu0 %v761
        %765 = vmatprep.subr.mxu0 0.0
        %766 = vmatpush1.xpose.msra.mxu0 0.0
        %767 = vmatprep.subr.mxu0 0.0
        %768 = vmatpush1.xpose.msra.mxu0 0.0
        %769 = vmatprep.subr.mxu0 0.0
        %770 = vmatpush1.xpose.msra.mxu0 0.0
        %771 = vmatprep.subr.mxu0 0.0
        %772 = vmatpush1.xpose.msra.mxu0 0.0
        %773 = vmatprep.subr.mxu0 0.0
        %774 = vmatpush1.xpose.msra.mxu0 0.0
        %775 = vmatprep.subr.mxu0 0.0
        %776 = vmatpush1.xpose.msra.mxu0 0.0
        %777 = vmatprep.subr.mxu0 0.0
        %778 = vmatpush1.xpose.msra.mxu0 0.0
        %779 = vmatprep.subr.mxu0 0.0
        %780 = vmatpush1.xpose.msra.mxu0 0.0
        %781 = vmatprep.subr.mxu0 0.0
        %782 = vmatpush1.xpose.msra.mxu0 0.0
        %783 = vmatprep.subr.mxu0 0.0
        %784 = vmatpush1.xpose.msra.mxu0 0.0
        %785 = vmatprep.subr.mxu0 0.0
        %786 = vmatpush1.xpose.msra.mxu0 0.0
        %787 = vmatprep.subr.mxu0 0.0
        %788 = vmatpush1.xpose.msra.mxu0 0.0
        %789 = vmatprep.subr.mxu0 0.0
        %790 = vmatpush1.xpose.msra.mxu0 0.0
        %791 = vmatprep.subr.mxu0 0.0
        %792 = vmatpush1.xpose.msra.mxu0 0.0
        %793 = vmatprep.subr.mxu0 0.0
        %794 = vmatpush1.xpose.msra.mxu0 0.0
        %795 = vmatprep.subr.mxu0 0.0
        %796 = vmatpush1.xpose.msra.mxu0 0.0
        %797 = vmatprep.subr.mxu0 0.0
        %798 = vmatpush1.xpose.msra.mxu0 0.0
        %799 = vmatprep.subr.mxu0 0.0
        %800 = vmatpush1.xpose.msra.mxu0 0.0
        %801 = vmatprep.subr.mxu0 0.0
        %802 = vmatpush1.xpose.msra.mxu0 0.0
        %803 = vmatprep.subr.mxu0 0.0
        %804 = vmatpush1.xpose.msra.mxu0 0.0
        %805 = vmatprep.subr.mxu0 0.0
        %806 = vmatpush1.xpose.msra.mxu0 0.0
        %807 = vmatprep.subr.mxu0 0.0
        %808 = vmatpush1.xpose.msra.mxu0 0.0
        %809 = vmatprep.subr.mxu0 0.0
        %810 = vmatpush1.xpose.msra.mxu0 0.0
        %811 = vmatprep.subr.mxu0 0.0
        %812 = vmatpush1.xpose.msra.mxu0 0.0
        %813 = vmatprep.subr.mxu0 0.0
        %814 = vmatpush1.xpose.msra.mxu0 0.0
        %815 = vmatprep.subr.mxu0 0.0
        %816 = vmatpush1.xpose.msra.mxu0 0.0
        %817 = vmatprep.subr.mxu0 0.0
        %818 = vmatpush1.xpose.msra.mxu0 0.0
        %819 = vmatprep.subr.mxu0 0.0
        %820 = vmatpush1.xpose.msra.mxu0 0.0
        %821 = vmatprep.subr.mxu0 0.0
        %822 = vmatpush1.xpose.msra.mxu0 0.0
        %823 = vmatprep.subr.mxu0 0.0
        %824 = vmatpush1.xpose.msra.mxu0 0.0
        %825 = vmatprep.subr.mxu0 0.0
        %826 = vmatpush1.xpose.msra.mxu0 0.0
        %827 = vmatprep.mubr.f32.mxu0 0.0
        %828 = vmatmul.mubr.f32.gmra.mrb[0].mxu0 %v759
        %v829 = vpop.f32.mrb[0].mxu0
        %v830 = vadd.f32 0.0, %v829
        %v831 = vpop.f32.mrb[0].mxu0
        %832 = vdwg.mxu0
        %v833 = vmul.f32 %v830, 0.03125
        %v834 = vtanh.pop %v833
        %s835 = sld [smem:[#allocation2]]
        %v836 = vstv %s835
        %v837 = vmul.f32 %v834, %v836
        %v838 = vld [vmem:[%s12] sm:$0xff]
        %v839 = vadd.f32 %v837, %v838
        %840 = vrot.lane.b32.xlu0 %v562, 96
        %v841 = vpop.permute.xlu0 %840
        %v843 = vsel %vm758, %v564, 0
        %v845 = vsel %vm758, %v841, 0
        %847 = vmatprep.subr.mxu0 0.0
        %848 = vmatpush1.xpose.msra.mxu0 %v845
        %849 = vmatprep.subr.mxu0 0.0
        %850 = vmatpush1.xpose.msra.mxu0 0.0
        %851 = vmatprep.subr.mxu0 0.0
        %852 = vmatpush1.xpose.msra.mxu0 0.0
        %853 = vmatprep.subr.mxu0 0.0
        %854 = vmatpush1.xpose.msra.mxu0 0.0
        %855 = vmatprep.subr.mxu0 0.0
        %856 = vmatpush1.xpose.msra.mxu0 0.0
        %857 = vmatprep.subr.mxu0 0.0
        %858 = vmatpush1.xpose.msra.mxu0 0.0
        %859 = vmatprep.subr.mxu0 0.0
        %860 = vmatpush1.xpose.msra.mxu0 0.0
        %861 = vmatprep.subr.mxu0 0.0
        %862 = vmatpush1.xpose.msra.mxu0 0.0
        %863 = vmatprep.subr.mxu0 0.0
        %864 = vmatpush1.xpose.msra.mxu0 0.0
        %865 = vmatprep.subr.mxu0 0.0
        %866 = vmatpush1.xpose.msra.mxu0 0.0
        %867 = vmatprep.subr.mxu0 0.0
        %868 = vmatpush1.xpose.msra.mxu0 0.0
        %869 = vmatprep.subr.mxu0 0.0
        %870 = vmatpush1.xpose.msra.mxu0 0.0
        %871 = vmatprep.subr.mxu0 0.0
        %872 = vmatpush1.xpose.msra.mxu0 0.0
        %873 = vmatprep.subr.mxu0 0.0
        %874 = vmatpush1.xpose.msra.mxu0 0.0
        %875 = vmatprep.subr.mxu0 0.0
        %876 = vmatpush1.xpose.msra.mxu0 0.0
        %877 = vmatprep.subr.mxu0 0.0
        %878 = vmatpush1.xpose.msra.mxu0 0.0
        %879 = vmatprep.subr.mxu0 0.0
        %880 = vmatpush1.xpose.msra.mxu0 0.0
        %881 = vmatprep.subr.mxu0 0.0
        %882 = vmatpush1.xpose.msra.mxu0 0.0
        %883 = vmatprep.subr.mxu0 0.0
        %884 = vmatpush1.xpose.msra.mxu0 0.0
        %885 = vmatprep.subr.mxu0 0.0
        %886 = vmatpush1.xpose.msra.mxu0 0.0
        %887 = vmatprep.subr.mxu0 0.0
        %888 = vmatpush1.xpose.msra.mxu0 0.0
        %889 = vmatprep.subr.mxu0 0.0
        %890 = vmatpush1.xpose.msra.mxu0 0.0
        %891 = vmatprep.subr.mxu0 0.0
        %892 = vmatpush1.xpose.msra.mxu0 0.0
        %893 = vmatprep.subr.mxu0 0.0
        %894 = vmatpush1.xpose.msra.mxu0 0.0
        %895 = vmatprep.subr.mxu0 0.0
        %896 = vmatpush1.xpose.msra.mxu0 0.0
        %897 = vmatprep.subr.mxu0 0.0
        %898 = vmatpush1.xpose.msra.mxu0 0.0
        %899 = vmatprep.subr.mxu0 0.0
        %900 = vmatpush1.xpose.msra.mxu0 0.0
        %901 = vmatprep.subr.mxu0 0.0
        %902 = vmatpush1.xpose.msra.mxu0 0.0
        %903 = vmatprep.subr.mxu0 0.0
        %904 = vmatpush1.xpose.msra.mxu0 0.0
        %905 = vmatprep.subr.mxu0 0.0
        %906 = vmatpush1.xpose.msra.mxu0 0.0
        %907 = vmatprep.subr.mxu0 0.0
        %908 = vmatpush1.xpose.msra.mxu0 0.0
        %909 = vmatprep.subr.mxu0 0.0
        %910 = vmatpush1.xpose.msra.mxu0 0.0
        %911 = vmatprep.mubr.f32.mxu0 0.0
        %912 = vmatmul.mubr.f32.gmra.mrb[0].mxu0 %v843
        %v913 = vpop.f32.mrb[0].mxu0
        %v914 = vadd.f32 0.0, %v913
        %v915 = vpop.f32.mrb[0].mxu0
        %916 = vdwg.mxu0
        %v917 = vmul.f32 %v914, 0.03125
        %v918 = vtanh.pop %v917
        %s919 = sld [smem:[#allocation2 + $0x1]]
        %v920 = vstv %s919
        %v921 = vmul.f32 %v918, %v920
        %s922 = scalar_lea.vmem %s12, 8
        %v923 = vld [vmem:[%s922] sm:$0xff]
        %v924 = vadd.f32 %v921, %v923
        %vm925 = vcmask 64512
        %v927 = vsel %vm925, %v924, 0
        %929 = vmatprep.subr.mxu0 0.0
        %930 = vmatpush1.msra.mxu0 %v683
        %931 = vmatprep.subr.mxu0 0.0
        %932 = vmatpush1.msra.mxu0 0.0
        %933 = vmatprep.subr.mxu0 0.0
        %934 = vmatpush1.msra.mxu0 0.0
        %935 = vmatprep.subr.mxu0 0.0
        %936 = vmatpush1.msra.mxu0 0.0
        %937 = vmatprep.subr.mxu0 0.0
        %938 = vmatpush1.msra.mxu0 0.0
        %939 = vmatprep.subr.mxu0 0.0
        %940 = vmatpush1.msra.mxu0 0.0
        %941 = vmatprep.subr.mxu0 0.0
        %942 = vmatpush1.msra.mxu0 0.0
        %943 = vmatprep.subr.mxu0 0.0
        %944 = vmatpush1.msra.mxu0 0.0
        %945 = vmatprep.subr.mxu0 0.0
        %946 = vmatpush1.msra.mxu0 0.0
        %947 = vmatprep.subr.mxu0 0.0
        %948 = vmatpush1.msra.mxu0 0.0
        %949 = vmatprep.subr.mxu0 0.0
        %950 = vmatpush1.msra.mxu0 0.0
        %951 = vmatprep.subr.mxu0 0.0
        %952 = vmatpush1.msra.mxu0 0.0
        %953 = vmatprep.subr.mxu0 0.0
        %954 = vmatpush1.msra.mxu0 0.0
        %955 = vmatprep.subr.mxu0 0.0
        %956 = vmatpush1.msra.mxu0 0.0
        %957 = vmatprep.subr.mxu0 0.0
        %958 = vmatpush1.msra.mxu0 0.0
        %959 = vmatprep.subr.mxu0 0.0
        %960 = vmatpush1.msra.mxu0 0.0
        %961 = vmatprep.subr.mxu0 0.0
        %962 = vmatpush1.msra.mxu0 0.0
        %963 = vmatprep.subr.mxu0 0.0
        %964 = vmatpush1.msra.mxu0 0.0
        %965 = vmatprep.subr.mxu0 0.0
        %966 = vmatpush1.msra.mxu0 0.0
        %967 = vmatprep.subr.mxu0 0.0
        %968 = vmatpush1.msra.mxu0 0.0
        %969 = vmatprep.subr.mxu0 0.0
        %970 = vmatpush1.msra.mxu0 0.0
        %971 = vmatprep.subr.mxu0 0.0
        %972 = vmatpush1.msra.mxu0 0.0
        %973 = vmatprep.subr.mxu0 0.0
        %974 = vmatpush1.msra.mxu0 0.0
        %975 = vmatprep.subr.mxu0 0.0
        %976 = vmatpush1.msra.mxu0 0.0
        %977 = vmatprep.subr.mxu0 0.0
        %978 = vmatpush1.msra.mxu0 0.0
        %979 = vmatprep.subr.mxu0 0.0
        %980 = vmatpush1.msra.mxu0 0.0
        %981 = vmatprep.subr.mxu0 0.0
        %982 = vmatpush1.msra.mxu0 0.0
        %983 = vmatprep.subr.mxu0 0.0
        %984 = vmatpush1.msra.mxu0 0.0
        %985 = vmatprep.subr.mxu0 0.0
        %986 = vmatpush1.msra.mxu0 0.0
        %987 = vmatprep.subr.mxu0 0.0
        %988 = vmatpush1.msra.mxu0 0.0
        %989 = vmatprep.subr.mxu0 0.0
        %990 = vmatpush1.msra.mxu0 0.0
        %991 = vmatprep.subr.mxu0 0.0
        %992 = vmatpush1.msra.mxu0 0.0
        %993 = vmatprep.mubr.f32.mxu0 0.0
        %994 = vmatmul.mubr.f32.gmra.mrb[0].mxu0 %v927
        %v995 = vpop.f32.mrb[0].mxu0
        %v996 = vadd.f32 0.0, %v995
        %v997 = vpop.f32.mrb[0].mxu0
        %998 = vdwg.mxu0
        %v1000 = vsel %vm925, %v839, 0
        %1002 = vmatprep.subr.mxu0 0.0
        %1003 = vmatpush1.msra.mxu0 %v681
        %1004 = vmatprep.subr.mxu0 0.0
        %1005 = vmatpush1.msra.mxu0 0.0
        %1006 = vmatprep.subr.mxu0 0.0
        %1007 = vmatpush1.msra.mxu0 0.0
        %1008 = vmatprep.subr.mxu0 0.0
        %1009 = vmatpush1.msra.mxu0 0.0
        %1010 = vmatprep.subr.mxu0 0.0
        %1011 = vmatpush1.msra.mxu0 0.0
        %1012 = vmatprep.subr.mxu0 0.0
        %1013 = vmatpush1.msra.mxu0 0.0
        %1014 = vmatprep.subr.mxu0 0.0
        %1015 = vmatpush1.msra.mxu0 0.0
        %1016 = vmatprep.subr.mxu0 0.0
        %1017 = vmatpush1.msra.mxu0 0.0
        %1018 = vmatprep.subr.mxu0 0.0
        %1019 = vmatpush1.msra.mxu0 0.0
        %1020 = vmatprep.subr.mxu0 0.0
        %1021 = vmatpush1.msra.mxu0 0.0
        %1022 = vmatprep.subr.mxu0 0.0
        %1023 = vmatpush1.msra.mxu0 0.0
        %1024 = vmatprep.subr.mxu0 0.0
        %1025 = vmatpush1.msra.mxu0 0.0
        %1026 = vmatprep.subr.mxu0 0.0
        %1027 = vmatpush1.msra.mxu0 0.0
        %1028 = vmatprep.subr.mxu0 0.0
        %1029 = vmatpush1.msra.mxu0 0.0
        %1030 = vmatprep.subr.mxu0 0.0
        %1031 = vmatpush1.msra.mxu0 0.0
        %1032 = vmatprep.subr.mxu0 0.0
        %1033 = vmatpush1.msra.mxu0 0.0
        %1034 = vmatprep.subr.mxu0 0.0
        %1035 = vmatpush1.msra.mxu0 0.0
        %1036 = vmatprep.subr.mxu0 0.0
        %1037 = vmatpush1.msra.mxu0 0.0
        %1038 = vmatprep.subr.mxu0 0.0
        %1039 = vmatpush1.msra.mxu0 0.0
        %1040 = vmatprep.subr.mxu0 0.0
        %1041 = vmatpush1.msra.mxu0 0.0
        %1042 = vmatprep.subr.mxu0 0.0
        %1043 = vmatpush1.msra.mxu0 0.0
        %1044 = vmatprep.subr.mxu0 0.0
        %1045 = vmatpush1.msra.mxu0 0.0
        %1046 = vmatprep.subr.mxu0 0.0
        %1047 = vmatpush1.msra.mxu0 0.0
        %1048 = vmatprep.subr.mxu0 0.0
        %1049 = vmatpush1.msra.mxu0 0.0
        %1050 = vmatprep.subr.mxu0 0.0
        %1051 = vmatpush1.msra.mxu0 0.0
        %1052 = vmatprep.subr.mxu0 0.0
        %1053 = vmatpush1.msra.mxu0 0.0
        %1054 = vmatprep.subr.mxu0 0.0
        %1055 = vmatpush1.msra.mxu0 0.0
        %1056 = vmatprep.subr.mxu0 0.0
        %1057 = vmatpush1.msra.mxu0 0.0
        %1058 = vmatprep.subr.mxu0 0.0
        %1059 = vmatpush1.msra.mxu0 0.0
        %1060 = vmatprep.subr.mxu0 0.0
        %1061 = vmatpush1.msra.mxu0 0.0
        %1062 = vmatprep.subr.mxu0 0.0
        %1063 = vmatpush1.msra.mxu0 0.0
        %1064 = vmatprep.subr.mxu0 0.0
        %1065 = vmatpush1.msra.mxu0 0.0
        %1066 = vmatprep.mubr.f32.mxu0 0.0
        %1067 = vmatmul.mubr.f32.gmra.mrb[0].mxu0 %v1000
        %v1068 = vpop.f32.mrb[0].mxu0
        %v1069 = vadd.f32 %v996, %v1068
        %v1070 = vpop.f32.mrb[0].mxu0
        %1071 = vdwg.mxu0
        %1072 = vrot.lane.b32.xlu0 %v564, 96
        %v1073 = vpop.permute.xlu0 %1072
        %1074 = vrot.lane.b32.xlu0 %v562, 64
        %v1075 = vpop.permute.xlu0 %1074
        %v1076 = vsel %vm758, %v1073, 0
        %v1078 = vsel %vm758, %v1075, 0
        %1080 = vmatprep.subr.mxu0 0.0
        %1081 = vmatpush1.xpose.msra.mxu0 %v1078
        %1082 = vmatprep.subr.mxu0 0.0
        %1083 = vmatpush1.xpose.msra.mxu0 0.0
        %1084 = vmatprep.subr.mxu0 0.0
        %1085 = vmatpush1.xpose.msra.mxu0 0.0
        %1086 = vmatprep.subr.mxu0 0.0
        %1087 = vmatpush1.xpose.msra.mxu0 0.0
        %1088 = vmatprep.subr.mxu0 0.0
        %1089 = vmatpush1.xpose.msra.mxu0 0.0
        %1090 = vmatprep.subr.mxu0 0.0
        %1091 = vmatpush1.xpose.msra.mxu0 0.0
        %1092 = vmatprep.subr.mxu0 0.0
        %1093 = vmatpush1.xpose.msra.mxu0 0.0
        %1094 = vmatprep.subr.mxu0 0.0
        %1095 = vmatpush1.xpose.msra.mxu0 0.0
        %1096 = vmatprep.subr.mxu0 0.0
        %1097 = vmatpush1.xpose.msra.mxu0 0.0
        %1098 = vmatprep.subr.mxu0 0.0
        %1099 = vmatpush1.xpose.msra.mxu0 0.0
        %1100 = vmatprep.subr.mxu0 0.0
        %1101 = vmatpush1.xpose.msra.mxu0 0.0
        %1102 = vmatprep.subr.mxu0 0.0
        %1103 = vmatpush1.xpose.msra.mxu0 0.0
        %1104 = vmatprep.subr.mxu0 0.0
        %1105 = vmatpush1.xpose.msra.mxu0 0.0
        %1106 = vmatprep.subr.mxu0 0.0
        %1107 = vmatpush1.xpose.msra.mxu0 0.0
        %1108 = vmatprep.subr.mxu0 0.0
        %1109 = vmatpush1.xpose.msra.mxu0 0.0
        %1110 = vmatprep.subr.mxu0 0.0
        %1111 = vmatpush1.xpose.msra.mxu0 0.0
        %1112 = vmatprep.subr.mxu0 0.0
        %1113 = vmatpush1.xpose.msra.mxu0 0.0
        %1114 = vmatprep.subr.mxu0 0.0
        %1115 = vmatpush1.xpose.msra.mxu0 0.0
        %1116 = vmatprep.subr.mxu0 0.0
        %1117 = vmatpush1.xpose.msra.mxu0 0.0
        %1118 = vmatprep.subr.mxu0 0.0
        %1119 = vmatpush1.xpose.msra.mxu0 0.0
        %1120 = vmatprep.subr.mxu0 0.0
        %1121 = vmatpush1.xpose.msra.mxu0 0.0
        %1122 = vmatprep.subr.mxu0 0.0
        %1123 = vmatpush1.xpose.msra.mxu0 0.0
        %1124 = vmatprep.subr.mxu0 0.0
        %1125 = vmatpush1.xpose.msra.mxu0 0.0
        %1126 = vmatprep.subr.mxu0 0.0
        %1127 = vmatpush1.xpose.msra.mxu0 0.0
        %1128 = vmatprep.subr.mxu0 0.0
        %1129 = vmatpush1.xpose.msra.mxu0 0.0
        %1130 = vmatprep.subr.mxu0 0.0
        %1131 = vmatpush1.xpose.msra.mxu0 0.0
        %1132 = vmatprep.subr.mxu0 0.0
        %1133 = vmatpush1.xpose.msra.mxu0 0.0
        %1134 = vmatprep.subr.mxu0 0.0
        %1135 = vmatpush1.xpose.msra.mxu0 0.0
        %1136 = vmatprep.subr.mxu0 0.0
        %1137 = vmatpush1.xpose.msra.mxu0 0.0
        %1138 = vmatprep.subr.mxu0 0.0
        %1139 = vmatpush1.xpose.msra.mxu0 0.0
        %1140 = vmatprep.subr.mxu0 0.0
        %1141 = vmatpush1.xpose.msra.mxu0 0.0
        %1142 = vmatprep.subr.mxu0 0.0
        %1143 = vmatpush1.xpose.msra.mxu0 0.0
        %1144 = vmatprep.mubr.f32.mxu0 0.0
        %1145 = vmatmul.mubr.f32.gmra.mrb[0].mxu0 %v1076
        %v1146 = vpop.f32.mrb[0].mxu0
        %v1147 = vadd.f32 0.0, %v1146
        %v1148 = vpop.f32.mrb[0].mxu0
        %1149 = vdwg.mxu0
        %v1150 = vmul.f32 %v1147, 0.03125
        %v1151 = vtanh.pop %v1150
        %s1152 = sld [smem:[#allocation2 + $0x2]]
        %v1153 = vstv %s1152
        %v1154 = vmul.f32 %v1151, %v1153
        %s1155 = scalar_lea.vmem %s12, 16
        %v1156 = vld [vmem:[%s1155] sm:$0xff]
        %v1157 = vadd.f32 %v1154, %v1156
        %v1159 = vsel %vm925, %v1157, 0
        %1161 = vmatprep.subr.mxu0 0.0
        %1162 = vmatpush1.msra.mxu0 %v752
        %1163 = vmatprep.subr.mxu0 0.0
        %1164 = vmatpush1.msra.mxu0 0.0
        %1165 = vmatprep.subr.mxu0 0.0
        %1166 = vmatpush1.msra.mxu0 0.0
        %1167 = vmatprep.subr.mxu0 0.0
        %1168 = vmatpush1.msra.mxu0 0.0
        %1169 = vmatprep.subr.mxu0 0.0
        %1170 = vmatpush1.msra.mxu0 0.0
        %1171 = vmatprep.subr.mxu0 0.0
        %1172 = vmatpush1.msra.mxu0 0.0
        %1173 = vmatprep.subr.mxu0 0.0
        %1174 = vmatpush1.msra.mxu0 0.0
        %1175 = vmatprep.subr.mxu0 0.0
        %1176 = vmatpush1.msra.mxu0 0.0
        %1177 = vmatprep.subr.mxu0 0.0
        %1178 = vmatpush1.msra.mxu0 0.0
        %1179 = vmatprep.subr.mxu0 0.0
        %1180 = vmatpush1.msra.mxu0 0.0
        %1181 = vmatprep.subr.mxu0 0.0
        %1182 = vmatpush1.msra.mxu0 0.0
        %1183 = vmatprep.subr.mxu0 0.0
        %1184 = vmatpush1.msra.mxu0 0.0
        %1185 = vmatprep.subr.mxu0 0.0
        %1186 = vmatpush1.msra.mxu0 0.0
        %1187 = vmatprep.subr.mxu0 0.0
        %1188 = vmatpush1.msra.mxu0 0.0
        %1189 = vmatprep.subr.mxu0 0.0
        %1190 = vmatpush1.msra.mxu0 0.0
        %1191 = vmatprep.subr.mxu0 0.0
        %1192 = vmatpush1.msra.mxu0 0.0
        %1193 = vmatprep.subr.mxu0 0.0
        %1194 = vmatpush1.msra.mxu0 0.0
        %1195 = vmatprep.subr.mxu0 0.0
        %1196 = vmatpush1.msra.mxu0 0.0
        %1197 = vmatprep.subr.mxu0 0.0
        %1198 = vmatpush1.msra.mxu0 0.0
        %1199 = vmatprep.subr.mxu0 0.0
        %1200 = vmatpush1.msra.mxu0 0.0
        %1201 = vmatprep.subr.mxu0 0.0
        %1202 = vmatpush1.msra.mxu0 0.0
        %1203 = vmatprep.subr.mxu0 0.0
        %1204 = vmatpush1.msra.mxu0 0.0
        %1205 = vmatprep.subr.mxu0 0.0
        %1206 = vmatpush1.msra.mxu0 0.0
        %1207 = vmatprep.subr.mxu0 0.0
        %1208 = vmatpush1.msra.mxu0 0.0
        %1209 = vmatprep.subr.mxu0 0.0
        %1210 = vmatpush1.msra.mxu0 0.0
        %1211 = vmatprep.subr.mxu0 0.0
        %1212 = vmatpush1.msra.mxu0 0.0
        %1213 = vmatprep.subr.mxu0 0.0
        %1214 = vmatpush1.msra.mxu0 0.0
        %1215 = vmatprep.subr.mxu0 0.0
        %1216 = vmatpush1.msra.mxu0 0.0
        %1217 = vmatprep.subr.mxu0 0.0
        %1218 = vmatpush1.msra.mxu0 0.0
        %1219 = vmatprep.subr.mxu0 0.0
        %1220 = vmatpush1.msra.mxu0 0.0
        %1221 = vmatprep.subr.mxu0 0.0
        %1222 = vmatpush1.msra.mxu0 0.0
        %1223 = vmatprep.subr.mxu0 0.0
        %1224 = vmatpush1.msra.mxu0 0.0
        %1225 = vmatprep.mubr.f32.mxu0 0.0
        %1226 = vmatmul.mubr.f32.gmra.mrb[0].mxu0 %v1159
        %v1227 = vpop.f32.mrb[0].mxu0
        %v1228 = vadd.f32 0.0, %v1227
        %v1229 = vpop.f32.mrb[0].mxu0
        %1230 = vdwg.mxu0
        %v1231 = vadd.f32 %v1069, %v1228
        %v1232 = vld [vmem:[%s4] sm:$0x1]
        %v1234 = vlaneseq
        %v1235 = vshrl.u32 %v1234, 7
        %v1236 = vsub.s32 0, %v1235
        %v1237 = vrot.slane %v1232, %v1236
        %v1239 = vadd.f32 %v1231, %v1237
        %v1240 = vld [vmem:[%s5] sm:$0xff]
        %v1241 = vld [vmem:[%s5 + $0x8] sm:$0xff]
        %v1242 = vld [vmem:[%s5 + $0x10] sm:$0xff]
        %v1243 = vld [vmem:[%s5 + $0x18] sm:$0xff]
        %v1244 = vld [vmem:[%s5 + $0x20] sm:$0xff]
        %v1245 = vld [vmem:[%s5 + $0x28] sm:$0xff]
        %v1246 = vld [vmem:[%s5 + $0x30] sm:$0xff]
        %v1247 = vld [vmem:[%s5 + $0x38] sm:$0xff]
        %v1248 = vld [vmem:[%s5 + $0x40] sm:$0xff]
        %v1249 = vld [vmem:[%s5 + $0x48] sm:$0xff]
        %v1250 = vld [vmem:[%s5 + $0x50] sm:$0xff]
        %v1251 = vld [vmem:[%s5 + $0x58] sm:$0xff]
        %v1252 = vld [vmem:[%s5 + $0x60] sm:$0xff]
        %v1253 = vld [vmem:[%s5 + $0x68] sm:$0xff]
        %v1254 = vld [vmem:[%s5 + $0x70] sm:$0xff]
        %v1255 = vld [vmem:[%s5 + $0x78] sm:$0xff]
        %v1256 = vld [vmem:[%s6] sm:$0x1]
        %v1258 = vlaneseq
        %v1259 = vshrl.u32 %v1258, 7
        %v1260 = vsub.s32 0, %v1259
        %v1261 = vrot.slane %v1256, %v1260
        %1263 = vmatprep.subr.mxu0 0.0
        %1264 = vmatpush1.msra.mxu0 %v1240
        %1265 = vmatprep.subr.mxu0 0.0
        %1266 = vmatpush1.msra.mxu0 %v1241
        %1267 = vmatprep.subr.mxu0 0.0
        %1268 = vmatpush1.msra.mxu0 %v1242
        %1269 = vmatprep.subr.mxu0 0.0
        %1270 = vmatpush1.msra.mxu0 %v1243
        %1271 = vmatprep.subr.mxu0 0.0
        %1272 = vmatpush1.msra.mxu0 %v1244
        %1273 = vmatprep.subr.mxu0 0.0
        %1274 = vmatpush1.msra.mxu0 %v1245
        %1275 = vmatprep.subr.mxu0 0.0
        %1276 = vmatpush1.msra.mxu0 %v1246
        %1277 = vmatprep.subr.mxu0 0.0
        %1278 = vmatpush1.msra.mxu0 %v1247
        %1279 = vmatprep.subr.mxu0 0.0
        %1280 = vmatpush1.msra.mxu0 %v1248
        %1281 = vmatprep.subr.mxu0 0.0
        %1282 = vmatpush1.msra.mxu0 %v1249
        %1283 = vmatprep.subr.mxu0 0.0
        %1284 = vmatpush1.msra.mxu0 %v1250
        %1285 = vmatprep.subr.mxu0 0.0
        %1286 = vmatpush1.msra.mxu0 %v1251
        %1287 = vmatprep.subr.mxu0 0.0
        %1288 = vmatpush1.msra.mxu0 %v1252
        %1289 = vmatprep.subr.mxu0 0.0
        %1290 = vmatpush1.msra.mxu0 %v1253
        %1291 = vmatprep.subr.mxu0 0.0
        %1292 = vmatpush1.msra.mxu0 %v1254
        %1293 = vmatprep.subr.mxu0 0.0
        %1294 = vmatpush1.msra.mxu0 %v1255
        %1295 = vmatprep.subr.mxu0 0.0
        %1296 = vmatpush1.msra.mxu0 0.0
        %1297 = vmatprep.subr.mxu0 0.0
        %1298 = vmatpush1.msra.mxu0 0.0
        %1299 = vmatprep.subr.mxu0 0.0
        %1300 = vmatpush1.msra.mxu0 0.0
        %1301 = vmatprep.subr.mxu0 0.0
        %1302 = vmatpush1.msra.mxu0 0.0
        %1303 = vmatprep.subr.mxu0 0.0
        %1304 = vmatpush1.msra.mxu0 0.0
        %1305 = vmatprep.subr.mxu0 0.0
        %1306 = vmatpush1.msra.mxu0 0.0
        %1307 = vmatprep.subr.mxu0 0.0
        %1308 = vmatpush1.msra.mxu0 0.0
        %1309 = vmatprep.subr.mxu0 0.0
        %1310 = vmatpush1.msra.mxu0 0.0
        %1311 = vmatprep.subr.mxu0 0.0
        %1312 = vmatpush1.msra.mxu0 0.0
        %1313 = vmatprep.subr.mxu0 0.0
        %1314 = vmatpush1.msra.mxu0 0.0
        %1315 = vmatprep.subr.mxu0 0.0
        %1316 = vmatpush1.msra.mxu0 0.0
        %1317 = vmatprep.subr.mxu0 0.0
        %1318 = vmatpush1.msra.mxu0 0.0
        %1319 = vmatprep.subr.mxu0 0.0
        %1320 = vmatpush1.msra.mxu0 0.0
        %1321 = vmatprep.subr.mxu0 0.0
        %1322 = vmatpush1.msra.mxu0 0.0
        %1323 = vmatprep.subr.mxu0 0.0
        %1324 = vmatpush1.msra.mxu0 0.0
        %1325 = vmatprep.subr.mxu0 0.0
        %1326 = vmatpush1.msra.mxu0 0.0
        %1327 = vmatprep.mubr.f32.mxu0 0.0
        %1328 = vmatmul.mubr.f32.gmra.mrb[0].mxu0 %v450
        %v1329 = vpop.f32.mrb[0].mxu0
        %v1330 = vadd.f32 %v1261, %v1329
        %v1331 = vpop.f32.mrb[0].mxu0
        %1332 = vdwg.mxu0
        %v1333 = vadd.f32 %v1330, %v1239
        %vm1334 = vcmp.ge.f32.partialorder %v1333, 0.0
        %v1335 = vmul.f32 %v1333, 0.1
        %v1336 = vsel %vm1334, %v1333, %v1335
        %v1337 = vld [vmem:[%s7] sm:$0xff]
        %v1338 = vld [vmem:[%s7 + $0x8] sm:$0xff]
        %v1339 = vld [vmem:[%s7 + $0x10] sm:$0xff]
        %v1340 = vld [vmem:[%s7 + $0x18] sm:$0xff]
        %v1341 = vld [vmem:[%s7 + $0x20] sm:$0xff]
        %v1342 = vld [vmem:[%s7 + $0x28] sm:$0xff]
        %v1343 = vld [vmem:[%s7 + $0x30] sm:$0xff]
        %v1344 = vld [vmem:[%s7 + $0x38] sm:$0xff]
        %v1345 = vld [vmem:[%s7 + $0x40] sm:$0xff]
        %v1346 = vld [vmem:[%s7 + $0x48] sm:$0xff]
        %v1347 = vld [vmem:[%s7 + $0x50] sm:$0xff]
        %v1348 = vld [vmem:[%s7 + $0x58] sm:$0xff]
        %v1349 = vld [vmem:[%s7 + $0x60] sm:$0xff]
        %v1350 = vld [vmem:[%s7 + $0x68] sm:$0xff]
        %v1351 = vld [vmem:[%s7 + $0x70] sm:$0xff]
        %v1352 = vld [vmem:[%s7 + $0x78] sm:$0xff]
        %v1353 = vld [vmem:[%s8] sm:$0x1]
        %v1355 = vlaneseq
        %v1356 = vshrl.u32 %v1355, 7
        %v1357 = vsub.s32 0, %v1356
        %v1358 = vrot.slane %v1353, %v1357
        %1360 = vmatprep.subr.mxu0 0.0
        %1361 = vmatpush1.msra.mxu0 %v1337
        %1362 = vmatprep.subr.mxu0 0.0
        %1363 = vmatpush1.msra.mxu0 %v1338
        %1364 = vmatprep.subr.mxu0 0.0
        %1365 = vmatpush1.msra.mxu0 %v1339
        %1366 = vmatprep.subr.mxu0 0.0
        %1367 = vmatpush1.msra.mxu0 %v1340
        %1368 = vmatprep.subr.mxu0 0.0
        %1369 = vmatpush1.msra.mxu0 %v1341
        %1370 = vmatprep.subr.mxu0 0.0
        %1371 = vmatpush1.msra.mxu0 %v1342
        %1372 = vmatprep.subr.mxu0 0.0
        %1373 = vmatpush1.msra.mxu0 %v1343
        %1374 = vmatprep.subr.mxu0 0.0
        %1375 = vmatpush1.msra.mxu0 %v1344
        %1376 = vmatprep.subr.mxu0 0.0
        %1377 = vmatpush1.msra.mxu0 %v1345
        %1378 = vmatprep.subr.mxu0 0.0
        %1379 = vmatpush1.msra.mxu0 %v1346
        %1380 = vmatprep.subr.mxu0 0.0
        %1381 = vmatpush1.msra.mxu0 %v1347
        %1382 = vmatprep.subr.mxu0 0.0
        %1383 = vmatpush1.msra.mxu0 %v1348
        %1384 = vmatprep.subr.mxu0 0.0
        %1385 = vmatpush1.msra.mxu0 %v1349
        %1386 = vmatprep.subr.mxu0 0.0
        %1387 = vmatpush1.msra.mxu0 %v1350
        %1388 = vmatprep.subr.mxu0 0.0
        %1389 = vmatpush1.msra.mxu0 %v1351
        %1390 = vmatprep.subr.mxu0 0.0
        %1391 = vmatpush1.msra.mxu0 %v1352
        %1392 = vmatprep.subr.mxu0 0.0
        %1393 = vmatpush1.msra.mxu0 0.0
        %1394 = vmatprep.subr.mxu0 0.0
        %1395 = vmatpush1.msra.mxu0 0.0
        %1396 = vmatprep.subr.mxu0 0.0
        %1397 = vmatpush1.msra.mxu0 0.0
        %1398 = vmatprep.subr.mxu0 0.0
        %1399 = vmatpush1.msra.mxu0 0.0
        %1400 = vmatprep.subr.mxu0 0.0
        %1401 = vmatpush1.msra.mxu0 0.0
        %1402 = vmatprep.subr.mxu0 0.0
        %1403 = vmatpush1.msra.mxu0 0.0
        %1404 = vmatprep.subr.mxu0 0.0
        %1405 = vmatpush1.msra.mxu0 0.0
        %1406 = vmatprep.subr.mxu0 0.0
        %1407 = vmatpush1.msra.mxu0 0.0
        %1408 = vmatprep.subr.mxu0 0.0
        %1409 = vmatpush1.msra.mxu0 0.0
        %1410 = vmatprep.subr.mxu0 0.0
        %1411 = vmatpush1.msra.mxu0 0.0
        %1412 = vmatprep.subr.mxu0 0.0
        %1413 = vmatpush1.msra.mxu0 0.0
        %1414 = vmatprep.subr.mxu0 0.0
        %1415 = vmatpush1.msra.mxu0 0.0
        %1416 = vmatprep.subr.mxu0 0.0
        %1417 = vmatpush1.msra.mxu0 0.0
        %1418 = vmatprep.subr.mxu0 0.0
        %1419 = vmatpush1.msra.mxu0 0.0
        %1420 = vmatprep.subr.mxu0 0.0
        %1421 = vmatpush1.msra.mxu0 0.0
        %1422 = vmatprep.subr.mxu0 0.0
        %1423 = vmatpush1.msra.mxu0 0.0
        %1424 = vmatprep.mubr.f32.mxu0 0.0
        %1425 = vmatmul.mubr.f32.gmra.mrb[0].mxu0 %v1336
        %v1426 = vpop.f32.mrb[0].mxu0
        %v1427 = vadd.f32 %v1358, %v1426
        %v1428 = vpop.f32.mrb[0].mxu0
        %1429 = vdwg.mxu0
        %v1430 = vld [vmem:[%s9] sm:$0xff]
        %v1431 = vld [vmem:[%s9 + $0x8] sm:$0xff]
        %v1432 = vld [vmem:[%s9 + $0x10] sm:$0xff]
        %v1433 = vld [vmem:[%s9 + $0x18] sm:$0xff]
        %v1434 = vld [vmem:[%s9 + $0x20] sm:$0xff]
        %v1435 = vld [vmem:[%s9 + $0x28] sm:$0xff]
        %v1436 = vld [vmem:[%s9 + $0x30] sm:$0xff]
        %v1437 = vld [vmem:[%s9 + $0x38] sm:$0xff]
        %v1438 = vld [vmem:[%s9 + $0x40] sm:$0xff]
        %v1439 = vld [vmem:[%s9 + $0x48] sm:$0xff]
        %v1440 = vld [vmem:[%s9 + $0x50] sm:$0xff]
        %v1441 = vld [vmem:[%s9 + $0x58] sm:$0xff]
        %v1442 = vld [vmem:[%s9 + $0x60] sm:$0xff]
        %v1443 = vld [vmem:[%s9 + $0x68] sm:$0xff]
        %v1444 = vld [vmem:[%s9 + $0x70] sm:$0xff]
        %v1445 = vld [vmem:[%s9 + $0x78] sm:$0xff]
        %v1446 = vld [vmem:[%s10] sm:$0x1]
        %v1448 = vlaneseq
        %v1449 = vshrl.u32 %v1448, 7
        %v1450 = vsub.s32 0, %v1449
        %v1451 = vrot.slane %v1446, %v1450
        %1453 = vmatprep.subr.mxu0 0.0
        %1454 = vmatpush1.msra.mxu0 %v1430
        %1455 = vmatprep.subr.mxu0 0.0
        %1456 = vmatpush1.msra.mxu0 %v1431
        %1457 = vmatprep.subr.mxu0 0.0
        %1458 = vmatpush1.msra.mxu0 %v1432
        %1459 = vmatprep.subr.mxu0 0.0
        %1460 = vmatpush1.msra.mxu0 %v1433
        %1461 = vmatprep.subr.mxu0 0.0
        %1462 = vmatpush1.msra.mxu0 %v1434
        %1463 = vmatprep.subr.mxu0 0.0
        %1464 = vmatpush1.msra.mxu0 %v1435
        %1465 = vmatprep.subr.mxu0 0.0
        %1466 = vmatpush1.msra.mxu0 %v1436
        %1467 = vmatprep.subr.mxu0 0.0
        %1468 = vmatpush1.msra.mxu0 %v1437
        %1469 = vmatprep.subr.mxu0 0.0
        %1470 = vmatpush1.msra.mxu0 %v1438
        %1471 = vmatprep.subr.mxu0 0.0
        %1472 = vmatpush1.msra.mxu0 %v1439
        %1473 = vmatprep.subr.mxu0 0.0
        %1474 = vmatpush1.msra.mxu0 %v1440
        %1475 = vmatprep.subr.mxu0 0.0
        %1476 = vmatpush1.msra.mxu0 %v1441
        %1477 = vmatprep.subr.mxu0 0.0
        %1478 = vmatpush1.msra.mxu0 %v1442
        %1479 = vmatprep.subr.mxu0 0.0
        %1480 = vmatpush1.msra.mxu0 %v1443
        %1481 = vmatprep.subr.mxu0 0.0
        %1482 = vmatpush1.msra.mxu0 %v1444
        %1483 = vmatprep.subr.mxu0 0.0
        %1484 = vmatpush1.msra.mxu0 %v1445
        %1485 = vmatprep.subr.mxu0 0.0
        %1486 = vmatpush1.msra.mxu0 0.0
        %1487 = vmatprep.subr.mxu0 0.0
        %1488 = vmatpush1.msra.mxu0 0.0
        %1489 = vmatprep.subr.mxu0 0.0
        %1490 = vmatpush1.msra.mxu0 0.0
        %1491 = vmatprep.subr.mxu0 0.0
        %1492 = vmatpush1.msra.mxu0 0.0
        %1493 = vmatprep.subr.mxu0 0.0
        %1494 = vmatpush1.msra.mxu0 0.0
        %1495 = vmatprep.subr.mxu0 0.0
        %1496 = vmatpush1.msra.mxu0 0.0
        %1497 = vmatprep.subr.mxu0 0.0
        %1498 = vmatpush1.msra.mxu0 0.0
        %1499 = vmatprep.subr.mxu0 0.0
        %1500 = vmatpush1.msra.mxu0 0.0
        %1501 = vmatprep.subr.mxu0 0.0
        %1502 = vmatpush1.msra.mxu0 0.0
        %1503 = vmatprep.subr.mxu0 0.0
        %1504 = vmatpush1.msra.mxu0 0.0
        %1505 = vmatprep.subr.mxu0 0.0
        %1506 = vmatpush1.msra.mxu0 0.0
        %1507 = vmatprep.subr.mxu0 0.0
        %1508 = vmatpush1.msra.mxu0 0.0
        %1509 = vmatprep.subr.mxu0 0.0
        %1510 = vmatpush1.msra.mxu0 0.0
        %1511 = vmatprep.subr.mxu0 0.0
        %1512 = vmatpush1.msra.mxu0 0.0
        %1513 = vmatprep.subr.mxu0 0.0
        %1514 = vmatpush1.msra.mxu0 0.0
        %1515 = vmatprep.subr.mxu0 0.0
        %1516 = vmatpush1.msra.mxu0 0.0
        %1517 = vmatprep.mubr.f32.mxu0 0.0
        %1518 = vmatmul.mubr.f32.gmra.mrb[0].mxu0 %v450
        %v1519 = vpop.f32.mrb[0].mxu0
        %v1520 = vadd.f32 %v1451, %v1519
        %v1521 = vpop.f32.mrb[0].mxu0
        %1522 = vdwg.mxu0
        %v1523 = vadd.f32 %v1520, %v1427
        %vm1524 = vcmp.ge.f32.partialorder %v1523, 0.0
        %v1525 = vmul.f32 %v1523, 0.1
        %v1526 = vsel %vm1524, %v1523, %v1525
        %1527 = vst [vmem:[%s449] sm:$0xff] %v1526
        %p1528 = scmp.lt.s32.totalorder %s25, 3
        %s1529 = scalar_select %p1528, %s25, 3
        %s1530 = smul.addr %s1529, 8
        %s1531 = scalar_lea.vmem %s13, %s1530
        // Predicated region
        $region77: #{fan_forward.10} parent=71 // pred_check
          %p1532 = pneg %p321
        $region78: #{fan_forward.10} parent=71 // pred_check_branch
          %1534 = sbr.rel (%p1532) target = $region80
        $region79: #{fan_forward.10} parent=71 // pred_region
          _
        $region80: #{fan_forward.10} parent=71 // pred_fallthru
          _
      $region72: #{fan_forward.10} parent=5 // pred_fallthru
        _
      %p1535 = scmp.le.s32.totalorder 2, %s20
      // Predicated region
      $region81: #{fan_forward.10} parent=5 // pred_check
        %p1536 = pneg %p1535
      $region82: #{fan_forward.10} parent=5 // pred_check_branch
        %1538 = sbr.rel (%p1536) target = $region84
      $region83: #{fan_forward.10} parent=5 // pred_region
        %s1539 = ssub.s32 %s20, 2
        // Predicated region
        $region85: #{fan_forward.10} parent=83 // pred_check
          %p1540 = pneg %p327
        $region86: #{fan_forward.10} parent=83 // pred_check_branch
          %1542 = sbr.rel (%p1540) target = $region88
        $region87: #{fan_forward.10} parent=83 // pred_region
          %p1543 = scmp.lt.s32.totalorder %s26, 3
          %s1544 = scalar_select %p1543, %s26, 3
          %s1545 = smul.addr %s1544, 8
          %s1546 = scalar_lea.vmem %s13, %s1545
        $region88: #{fan_forward.10} parent=83 // pred_fallthru
          _
      $region84: #{fan_forward.10} parent=5 // pred_fallthru
        _
    $region6: #{fan_forward.10} parent=1 // loop_footer
      %s24 = sadd.s32 1, %s20
    $region7: #{fan_forward.10} parent=1 // loop_footer_branch
      %19 = sbr.rel target = $region3
    $region8: #{fan_forward.10} parent=1 // loop_exit
      _
    %1547 = vsyncpa [#allocation3], 1
    %s1548 = scalar_lea.sflag [#allocation3], 1
    %1549 = vsyncpa %s1548, 1

</llo_original>
